<compile_context>
chip_gen: v5e
topology: v5e:2x2
jax: 0.10.0
libtpu: 0.0.40
codegen_flags: <defaults>
</compile_context>

<pallas_src>
import functools

import jax
import jax.numpy as jnp
from jax.experimental import pallas as pl
from jax.experimental.pallas import tpu as pltpu

LANE = 128


def _round_up(x, m):
    return (x + m - 1) // m * m


# ---------------------------------------------------------------------------
# Fused kernel: one image per grid step, everything stays in VMEM.
# ---------------------------------------------------------------------------

def _fused_bottleneck_kernel(*refs, identity, hw):
    """Refs (identity=False):
         x (1,M,Cin) bf16, w1 (Cin,P0), w2 (9*P0,P0), w3 (P0,E0), ws (Cin,E0),
         b1 (1,P0), b2 (1,P0), b3 (1,E0), bs (1,E0)  [f32 BN shifts],
         o (1,M,e) bf16, xp_scr (H+2, Wp, P0) bf16.
       Refs (identity=True): same without ws / bs.
    """
    if identity:
        (x_ref, w1_ref, w2_ref, w3_ref,
         b1_ref, b2_ref, b3_ref, o_ref, xp_scr) = refs
        ws_ref = bs_ref = None
    else:
        (x_ref, w1_ref, w2_ref, w3_ref, ws_ref,
         b1_ref, b2_ref, b3_ref, bs_ref, o_ref, xp_scr) = refs

    H, W = hw
    P0 = w1_ref.shape[1]
    e = o_ref.shape[2]
    M = H * W
    Wp = xp_scr.shape[1]

    x2d = x_ref[0]                                    # (M, Cin) bf16, read once

    # ---- conv1 (1x1) + bn1 + relu -----------------------------------------
    o1 = jnp.dot(x2d, w1_ref[...], preferred_element_type=jnp.float32)
    o1 = jnp.maximum(o1 + b1_ref[...], 0.0).astype(jnp.bfloat16)

    # ---- 3x3 halo in VMEM: refresh the zero border, overwrite the interior.
    zrow = jnp.zeros((1, Wp, P0), jnp.bfloat16)
    zcol = jnp.zeros((H, 1, P0), jnp.bfloat16)
    xp_scr[0:1, :, :] = zrow
    xp_scr[H + 1:H + 2, :, :] = zrow
    xp_scr[1:H + 1, 0:1, :] = zcol
    xp_scr[1:H + 1, W + 1:W + 2, :] = zcol
    xp_scr[1:H + 1, 1:W + 1, :] = o1.reshape(H, W, P0)

    # ---- conv2 (3x3, stride 1, pad 1) + bn2 + relu: one K=9*P0 matmul ------
    xp = xp_scr[...]                                  # (H+2, Wp, P0)
    patch = jnp.concatenate(
        [xp[dy:dy + H, dx:dx + W, :] for dy in range(3) for dx in range(3)],
        axis=-1).reshape(M, 9 * P0)                   # (M, 9*P0) bf16 im2col
    o2 = jnp.dot(patch, w2_ref[...], preferred_element_type=jnp.float32)
    o2 = jnp.maximum(o2 + b2_ref[...], 0.0).astype(jnp.bfloat16)

    # ---- conv3 (1x1) + bn3, shortcut, add, relu ----------------------------
    y = jnp.dot(o2, w3_ref[...], preferred_element_type=jnp.float32) + b3_ref[...]
    if identity:
        y = y[:, :e] + x2d.astype(jnp.float32)        # identity: no matmul
    else:
        s = jnp.dot(x2d, ws_ref[...],
                    preferred_element_type=jnp.float32) + bs_ref[...]
        y = (y + s)[:, :e]
    o_ref[0] = jnp.maximum(y, 0.0).astype(o_ref.dtype)


# ---------------------------------------------------------------------------
# Wrapper: fold BN scale into weights, pad lane-heavy dims, launch batch grid.
# ---------------------------------------------------------------------------

def bottleneck_forward(x_nchw, params):
    """x_nchw: (N, Cin, H, W) float.  Returns (N, expansion*planes, H, W) bf16."""
    n, cin, h, w = x_nchw.shape
    p = params["w1"].shape[1]
    e = params["w3"].shape[1]
    identity = bool(params["identity"])
    if identity:
        assert cin == e
    P0 = _round_up(p, LANE)
    E0 = _round_up(e, LANE)
    Wp = _round_up(w + 2, 8)
    m = h * w

    # NCHW -> NHWC, cast bf16, flatten spatial (free reshape).  No channel
    # padding of x in HBM: the kernel reads it at native width.
    x = jnp.transpose(x_nchw, (0, 2, 3, 1)).astype(jnp.bfloat16).reshape(n, m, cin)

    # Fold BN scale into conv weights; pad only the compute-heavy planes /
    # expansion dims to lane multiples; cast to bf16 for the MXU.
    w1 = jnp.pad(params["w1"] * params["scale1"],
                 ((0, 0), (0, P0 - p))).astype(jnp.bfloat16)
    w2 = params["w2"] * params["scale2"].reshape(1, 1, 1, p)      # (3,3,p,p) HWIO
    w2 = jnp.pad(w2, ((0, 0), (0, 0), (0, P0 - p), (0, P0 - p)))
    w2 = w2.reshape(9 * P0, P0).astype(jnp.bfloat16)              # (dy,dx,ci)-major
    w3 = jnp.pad(params["w3"] * params["scale3"],
                 ((0, P0 - p), (0, E0 - e))).astype(jnp.bfloat16)

    b1 = jnp.pad(params["shift1"], ((0, 0), (0, P0 - p))).astype(jnp.float32)
    b2 = jnp.pad(params["shift2"], ((0, 0), (0, P0 - p))).astype(jnp.float32)
    b3 = jnp.pad(params["shift3"], ((0, 0), (0, E0 - e))).astype(jnp.float32)

    def const(shape):
        return pl.BlockSpec(shape, lambda i, _r=len(shape): (0,) * _r)

    in_specs = [pl.BlockSpec((1, m, cin), lambda i: (i, 0, 0)),
                const((cin, P0)), const((9 * P0, P0)), const((P0, E0))]
    operands = [x, w1, w2, w3]
    if not identity:
        ws = jnp.pad(params["ws"] * params["scale_s"],
                     ((0, 0), (0, E0 - e))).astype(jnp.bfloat16)
        in_specs.append(const((cin, E0)))
        operands.append(ws)
    in_specs += [const((1, P0)), const((1, P0)), const((1, E0))]
    operands += [b1, b2, b3]
    if not identity:
        bs = jnp.pad(params["shift_s"], ((0, 0), (0, E0 - e))).astype(jnp.float32)
        in_specs.append(const((1, E0)))
        operands.append(bs)

    grid_spec = pltpu.PrefetchScalarGridSpec(
        num_scalar_prefetch=0,
        grid=(n,),
        in_specs=in_specs,
        out_specs=pl.BlockSpec((1, m, e), lambda i: (i, 0, 0)),
        scratch_shapes=[pltpu.VMEM((h + 2, Wp, P0), jnp.bfloat16)],
    )

    # Size the VMEM limit from the hardware instead of a hard-coded constant.
    try:
        vmem_cap = pltpu.get_tpu_info().vmem_capacity_bytes
    except Exception:
        vmem_cap = 64 * 1024 * 1024
    vmem_limit = min(vmem_cap // 2, 64 * 1024 * 1024)

    out = pl.pallas_call(
        functools.partial(_fused_bottleneck_kernel, identity=identity, hw=(h, w)),
        out_shape=jax.ShapeDtypeStruct((n, m, e), jnp.bfloat16),
        grid_spec=grid_spec,
        compiler_params=pltpu.CompilerParams(
            dimension_semantics=("parallel",),     # megacore split over batch
            vmem_limit_bytes=vmem_limit),
    )(*operands)

    # NHWC(flat) bf16 -> NCHW for the PyTorch-facing caller.
    return jnp.transpose(out.reshape(n, h, w, e), (0, 3, 1, 2))


# ---------------------------------------------------------------------------
# Deterministic parameters + pure-JAX f32 reference (the mathematical spec)
# ---------------------------------------------------------------------------

def make_params(key, in_planes, planes, expansion=4):
    cout = expansion * planes
    ks = jax.random.split(key, 4)
    eps = 1e-5

    def bn(c, seed):
        k = jax.random.fold_in(key, seed)
        kg, kb, km, kv = jax.random.split(k, 4)
        gamma = 1.0 + 0.1 * jax.random.normal(kg, (c,), jnp.float32)
        beta = 0.1 * jax.random.normal(kb, (c,), jnp.float32)
        mean = 0.1 * jax.random.normal(km, (c,), jnp.float32)
        var = 1.0 + 0.1 * jax.random.uniform(kv, (c,), jnp.float32)
        scale = gamma / jnp.sqrt(var + eps)
        shift = beta - mean * scale
        return scale.reshape(1, c), shift.reshape(1, c)

    s1, b1 = bn(planes, 1)
    s2, b2 = bn(planes, 2)
    s3, b3 = bn(cout, 3)

    identity = (in_planes == cout)          # stride fixed at 1 (module default)
    params = {
        "w1": 0.1 * jax.random.normal(ks[0], (in_planes, planes), jnp.float32),
        "w2": 0.1 * jax.random.normal(ks[1], (3, 3, planes, planes), jnp.float32),
        "w3": 0.1 * jax.random.normal(ks[2], (planes, cout), jnp.float32),
        "scale1": s1, "shift1": b1,
        "scale2": s2, "shift2": b2,
        "scale3": s3, "shift3": b3,
        "identity": identity,
    }
    if not identity:
        params["ws"] = 0.1 * jax.random.normal(ks[3], (in_planes, cout), jnp.float32)
        params["scale_s"], params["shift_s"] = bn(cout, 4)
    return params


def bottleneck_reference(x_nchw, params):
    """Pure-JAX f32 reference (lax conv) for correctness checking."""
    x = jnp.transpose(x_nchw, (0, 2, 3, 1)).astype(jnp.float32)   # NHWC
    dn = ("NHWC", "HWIO", "NHWC")

    def conv(hm, w_hwio, pad):
        return jax.lax.conv_general_dilated(
            hm, w_hwio, window_strides=(1, 1), padding=pad, dimension_numbers=dn)

    o = conv(x, params["w1"][None, None], "VALID") * params["scale1"] + params["shift1"]
    o = jnp.maximum(o, 0.0)
    o = conv(o, params["w2"], [(1, 1), (1, 1)]) * params["scale2"] + params["shift2"]
    o = jnp.maximum(o, 0.0)
    o = conv(o, params["w3"][None, None], "VALID") * params["scale3"] + params["shift3"]
    if params["identity"]:
        sc = x
    else:
        sc = conv(x, params["ws"][None, None], "VALID") * params["scale_s"] + params["shift_s"]
    o = jnp.maximum(o + sc, 0.0)
    return jnp.transpose(o, (0, 3, 1, 2))                          # NCHW


if __name__ == "__main__":
    key = jax.random.PRNGKey(0)
    kx1, kp1, kx2, kp2 = jax.random.split(key, 4)

    # Case 1: projection shortcut (in_planes != expansion*planes), matching
    # the module's Bottleneck(in_planes=4, planes=4).
    n, cin, hh, ww, planes = 2, 4, 16, 16, 4
    x = jax.random.normal(kx1, (n, cin, hh, ww), jnp.float32)      # NCHW
    params = make_params(kp1, cin, planes)
    out = jax.block_until_ready(bottleneck_forward(x, params))
    ref = bottleneck_reference(x, params)
    assert out.shape == (n, 4 * planes, hh, ww), out.shape
    err = float(jnp.max(jnp.abs(out.astype(jnp.float32) - ref)))
    # bf16 MXU / bf16 output vs f32 reference: tolerance sized for bf16 rounding.
    assert err < 3e-2, err

    # Case 2: identity shortcut (in_planes == expansion*planes): the kernel's
    # fast path with no shortcut matmul.
    n2, cin2, h2, w2s, planes2 = 2, 16, 8, 8, 4
    x2 = jax.random.normal(kx2, (n2, cin2, h2, w2s), jnp.float32)
    params2 = make_params(kp2, cin2, planes2)
    out2 = jax.block_until_ready(bottleneck_forward(x2, params2))
    ref2 = bottleneck_reference(x2, params2)
    assert out2.shape == (n2, 4 * planes2, h2, w2s), out2.shape
    err2 = float(jnp.max(jnp.abs(out2.astype(jnp.float32) - ref2)))
    assert err2 < 3e-2, err2

    print("KERNEL_OK")
</pallas_src>

<mosaic_0001>
module attributes {stable_mosaic.version = 11 : i64} {
  func.func @_fused_bottleneck_kernel(%arg0: i32, %arg1: memref<1x256x4xbf16, #tpu.memory_space<vmem>>, %arg2: memref<4x128xbf16, #tpu.memory_space<vmem>>, %arg3: memref<1152x128xbf16, #tpu.memory_space<vmem>>, %arg4: memref<128x128xbf16, #tpu.memory_space<vmem>>, %arg5: memref<4x128xbf16, #tpu.memory_space<vmem>>, %arg6: memref<1x128xf32, #tpu.memory_space<vmem>>, %arg7: memref<1x128xf32, #tpu.memory_space<vmem>>, %arg8: memref<1x128xf32, #tpu.memory_space<vmem>>, %arg9: memref<1x128xf32, #tpu.memory_space<vmem>>, %arg10: memref<1x256x16xbf16, #tpu.memory_space<vmem>>, %arg11: memref<18x24x128xbf16, #tpu.memory_space<vmem>>) attributes {dimension_semantics = [#tpu.dimension_semantics<parallel>], iteration_bounds = array<i64: 2>, scalar_prefetch = 0 : i64, scratch_operands = 1 : i64, tpu.core_type = #tpu.core_type<tc>, window_params = [{transform_indices = @transform_0, window_bounds = array<i64: 1, 256, 4>}, {pipeline_mode = #tpu.pipeline_mode<synchronous>, transform_indices = @transform_1, window_bounds = array<i64: 4, 128>}, {pipeline_mode = #tpu.pipeline_mode<synchronous>, transform_indices = @transform_2, window_bounds = array<i64: 1152, 128>}, {pipeline_mode = #tpu.pipeline_mode<synchronous>, transform_indices = @transform_3, window_bounds = array<i64: 128, 128>}, {pipeline_mode = #tpu.pipeline_mode<synchronous>, transform_indices = @transform_4, window_bounds = array<i64: 4, 128>}, {pipeline_mode = #tpu.pipeline_mode<synchronous>, transform_indices = @transform_5, window_bounds = array<i64: 1, 128>}, {pipeline_mode = #tpu.pipeline_mode<synchronous>, transform_indices = @transform_6, window_bounds = array<i64: 1, 128>}, {pipeline_mode = #tpu.pipeline_mode<synchronous>, transform_indices = @transform_7, window_bounds = array<i64: 1, 128>}, {pipeline_mode = #tpu.pipeline_mode<synchronous>, transform_indices = @transform_8, window_bounds = array<i64: 1, 128>}, {transform_indices = @transform_9, window_bounds = array<i64: 1, 256, 16>}]} {
    %c0 = arith.constant 0 : index
    %c0_0 = arith.constant 0 : index
    %c0_1 = arith.constant 0 : index
    %0 = vector.load %arg1[%c0, %c0_0, %c0_1] : memref<1x256x4xbf16, #tpu.memory_space<vmem>>, vector<1x256x4xbf16>
    %1 = vector.shape_cast %0 : vector<1x256x4xbf16> to vector<256x4xbf16>
    %c0_2 = arith.constant 0 : index
    %c0_3 = arith.constant 0 : index
    %2 = vector.load %arg2[%c0_2, %c0_3] : memref<4x128xbf16, #tpu.memory_space<vmem>>, vector<4x128xbf16>
    %cst = arith.constant dense<0.000000e+00> : vector<256x128xf32>
    %3 = tpu.matmul %1, %2, %cst {dimension_numbers = #tpu.dot_dimension_numbers<[1], [0], [0], [1], [0, 0, 1, 1], [], []>} : vector<256x4xbf16>, vector<4x128xbf16>, vector<256x128xf32> -> vector<256x128xf32>
    %c0_4 = arith.constant 0 : index
    %c0_5 = arith.constant 0 : index
    %4 = vector.load %arg6[%c0_4, %c0_5] : memref<1x128xf32, #tpu.memory_space<vmem>>, vector<1x128xf32>
    %5 = vector.broadcast %4 : vector<1x128xf32> to vector<256x128xf32>
    %6 = arith.addf %3, %5 : vector<256x128xf32>
    %cst_6 = arith.constant 0.000000e+00 : f32
    %7 = vector.broadcast %cst_6 : f32 to vector<256x128xf32>
    %8 = arith.maximumf %6, %7 : vector<256x128xf32>
    %9 = arith.truncf %8 : vector<256x128xf32> to vector<256x128xbf16>
    %cst_7 = arith.constant 0.000000e+00 : bf16
    %10 = vector.broadcast %cst_7 : bf16 to vector<1x24x128xbf16>
    %cst_8 = arith.constant 0.000000e+00 : bf16
    %11 = vector.broadcast %cst_8 : bf16 to vector<16x1x128xbf16>
    %c0_9 = arith.constant 0 : index
    %c0_10 = arith.constant 0 : index
    %c0_11 = arith.constant 0 : index
    %12 = vector.load %arg11[%c0_9, %c0_10, %c0_11] : memref<18x24x128xbf16, #tpu.memory_space<vmem>>, vector<1x24x128xbf16>
    tpu.vector_store %arg11[%c0_9, %c0_10, %c0_11], %10 {strides = array<i32>} : memref<18x24x128xbf16, #tpu.memory_space<vmem>>, vector<1x24x128xbf16>,
    %c17 = arith.constant 17 : index
    %c0_12 = arith.constant 0 : index
    %c0_13 = arith.constant 0 : index
    %13 = vector.load %arg11[%c17, %c0_12, %c0_13] : memref<18x24x128xbf16, #tpu.memory_space<vmem>>, vector<1x24x128xbf16>
    tpu.vector_store %arg11[%c17, %c0_12, %c0_13], %10 {strides = array<i32>} : memref<18x24x128xbf16, #tpu.memory_space<vmem>>, vector<1x24x128xbf16>,
    %c1 = arith.constant 1 : index
    %c0_14 = arith.constant 0 : index
    %c0_15 = arith.constant 0 : index
    %14 = vector.load %arg11[%c1, %c0_14, %c0_15] : memref<18x24x128xbf16, #tpu.memory_space<vmem>>, vector<16x1x128xbf16>
    tpu.vector_store %arg11[%c1, %c0_14, %c0_15], %11 {strides = array<i32>} : memref<18x24x128xbf16, #tpu.memory_space<vmem>>, vector<16x1x128xbf16>,
    %c1_16 = arith.constant 1 : index
    %c17_17 = arith.constant 17 : index
    %c0_18 = arith.constant 0 : index
    %15 = vector.load %arg11[%c1_16, %c17_17, %c0_18] : memref<18x24x128xbf16, #tpu.memory_space<vmem>>, vector<16x1x128xbf16>
    tpu.vector_store %arg11[%c1_16, %c17_17, %c0_18], %11 {strides = array<i32>} : memref<18x24x128xbf16, #tpu.memory_space<vmem>>, vector<16x1x128xbf16>,
    %16 = vector.shape_cast %9 : vector<256x128xbf16> to vector<16x16x128xbf16>
    %c1_19 = arith.constant 1 : index
    %c1_20 = arith.constant 1 : index
    %c0_21 = arith.constant 0 : index
    %17 = vector.load %arg11[%c1_19, %c1_20, %c0_21] : memref<18x24x128xbf16, #tpu.memory_space<vmem>>, vector<16x16x128xbf16>
    tpu.vector_store %arg11[%c1_19, %c1_20, %c0_21], %16 {strides = array<i32>} : memref<18x24x128xbf16, #tpu.memory_space<vmem>>, vector<16x16x128xbf16>,
    %c0_22 = arith.constant 0 : index
    %c0_23 = arith.constant 0 : index
    %c0_24 = arith.constant 0 : index
    %18 = vector.load %arg11[%c0_22, %c0_23, %c0_24] : memref<18x24x128xbf16, #tpu.memory_space<vmem>>, vector<18x24x128xbf16>
    %19 = vector.extract_strided_slice %18 {offsets = [0, 0, 0], sizes = [16, 16, 128], strides = [1, 1, 1]} : vector<18x24x128xbf16> to vector<16x16x128xbf16>
    %20 = vector.extract_strided_slice %18 {offsets = [0, 1, 0], sizes = [16, 16, 128], strides = [1, 1, 1]} : vector<18x24x128xbf16> to vector<16x16x128xbf16>
    %21 = vector.extract_strided_slice %18 {offsets = [0, 2, 0], sizes = [16, 16, 128], strides = [1, 1, 1]} : vector<18x24x128xbf16> to vector<16x16x128xbf16>
    %22 = vector.extract_strided_slice %18 {offsets = [1, 0, 0], sizes = [16, 16, 128], strides = [1, 1, 1]} : vector<18x24x128xbf16> to vector<16x16x128xbf16>
    %23 = vector.extract_strided_slice %18 {offsets = [1, 1, 0], sizes = [16, 16, 128], strides = [1, 1, 1]} : vector<18x24x128xbf16> to vector<16x16x128xbf16>
    %24 = vector.extract_strided_slice %18 {offsets = [1, 2, 0], sizes = [16, 16, 128], strides = [1, 1, 1]} : vector<18x24x128xbf16> to vector<16x16x128xbf16>
    %25 = vector.extract_strided_slice %18 {offsets = [2, 0, 0], sizes = [16, 16, 128], strides = [1, 1, 1]} : vector<18x24x128xbf16> to vector<16x16x128xbf16>
    %26 = vector.extract_strided_slice %18 {offsets = [2, 1, 0], sizes = [16, 16, 128], strides = [1, 1, 1]} : vector<18x24x128xbf16> to vector<16x16x128xbf16>
    %27 = vector.extract_strided_slice %18 {offsets = [2, 2, 0], sizes = [16, 16, 128], strides = [1, 1, 1]} : vector<18x24x128xbf16> to vector<16x16x128xbf16>
    %28 = tpu.concatenate %19, %20, %21, %22, %23, %24, %25, %26, %27 in 2 : vector<16x16x128xbf16>, vector<16x16x128xbf16>, vector<16x16x128xbf16>, vector<16x16x128xbf16>, vector<16x16x128xbf16>, vector<16x16x128xbf16>, vector<16x16x128xbf16>, vector<16x16x128xbf16>, vector<16x16x128xbf16> -> vector<16x16x1152xbf16>
    %29 = vector.shape_cast %28 : vector<16x16x1152xbf16> to vector<256x1152xbf16>
    %c0_25 = arith.constant 0 : index
    %c0_26 = arith.constant 0 : index
    %30 = vector.load %arg3[%c0_25, %c0_26] : memref<1152x128xbf16, #tpu.memory_space<vmem>>, vector<1152x128xbf16>
    %cst_27 = arith.constant dense<0.000000e+00> : vector<256x128xf32>
    %31 = tpu.matmul %29, %30, %cst_27 {dimension_numbers = #tpu.dot_dimension_numbers<[1], [0], [0], [1], [0, 0, 1, 1], [], []>} : vector<256x1152xbf16>, vector<1152x128xbf16>, vector<256x128xf32> -> vector<256x128xf32>
    %c0_28 = arith.constant 0 : index
    %c0_29 = arith.constant 0 : index
    %32 = vector.load %arg7[%c0_28, %c0_29] : memref<1x128xf32, #tpu.memory_space<vmem>>, vector<1x128xf32>
    %33 = vector.broadcast %32 : vector<1x128xf32> to vector<256x128xf32>
    %34 = arith.addf %31, %33 : vector<256x128xf32>
    %cst_30 = arith.constant 0.000000e+00 : f32
    %35 = vector.broadcast %cst_30 : f32 to vector<256x128xf32>
    %36 = arith.maximumf %34, %35 : vector<256x128xf32>
    %37 = arith.truncf %36 : vector<256x128xf32> to vector<256x128xbf16>
    %c0_31 = arith.constant 0 : index
    %c0_32 = arith.constant 0 : index
    %38 = vector.load %arg4[%c0_31, %c0_32] : memref<128x128xbf16, #tpu.memory_space<vmem>>, vector<128x128xbf16>
    %cst_33 = arith.constant dense<0.000000e+00> : vector<256x128xf32>
    %39 = tpu.matmul %37, %38, %cst_33 {dimension_numbers = #tpu.dot_dimension_numbers<[1], [0], [0], [1], [0, 0, 1, 1], [], []>} : vector<256x128xbf16>, vector<128x128xbf16>, vector<256x128xf32> -> vector<256x128xf32>
    %c0_34 = arith.constant 0 : index
    %c0_35 = arith.constant 0 : index
    %40 = vector.load %arg8[%c0_34, %c0_35] : memref<1x128xf32, #tpu.memory_space<vmem>>, vector<1x128xf32>
    %41 = vector.broadcast %40 : vector<1x128xf32> to vector<256x128xf32>
    %42 = arith.addf %39, %41 : vector<256x128xf32>
    %c0_36 = arith.constant 0 : index
    %c0_37 = arith.constant 0 : index
    %43 = vector.load %arg5[%c0_36, %c0_37] : memref<4x128xbf16, #tpu.memory_space<vmem>>, vector<4x128xbf16>
    %cst_38 = arith.constant dense<0.000000e+00> : vector<256x128xf32>
    %44 = tpu.matmul %1, %43, %cst_38 {dimension_numbers = #tpu.dot_dimension_numbers<[1], [0], [0], [1], [0, 0, 1, 1], [], []>} : vector<256x4xbf16>, vector<4x128xbf16>, vector<256x128xf32> -> vector<256x128xf32>
    %c0_39 = arith.constant 0 : index
    %c0_40 = arith.constant 0 : index
    %45 = vector.load %arg9[%c0_39, %c0_40] : memref<1x128xf32, #tpu.memory_space<vmem>>, vector<1x128xf32>
    %46 = vector.broadcast %45 : vector<1x128xf32> to vector<256x128xf32>
    %47 = arith.addf %44, %46 : vector<256x128xf32>
    %48 = arith.addf %42, %47 : vector<256x128xf32>
    %49 = vector.extract_strided_slice %48 {offsets = [0, 0], sizes = [256, 16], strides = [1, 1]} : vector<256x128xf32> to vector<256x16xf32>
    %cst_41 = arith.constant 0.000000e+00 : f32
    %50 = vector.broadcast %cst_41 : f32 to vector<256x16xf32>
    %51 = arith.maximumf %49, %50 : vector<256x16xf32>
    %52 = arith.truncf %51 : vector<256x16xf32> to vector<256x16xbf16>
    %c0_42 = arith.constant 0 : index
    %c0_43 = arith.constant 0 : index
    %c0_44 = arith.constant 0 : index
    %53 = vector.load %arg10[%c0_42, %c0_43, %c0_44] : memref<1x256x16xbf16, #tpu.memory_space<vmem>>, vector<1x256x16xbf16>
    %54 = vector.shape_cast %53 : vector<1x256x16xbf16> to vector<256x16xbf16>
    %55 = vector.shape_cast %52 : vector<256x16xbf16> to vector<1x256x16xbf16>
    tpu.vector_store %arg10[%c0_42, %c0_43, %c0_44], %55 {strides = array<i32>} : memref<1x256x16xbf16, #tpu.memory_space<vmem>>, vector<1x256x16xbf16>,
    return
  }
  func.func @transform_0(%arg0: i32) -> (i32, i32, i32) {
    %c0_i32 = arith.constant 0 : i32
    %c0_i32_0 = arith.constant 0 : i32
    %c0_i32_1 = arith.constant 0 : i32
    return %arg0, %c0_i32, %c0_i32_0 : i32, i32, i32
  }
  func.func @transform_1(%arg0: i32) -> (i32, i32) {
    %c0_i32 = arith.constant 0 : i32
    %c0_i32_0 = arith.constant 0 : i32
    %c0_i32_1 = arith.constant 0 : i32
    return %c0_i32, %c0_i32_0 : i32, i32
  }
  func.func @transform_2(%arg0: i32) -> (i32, i32) {
    %c0_i32 = arith.constant 0 : i32
    %c0_i32_0 = arith.constant 0 : i32
    %c0_i32_1 = arith.constant 0 : i32
    return %c0_i32, %c0_i32_0 : i32, i32
  }
  func.func @transform_3(%arg0: i32) -> (i32, i32) {
    %c0_i32 = arith.constant 0 : i32
    %c0_i32_0 = arith.constant 0 : i32
    %c0_i32_1 = arith.constant 0 : i32
    return %c0_i32, %c0_i32_0 : i32, i32
  }
  func.func @transform_4(%arg0: i32) -> (i32, i32) {
    %c0_i32 = arith.constant 0 : i32
    %c0_i32_0 = arith.constant 0 : i32
    %c0_i32_1 = arith.constant 0 : i32
    return %c0_i32, %c0_i32_0 : i32, i32
  }
  func.func @transform_5(%arg0: i32) -> (i32, i32) {
    %c0_i32 = arith.constant 0 : i32
    %c0_i32_0 = arith.constant 0 : i32
    %c0_i32_1 = arith.constant 0 : i32
    return %c0_i32, %c0_i32_0 : i32, i32
  }
  func.func @transform_6(%arg0: i32) -> (i32, i32) {
    %c0_i32 = arith.constant 0 : i32
    %c0_i32_0 = arith.constant 0 : i32
    %c0_i32_1 = arith.constant 0 : i32
    return %c0_i32, %c0_i32_0 : i32, i32
  }
  func.func @transform_7(%arg0: i32) -> (i32, i32) {
    %c0_i32 = arith.constant 0 : i32
    %c0_i32_0 = arith.constant 0 : i32
    %c0_i32_1 = arith.constant 0 : i32
    return %c0_i32, %c0_i32_0 : i32, i32
  }
  func.func @transform_8(%arg0: i32) -> (i32, i32) {
    %c0_i32 = arith.constant 0 : i32
    %c0_i32_0 = arith.constant 0 : i32
    %c0_i32_1 = arith.constant 0 : i32
    return %c0_i32, %c0_i32_0 : i32, i32
  }
  func.func @transform_9(%arg0: i32) -> (i32, i32, i32) {
    %c0_i32 = arith.constant 0 : i32
    %c0_i32_0 = arith.constant 0 : i32
    %c0_i32_1 = arith.constant 0 : i32
    return %arg0, %c0_i32, %c0_i32_0 : i32, i32, i32
  }
}

</mosaic_0001>

<llo_original>
// kernel: tpu_custom_call.1
$region0: #{tpu_custom_call.1}
  #allocation0 [shape = 'u32[]', space=smem, size = 0x4, offset = 0x4, fixed_abs, tag = 'smem constant byte address 0x4 - core index']
  #allocation1 [shape = 'u32[72,128]{1,0:T(1,128)}', space=vmem, size = 0x9000, scoped, tag = 'internal scratch']
  #allocation2 [shape = 'bf16[18,24,128]{2,1,0:T(8,128)(2,1)}', space=vmem, size = 0x1b000, scoped, tag = 'scratch operand']
  %s0 = inlined_call_operand.vmem [shape: bf16[2,256,4], index: 0, kind: input, shape index: {}]
  %s1 = inlined_call_operand.vmem [shape: bf16[4,128], index: 1, kind: input, shape index: {}]
  %s2 = inlined_call_operand.hbm [shape: bf16[1152,128], index: 2, kind: input, shape index: {}]
  %s3 = inlined_call_operand.vmem [shape: bf16[128,128], index: 3, kind: input, shape index: {}]
  %s4 = inlined_call_operand.vmem [shape: bf16[4,128], index: 4, kind: input, shape index: {}]
  %s5 = inlined_call_operand.vmem [shape: f32[1,128], index: 5, kind: input, shape index: {}]
  %s6 = inlined_call_operand.vmem [shape: f32[1,128], index: 6, kind: input, shape index: {}]
  %s7 = inlined_call_operand.vmem [shape: f32[1,128], index: 7, kind: input, shape index: {}]
  %s8 = inlined_call_operand.vmem [shape: f32[1,128], index: 8, kind: input, shape index: {}]
  %s9 = inlined_call_operand.vmem [shape: bf16[2,256,16], index: 9, kind: output, shape index: {}]
  %s10 = sld [smem:[#allocation0]]
  $region73: #{tpu_custom_call.1} parent=0
    _
  %s12 = ssub.s32 1, %s10
  %s13 = scalar_select 0, %s12, %s10
  $region1: #{tpu_custom_call.1} parent=0
    #allocation3 [shape = 'u8[294912]{0}', space=vmem, size = 0x48000, scoped, tag = 'input window, operand 2, single buffered']
    #allocation4 [shape = 's32[2]{0}', space=sflag, size = 0x8, scoped, tag = 'scoped memory for tpu_custom_call.1']
    %14 = vsyncpa [#allocation4], 0
    loop: start=0, step=1, limit=4
    $region2: #{tpu_custom_call.1} parent=1 // loop_pre_header
      _
    $region3: #{tpu_custom_call.1} parent=1 // loop_header
      %s16 = sphi 0, %s20
      %p17 = scmp.ge.s32.totalorder %s16, 4
      %s26 = sphi 0, %s28
      %s29 = sphi 0, %s26
      %s30 = sphi 0, %s29
      %s46 = sphi 0, %s30
      %s50 = sphi 0, %s50
      %s52 = sphi 0, %s50
      %s53 = sphi 0, %s52
      %s67 = sphi 0, %s53
      %s71 = sphi 0, %s71
      %s73 = sphi 0, %s71
      %s74 = sphi 0, %s73
      %s88 = sphi 0, %s74
      %s92 = sphi 0, %s92
      %s94 = sphi 0, %s92
      %s95 = sphi 0, %s94
      %s109 = sphi 0, %s95
      %s113 = sphi 0, %s113
      %s115 = sphi 0, %s113
      %s116 = sphi 0, %s115
      %s130 = sphi 0, %s116
      %s134 = sphi 0, %s134
      %s136 = sphi 0, %s134
      %s137 = sphi 0, %s136
      %s151 = sphi 0, %s137
      %s155 = sphi 0, %s155
      %s157 = sphi 0, %s155
      %s158 = sphi 0, %s157
      %s172 = sphi 0, %s158
      %s176 = sphi 0, %s176
      %s178 = sphi 0, %s176
      %s179 = sphi 0, %s178
      %s193 = sphi 0, %s179
      %s197 = sphi 0, %s197
      %s199 = sphi 0, %s197
      %s200 = sphi 0, %s199
      %s214 = sphi 0, %s200
      %s220 = sphi 0, %s222
      %s223 = sphi 0, %s220
      %s224 = sphi 0, %s223
      %s240 = sphi 0, %s224
    $region4: #{tpu_custom_call.1} parent=1 // loop_header_branch
      %19 = sbr.rel (%p17) target = $region8
    $region5: #{tpu_custom_call.1} parent=1 // loop_body
      %s21 = ssub.s32 %s16, 1
      %s22 = ssub.s32 %s16, 2
      %s23 = sadd.s32 %s16, 1
      %s24 = ssub.s32 %s16, %s23
      %p25 = scmp.eq.s32.totalorder %s24, 0
      %s27 = sadd.s32 %s26, 1
      %s28 = scalar_select %p25, %s26, %s27
      %p31 = pneg %p25
      %p32 = scmp.eq.s32.totalorder %s16, 1
      %p33 = por %p31, %p32
      %p34 = scmp.ne.s32.totalorder %s26, %s29
      %p35 = scmp.eq.s32.totalorder %s16, 0
      %p36 = por %p34, %p35
      %p37 = scmp.ne.s32.totalorder %s26, %s29
      %p38 = scmp.eq.s32.totalorder %s21, 1
      %p39 = por %p37, %p38
      %p40 = scmp.ne.s32.totalorder %s29, %s30
      %p41 = scmp.eq.s32.totalorder %s21, 0
      %p42 = por %p40, %p41
      %p43 = scmp.ne.s32.totalorder %s29, %s30
      %p44 = scmp.eq.s32.totalorder %s22, 1
      %p45 = por %p43, %p44
      %p47 = scmp.ne.s32.totalorder %s30, %s46
      %p48 = scmp.eq.s32.totalorder %s22, 0
      %p49 = por %p47, %p48
      %s51 = sadd.s32 %s50, 1
      %p54 = scmp.eq.s32.totalorder %s16, 1
      %p55 = scmp.ne.s32.totalorder %s50, %s52
      %p56 = scmp.eq.s32.totalorder %s16, 0
      %p57 = por %p55, %p56
      %p58 = scmp.ne.s32.totalorder %s50, %s52
      %p59 = scmp.eq.s32.totalorder %s21, 1
      %p60 = por %p58, %p59
      %p61 = scmp.ne.s32.totalorder %s52, %s53
      %p62 = scmp.eq.s32.totalorder %s21, 0
      %p63 = por %p61, %p62
      %p64 = scmp.ne.s32.totalorder %s52, %s53
      %p65 = scmp.eq.s32.totalorder %s22, 1
      %p66 = por %p64, %p65
      %p68 = scmp.ne.s32.totalorder %s53, %s67
      %p69 = scmp.eq.s32.totalorder %s22, 0
      %p70 = por %p68, %p69
      %s72 = sadd.s32 %s71, 1
      %p75 = scmp.eq.s32.totalorder %s16, 1
      %p76 = scmp.ne.s32.totalorder %s71, %s73
      %p77 = scmp.eq.s32.totalorder %s16, 0
      %p78 = por %p76, %p77
      %p79 = scmp.ne.s32.totalorder %s71, %s73
      %p80 = scmp.eq.s32.totalorder %s21, 1
      %p81 = por %p79, %p80
      %p82 = scmp.ne.s32.totalorder %s73, %s74
      %p83 = scmp.eq.s32.totalorder %s21, 0
      %p84 = por %p82, %p83
      %p85 = scmp.ne.s32.totalorder %s73, %s74
      %p86 = scmp.eq.s32.totalorder %s22, 1
      %p87 = por %p85, %p86
      %p89 = scmp.ne.s32.totalorder %s74, %s88
      %p90 = scmp.eq.s32.totalorder %s22, 0
      %p91 = por %p89, %p90
      %s93 = sadd.s32 %s92, 1
      %p96 = scmp.eq.s32.totalorder %s16, 1
      %p97 = scmp.ne.s32.totalorder %s92, %s94
      %p98 = scmp.eq.s32.totalorder %s16, 0
      %p99 = por %p97, %p98
      %p100 = scmp.ne.s32.totalorder %s92, %s94
      %p101 = scmp.eq.s32.totalorder %s21, 1
      %p102 = por %p100, %p101
      %p103 = scmp.ne.s32.totalorder %s94, %s95
      %p104 = scmp.eq.s32.totalorder %s21, 0
      %p105 = por %p103, %p104
      %p106 = scmp.ne.s32.totalorder %s94, %s95
      %p107 = scmp.eq.s32.totalorder %s22, 1
      %p108 = por %p106, %p107
      %p110 = scmp.ne.s32.totalorder %s95, %s109
      %p111 = scmp.eq.s32.totalorder %s22, 0
      %p112 = por %p110, %p111
      %s114 = sadd.s32 %s113, 1
      %p117 = scmp.eq.s32.totalorder %s16, 1
      %p118 = scmp.ne.s32.totalorder %s113, %s115
      %p119 = scmp.eq.s32.totalorder %s16, 0
      %p120 = por %p118, %p119
      %p121 = scmp.ne.s32.totalorder %s113, %s115
      %p122 = scmp.eq.s32.totalorder %s21, 1
      %p123 = por %p121, %p122
      %p124 = scmp.ne.s32.totalorder %s115, %s116
      %p125 = scmp.eq.s32.totalorder %s21, 0
      %p126 = por %p124, %p125
      %p127 = scmp.ne.s32.totalorder %s115, %s116
      %p128 = scmp.eq.s32.totalorder %s22, 1
      %p129 = por %p127, %p128
      %p131 = scmp.ne.s32.totalorder %s116, %s130
      %p132 = scmp.eq.s32.totalorder %s22, 0
      %p133 = por %p131, %p132
      %s135 = sadd.s32 %s134, 1
      %p138 = scmp.eq.s32.totalorder %s16, 1
      %p139 = scmp.ne.s32.totalorder %s134, %s136
      %p140 = scmp.eq.s32.totalorder %s16, 0
      %p141 = por %p139, %p140
      %p142 = scmp.ne.s32.totalorder %s134, %s136
      %p143 = scmp.eq.s32.totalorder %s21, 1
      %p144 = por %p142, %p143
      %p145 = scmp.ne.s32.totalorder %s136, %s137
      %p146 = scmp.eq.s32.totalorder %s21, 0
      %p147 = por %p145, %p146
      %p148 = scmp.ne.s32.totalorder %s136, %s137
      %p149 = scmp.eq.s32.totalorder %s22, 1
      %p150 = por %p148, %p149
      %p152 = scmp.ne.s32.totalorder %s137, %s151
      %p153 = scmp.eq.s32.totalorder %s22, 0
      %p154 = por %p152, %p153
      %s156 = sadd.s32 %s155, 1
      %p159 = scmp.eq.s32.totalorder %s16, 1
      %p160 = scmp.ne.s32.totalorder %s155, %s157
      %p161 = scmp.eq.s32.totalorder %s16, 0
      %p162 = por %p160, %p161
      %p163 = scmp.ne.s32.totalorder %s155, %s157
      %p164 = scmp.eq.s32.totalorder %s21, 1
      %p165 = por %p163, %p164
      %p166 = scmp.ne.s32.totalorder %s157, %s158
      %p167 = scmp.eq.s32.totalorder %s21, 0
      %p168 = por %p166, %p167
      %p169 = scmp.ne.s32.totalorder %s157, %s158
      %p170 = scmp.eq.s32.totalorder %s22, 1
      %p171 = por %p169, %p170
      %p173 = scmp.ne.s32.totalorder %s158, %s172
      %p174 = scmp.eq.s32.totalorder %s22, 0
      %p175 = por %p173, %p174
      %s177 = sadd.s32 %s176, 1
      %p180 = scmp.eq.s32.totalorder %s16, 1
      %p181 = scmp.ne.s32.totalorder %s176, %s178
      %p182 = scmp.eq.s32.totalorder %s16, 0
      %p183 = por %p181, %p182
      %p184 = scmp.ne.s32.totalorder %s176, %s178
      %p185 = scmp.eq.s32.totalorder %s21, 1
      %p186 = por %p184, %p185
      %p187 = scmp.ne.s32.totalorder %s178, %s179
      %p188 = scmp.eq.s32.totalorder %s21, 0
      %p189 = por %p187, %p188
      %p190 = scmp.ne.s32.totalorder %s178, %s179
      %p191 = scmp.eq.s32.totalorder %s22, 1
      %p192 = por %p190, %p191
      %p194 = scmp.ne.s32.totalorder %s179, %s193
      %p195 = scmp.eq.s32.totalorder %s22, 0
      %p196 = por %p194, %p195
      %s198 = sadd.s32 %s197, 1
      %p201 = scmp.eq.s32.totalorder %s16, 1
      %p202 = scmp.ne.s32.totalorder %s197, %s199
      %p203 = scmp.eq.s32.totalorder %s16, 0
      %p204 = por %p202, %p203
      %p205 = scmp.ne.s32.totalorder %s197, %s199
      %p206 = scmp.eq.s32.totalorder %s21, 1
      %p207 = por %p205, %p206
      %p208 = scmp.ne.s32.totalorder %s199, %s200
      %p209 = scmp.eq.s32.totalorder %s21, 0
      %p210 = por %p208, %p209
      %p211 = scmp.ne.s32.totalorder %s199, %s200
      %p212 = scmp.eq.s32.totalorder %s22, 1
      %p213 = por %p211, %p212
      %p215 = scmp.ne.s32.totalorder %s200, %s214
      %p216 = scmp.eq.s32.totalorder %s22, 0
      %p217 = por %p215, %p216
      %s218 = ssub.s32 %s16, %s23
      %p219 = scmp.eq.s32.totalorder %s218, 0
      %s221 = sadd.s32 %s220, 1
      %s222 = scalar_select %p219, %s220, %s221
      %p225 = pneg %p219
      %p226 = scmp.eq.s32.totalorder %s16, 1
      %p227 = por %p225, %p226
      %p228 = scmp.ne.s32.totalorder %s220, %s223
      %p229 = scmp.eq.s32.totalorder %s16, 0
      %p230 = por %p228, %p229
      %p231 = scmp.ne.s32.totalorder %s220, %s223
      %p232 = scmp.eq.s32.totalorder %s21, 1
      %p233 = por %p231, %p232
      %p234 = scmp.ne.s32.totalorder %s223, %s224
      %p235 = scmp.eq.s32.totalorder %s21, 0
      %p236 = por %p234, %p235
      %p237 = scmp.ne.s32.totalorder %s223, %s224
      %p238 = scmp.eq.s32.totalorder %s22, 1
      %p239 = por %p237, %p238
      %p241 = scmp.ne.s32.totalorder %s224, %s240
      %p242 = scmp.eq.s32.totalorder %s22, 0
      %p243 = por %p241, %p242
      %p244 = scmp.le.s32.totalorder 1, %s16
      %p245 = scmp.lt.s32.totalorder %s16, 3
      %p246 = pnand %p244, %p245
      %p247 = pneg %p246
      // Predicated region
      $region9: #{tpu_custom_call.1} parent=5 // pred_check
        _
      $region10: #{tpu_custom_call.1} parent=5 // pred_check_branch
        %249 = sbr.rel (%p246) target = $region12
      $region11: #{tpu_custom_call.1} parent=5 // pred_region
        %s250 = ssub.s32 %s16, 1
        // Predicated region
        $region13: #{tpu_custom_call.1} parent=11 // pred_check
          %p251 = pneg %p63
        $region14: #{tpu_custom_call.1} parent=11 // pred_check_branch
          %253 = sbr.rel (%p251) target = $region16
        $region15: #{tpu_custom_call.1} parent=11 // pred_region
          _
        $region16: #{tpu_custom_call.1} parent=11 // pred_fallthru
          _
        // Predicated region
        $region17: #{tpu_custom_call.1} parent=11 // pred_check
          %p254 = pneg %p84
        $region18: #{tpu_custom_call.1} parent=11 // pred_check_branch
          %256 = sbr.rel (%p254) target = $region20
        $region19: #{tpu_custom_call.1} parent=11 // pred_region
          %258 = vsyncadd [#allocation4], 0
          %s259 = sshll.u32 %s2, 4
          %s260 = int_to_ptr.hbm [resolvable:$true] %s259
          %s261 = sshll.u32 [#allocation3], 4
          %s262 = int_to_ptr.vmem [resolvable:$true] %s261
          %267 = dma.hbm_to_vmem [thread:$0]  %s260, 9216, %s262, [#allocation4], 64, 64, 4
        $region20: #{tpu_custom_call.1} parent=11 // pred_fallthru
          _
        // Predicated region
        $region21: #{tpu_custom_call.1} parent=11 // pred_check
          %p268 = pneg %p105
        $region22: #{tpu_custom_call.1} parent=11 // pred_check_branch
          %270 = sbr.rel (%p268) target = $region24
        $region23: #{tpu_custom_call.1} parent=11 // pred_region
          _
        $region24: #{tpu_custom_call.1} parent=11 // pred_fallthru
          _
        // Predicated region
        $region25: #{tpu_custom_call.1} parent=11 // pred_check
          %p271 = pneg %p126
        $region26: #{tpu_custom_call.1} parent=11 // pred_check_branch
          %273 = sbr.rel (%p271) target = $region28
        $region27: #{tpu_custom_call.1} parent=11 // pred_region
          _
        $region28: #{tpu_custom_call.1} parent=11 // pred_fallthru
          _
        // Predicated region
        $region29: #{tpu_custom_call.1} parent=11 // pred_check
          %p274 = pneg %p147
        $region30: #{tpu_custom_call.1} parent=11 // pred_check_branch
          %276 = sbr.rel (%p274) target = $region32
        $region31: #{tpu_custom_call.1} parent=11 // pred_region
          _
        $region32: #{tpu_custom_call.1} parent=11 // pred_fallthru
          _
        // Predicated region
        $region33: #{tpu_custom_call.1} parent=11 // pred_check
          %p277 = pneg %p168
        $region34: #{tpu_custom_call.1} parent=11 // pred_check_branch
          %279 = sbr.rel (%p277) target = $region36
        $region35: #{tpu_custom_call.1} parent=11 // pred_region
          _
        $region36: #{tpu_custom_call.1} parent=11 // pred_fallthru
          _
        // Predicated region
        $region37: #{tpu_custom_call.1} parent=11 // pred_check
          %p280 = pneg %p189
        $region38: #{tpu_custom_call.1} parent=11 // pred_check_branch
          %282 = sbr.rel (%p280) target = $region40
        $region39: #{tpu_custom_call.1} parent=11 // pred_region
          _
        $region40: #{tpu_custom_call.1} parent=11 // pred_fallthru
          _
        // Predicated region
        $region41: #{tpu_custom_call.1} parent=11 // pred_check
          %p283 = pneg %p210
        $region42: #{tpu_custom_call.1} parent=11 // pred_check_branch
          %285 = sbr.rel (%p283) target = $region44
        $region43: #{tpu_custom_call.1} parent=11 // pred_region
          _
        $region44: #{tpu_custom_call.1} parent=11 // pred_fallthru
          _
      $region12: #{tpu_custom_call.1} parent=5 // pred_fallthru
        _
      %p286 = scmp.lt.s32.totalorder %s16, 2
      // Predicated region
      $region45: #{tpu_custom_call.1} parent=5 // pred_check
        %p287 = pneg %p286
      $region46: #{tpu_custom_call.1} parent=5 // pred_check_branch
        %289 = sbr.rel (%p287) target = $region48
      $region47: #{tpu_custom_call.1} parent=5 // pred_region
        // Predicated region
        $region49: #{tpu_custom_call.1} parent=47 // pred_check
          %p290 = pneg %p36
        $region50: #{tpu_custom_call.1} parent=47 // pred_check_branch
          %292 = sbr.rel (%p290) target = $region52
        $region51: #{tpu_custom_call.1} parent=47 // pred_region
          %p293 = scmp.lt.s32.totalorder %s16, 1
          %s294 = scalar_select %p293, %s16, 1
          %s295 = smul.addr %s294, 32
          %s296 = smul.addr %s295, 4
          %s297 = scalar_lea.vmem %s0, %s296
        $region52: #{tpu_custom_call.1} parent=47 // pred_fallthru
          _
      $region48: #{tpu_custom_call.1} parent=5 // pred_fallthru
        _
      %p298 = scmp.le.s32.totalorder 1, %s16
      %p299 = scmp.lt.s32.totalorder %s16, 3
      %p300 = pnand %p298, %p299
      %p301 = pneg %p300
      // Predicated region
      $region53: #{tpu_custom_call.1} parent=5 // pred_check
        _
      $region54: #{tpu_custom_call.1} parent=5 // pred_check_branch
        %303 = sbr.rel (%p300) target = $region56
      $region55: #{tpu_custom_call.1} parent=5 // pred_region
        %s304 = ssub.s32 %s16, 1
        // Predicated region
        $region57: #{tpu_custom_call.1} parent=55 // pred_check
          %p305 = pneg %p84
        $region58: #{tpu_custom_call.1} parent=55 // pred_check_branch
          %307 = sbr.rel (%p305) target = $region60
        $region59: #{tpu_custom_call.1} parent=55 // pred_region
          %309 = dma.done [#allocation4], 9216
        $region60: #{tpu_custom_call.1} parent=55 // pred_fallthru
          _
        %p310 = scmp.lt.s32.totalorder %s21, 1
        %s311 = scalar_select %p310, %s21, 1
        %s312 = smul.addr %s311, 32
        %s313 = smul.addr %s312, 4
        %s314 = scalar_lea.vmem %s0, %s313
        %p315 = pneg %p42
        %p316 = pneg %p39
        %p317 = pneg %p63
        %p318 = pneg %p60
        %p319 = pneg %p84
        %p320 = pneg %p81
        %p321 = pneg %p105
        %p322 = pneg %p102
        %p323 = pneg %p126
        %p324 = pneg %p123
        %p325 = pneg %p147
        %p326 = pneg %p144
        %p327 = pneg %p168
        %p328 = pneg %p165
        %p329 = pneg %p189
        %p330 = pneg %p186
        %p331 = pneg %p210
        %p332 = pneg %p207
        %p333 = pneg %p236
        %p334 = pneg %p233
        %p335 = scmp.lt.s32.totalorder %s21, 1
        %s336 = scalar_select %p335, %s21, 1
        %s337 = smul.addr %s336, 32
        %s338 = smul.addr %s337, 4
        %s339 = scalar_lea.vmem %s9, %s338
        %p340 = scmp.lt.s32.totalorder %s21, 1
        %s341 = scalar_select %p340, %s21, 1
        %s342 = smul.addr %s341, 32
        %s343 = smul.addr %s342, 4
        %s344 = scalar_lea.vmem %s0, %s343
        %p345 = scmp.lt.s32.totalorder %s21, 1
        %s346 = scalar_select %p345, %s21, 1
        %s347 = smul.addr %s346, 32
        %s348 = smul.addr %s347, 4
        %s349 = scalar_lea.vmem %s9, %s348
        %v351 = vld [vmem:[%s344] sm:$0xf]
        %v352 = vld [vmem:[%s344 + $0x4] sm:$0xf]
        %v353 = vld [vmem:[%s344 + $0x8] sm:$0xf]
        %v354 = vld [vmem:[%s344 + $0xc] sm:$0xf]
        %v355 = vld [vmem:[%s344 + $0x10] sm:$0xf]
        %v356 = vld [vmem:[%s344 + $0x14] sm:$0xf]
        %v357 = vld [vmem:[%s344 + $0x18] sm:$0xf]
        %v358 = vld [vmem:[%s344 + $0x1c] sm:$0xf]
        %v359 = vld [vmem:[%s344 + $0x20] sm:$0xf]
        %v360 = vld [vmem:[%s344 + $0x24] sm:$0xf]
        %v361 = vld [vmem:[%s344 + $0x28] sm:$0xf]
        %v362 = vld [vmem:[%s344 + $0x2c] sm:$0xf]
        %v363 = vld [vmem:[%s344 + $0x30] sm:$0xf]
        %v364 = vld [vmem:[%s344 + $0x34] sm:$0xf]
        %v365 = vld [vmem:[%s344 + $0x38] sm:$0xf]
        %v366 = vld [vmem:[%s344 + $0x3c] sm:$0xf]
        %v367 = vld [vmem:[%s344 + $0x40] sm:$0xf]
        %v368 = vld [vmem:[%s344 + $0x44] sm:$0xf]
        %v369 = vld [vmem:[%s344 + $0x48] sm:$0xf]
        %v370 = vld [vmem:[%s344 + $0x4c] sm:$0xf]
        %v371 = vld [vmem:[%s344 + $0x50] sm:$0xf]
        %v372 = vld [vmem:[%s344 + $0x54] sm:$0xf]
        %v373 = vld [vmem:[%s344 + $0x58] sm:$0xf]
        %v374 = vld [vmem:[%s344 + $0x5c] sm:$0xf]
        %v375 = vld [vmem:[%s344 + $0x60] sm:$0xf]
        %v376 = vld [vmem:[%s344 + $0x64] sm:$0xf]
        %v377 = vld [vmem:[%s344 + $0x68] sm:$0xf]
        %v378 = vld [vmem:[%s344 + $0x6c] sm:$0xf]
        %v379 = vld [vmem:[%s344 + $0x70] sm:$0xf]
        %v380 = vld [vmem:[%s344 + $0x74] sm:$0xf]
        %v381 = vld [vmem:[%s344 + $0x78] sm:$0xf]
        %v382 = vld [vmem:[%s344 + $0x7c] sm:$0xf]
        %v383 = vld [vmem:[%s1] sm:$0x3]
        %v384 = vld [vmem:[%s5] sm:$0x1]
        %v386 = vperm.slane %v384, 0
        %v420 = vunpack.c.l.b16 %v351
        %v421 = vunpack.c.l.b16 %v352
        %v422 = vunpack.c.l.b16 %v353
        %v423 = vunpack.c.l.b16 %v354
        %v424 = vunpack.c.l.b16 %v355
        %v425 = vunpack.c.l.b16 %v356
        %v426 = vunpack.c.l.b16 %v357
        %v427 = vunpack.c.l.b16 %v358
        %v428 = vunpack.c.l.b16 %v359
        %v429 = vunpack.c.l.b16 %v360
        %v430 = vunpack.c.l.b16 %v361
        %v431 = vunpack.c.l.b16 %v362
        %v432 = vunpack.c.l.b16 %v363
        %v433 = vunpack.c.l.b16 %v364
        %v434 = vunpack.c.l.b16 %v365
        %v435 = vunpack.c.l.b16 %v366
        %v436 = vunpack.c.l.b16 %v367
        %v437 = vunpack.c.l.b16 %v368
        %v438 = vunpack.c.l.b16 %v369
        %v439 = vunpack.c.l.b16 %v370
        %v440 = vunpack.c.l.b16 %v371
        %v441 = vunpack.c.l.b16 %v372
        %v442 = vunpack.c.l.b16 %v373
        %v443 = vunpack.c.l.b16 %v374
        %v444 = vunpack.c.l.b16 %v375
        %v445 = vunpack.c.l.b16 %v376
        %v446 = vunpack.c.l.b16 %v377
        %v447 = vunpack.c.l.b16 %v378
        %v448 = vunpack.c.l.b16 %v379
        %v449 = vunpack.c.l.b16 %v380
        %v450 = vunpack.c.l.b16 %v381
        %v451 = vunpack.c.l.b16 %v382
        %v452 = vpack.c.b16 %v421, %v420
        %v453 = vpack.c.b16 %v423, %v422
        %v454 = vpack.c.b16 %v425, %v424
        %v455 = vpack.c.b16 %v427, %v426
        %v456 = vpack.c.b16 %v429, %v428
        %v457 = vpack.c.b16 %v431, %v430
        %v458 = vpack.c.b16 %v433, %v432
        %v459 = vpack.c.b16 %v435, %v434
        %v460 = vpack.c.b16 %v437, %v436
        %v461 = vpack.c.b16 %v439, %v438
        %v462 = vpack.c.b16 %v441, %v440
        %v463 = vpack.c.b16 %v443, %v442
        %v464 = vpack.c.b16 %v445, %v444
        %v465 = vpack.c.b16 %v447, %v446
        %v466 = vpack.c.b16 %v449, %v448
        %v467 = vpack.c.b16 %v451, %v450
        %vm468 = vcmask 31744
        %v470 = vsel %vm468, %v452, 0
        %v473 = vsel %vm468, %v453, 0
        %v476 = vsel %vm468, %v454, 0
        %v479 = vsel %vm468, %v455, 0
        %v482 = vsel %vm468, %v456, 0
        %v485 = vsel %vm468, %v457, 0
        %v488 = vsel %vm468, %v458, 0
        %v491 = vsel %vm468, %v459, 0
        %v494 = vsel %vm468, %v460, 0
        %v497 = vsel %vm468, %v461, 0
        %v500 = vsel %vm468, %v462, 0
        %v503 = vsel %vm468, %v463, 0
        %v506 = vsel %vm468, %v464, 0
        %v509 = vsel %vm468, %v465, 0
        %v512 = vsel %vm468, %v466, 0
        %v515 = vsel %vm468, %v467, 0
        %vm517 = vcmask 1041408
        %v519 = vsel %vm517, %v383, 0
        %521 = vmatpush.bf16.msra.mxu0 0
        %522 = vmatpush.bf16.msra.mxu0 0
        %523 = vmatpush.bf16.msra.mxu0 0
        %524 = vmatpush.bf16.msra.mxu0 0
        %525 = vmatpush.bf16.msra.mxu0 0
        %526 = vmatpush.bf16.msra.mxu0 0
        %527 = vmatpush.bf16.msra.mxu0 0
        %528 = vmatpush.bf16.msra.mxu0 %v519
        %529 = vmatmul.bf16.gmra.mxu0 %v470
        %v530 = vpop.f32.mrf.mxu0
        %v531 = vadd.f32 %v386, %v530
        %v532 = vpop.f32.mrf.mxu0
        %v533 = vadd.f32 %v386, %v532
        %534 = vmatmul.bf16.gmra.mxu0 %v473
        %v535 = vpop.f32.mrf.mxu0
        %v536 = vadd.f32 %v386, %v535
        %v537 = vpop.f32.mrf.mxu0
        %v538 = vadd.f32 %v386, %v537
        %539 = vmatmul.bf16.gmra.mxu0 %v476
        %v540 = vpop.f32.mrf.mxu0
        %v541 = vadd.f32 %v386, %v540
        %v542 = vpop.f32.mrf.mxu0
        %v543 = vadd.f32 %v386, %v542
        %544 = vmatmul.bf16.gmra.mxu0 %v479
        %v545 = vpop.f32.mrf.mxu0
        %v546 = vadd.f32 %v386, %v545
        %v547 = vpop.f32.mrf.mxu0
        %v548 = vadd.f32 %v386, %v547
        %549 = vmatmul.bf16.gmra.mxu0 %v482
        %v550 = vpop.f32.mrf.mxu0
        %v551 = vadd.f32 %v386, %v550
        %v552 = vpop.f32.mrf.mxu0
        %v553 = vadd.f32 %v386, %v552
        %554 = vmatmul.bf16.gmra.mxu0 %v485
        %v555 = vpop.f32.mrf.mxu0
        %v556 = vadd.f32 %v386, %v555
        %v557 = vpop.f32.mrf.mxu0
        %v558 = vadd.f32 %v386, %v557
        %559 = vmatmul.bf16.gmra.mxu0 %v488
        %v560 = vpop.f32.mrf.mxu0
        %v561 = vadd.f32 %v386, %v560
        %v562 = vpop.f32.mrf.mxu0
        %v563 = vadd.f32 %v386, %v562
        %564 = vmatmul.bf16.gmra.mxu0 %v491
        %v565 = vpop.f32.mrf.mxu0
        %v566 = vadd.f32 %v386, %v565
        %v567 = vpop.f32.mrf.mxu0
        %v568 = vadd.f32 %v386, %v567
        %569 = vmatmul.bf16.gmra.mxu0 %v494
        %v570 = vpop.f32.mrf.mxu0
        %v571 = vadd.f32 %v386, %v570
        %v572 = vpop.f32.mrf.mxu0
        %v573 = vadd.f32 %v386, %v572
        %574 = vmatmul.bf16.gmra.mxu0 %v497
        %v575 = vpop.f32.mrf.mxu0
        %v576 = vadd.f32 %v386, %v575
        %v577 = vpop.f32.mrf.mxu0
        %v578 = vadd.f32 %v386, %v577
        %579 = vmatmul.bf16.gmra.mxu0 %v500
        %v580 = vpop.f32.mrf.mxu0
        %v581 = vadd.f32 %v386, %v580
        %v582 = vpop.f32.mrf.mxu0
        %v583 = vadd.f32 %v386, %v582
        %584 = vmatmul.bf16.gmra.mxu0 %v503
        %v585 = vpop.f32.mrf.mxu0
        %v586 = vadd.f32 %v386, %v585
        %v587 = vpop.f32.mrf.mxu0
        %v588 = vadd.f32 %v386, %v587
        %589 = vmatmul.bf16.gmra.mxu0 %v506
        %v590 = vpop.f32.mrf.mxu0
        %v591 = vadd.f32 %v386, %v590
        %v592 = vpop.f32.mrf.mxu0
        %v593 = vadd.f32 %v386, %v592
        %594 = vmatmul.bf16.gmra.mxu0 %v509
        %v595 = vpop.f32.mrf.mxu0
        %v596 = vadd.f32 %v386, %v595
        %v597 = vpop.f32.mrf.mxu0
        %v598 = vadd.f32 %v386, %v597
        %599 = vmatmul.bf16.gmra.mxu0 %v512
        %v600 = vpop.f32.mrf.mxu0
        %v601 = vadd.f32 %v386, %v600
        %v602 = vpop.f32.mrf.mxu0
        %v603 = vadd.f32 %v386, %v602
        %604 = vmatmul.bf16.gmra.mxu0 %v515
        %v605 = vpop.f32.mrf.mxu0
        %v606 = vadd.f32 %v386, %v605
        %v607 = vpop.f32.mrf.mxu0
        %v608 = vadd.f32 %v386, %v607
        %609 = vdwg.mxu0
        %v610 = vmax.f32 %v531, 0.0
        %v611 = vmax.f32 %v533, 0.0
        %v612 = vmax.f32 %v536, 0.0
        %v613 = vmax.f32 %v538, 0.0
        %v614 = vmax.f32 %v541, 0.0
        %v615 = vmax.f32 %v543, 0.0
        %v616 = vmax.f32 %v546, 0.0
        %v617 = vmax.f32 %v548, 0.0
        %v618 = vmax.f32 %v551, 0.0
        %v619 = vmax.f32 %v553, 0.0
        %v620 = vmax.f32 %v556, 0.0
        %v621 = vmax.f32 %v558, 0.0
        %v622 = vmax.f32 %v561, 0.0
        %v623 = vmax.f32 %v563, 0.0
        %v624 = vmax.f32 %v566, 0.0
        %v625 = vmax.f32 %v568, 0.0
        %v626 = vmax.f32 %v571, 0.0
        %v627 = vmax.f32 %v573, 0.0
        %v628 = vmax.f32 %v576, 0.0
        %v629 = vmax.f32 %v578, 0.0
        %v630 = vmax.f32 %v581, 0.0
        %v631 = vmax.f32 %v583, 0.0
        %v632 = vmax.f32 %v586, 0.0
        %v633 = vmax.f32 %v588, 0.0
        %v634 = vmax.f32 %v591, 0.0
        %v635 = vmax.f32 %v593, 0.0
        %v636 = vmax.f32 %v596, 0.0
        %v637 = vmax.f32 %v598, 0.0
        %v638 = vmax.f32 %v601, 0.0
        %v639 = vmax.f32 %v603, 0.0
        %v640 = vmax.f32 %v606, 0.0
        %v641 = vmax.f32 %v608, 0.0
        %v642 = vpack.c.bf16 %v610, %v610
        %v643 = vpack.c.bf16 %v611, %v611
        %v644 = vpack.c.bf16 %v612, %v612
        %v645 = vpack.c.bf16 %v613, %v613
        %v646 = vpack.c.bf16 %v614, %v614
        %v647 = vpack.c.bf16 %v615, %v615
        %v648 = vpack.c.bf16 %v616, %v616
        %v649 = vpack.c.bf16 %v617, %v617
        %v650 = vpack.c.bf16 %v618, %v618
        %v651 = vpack.c.bf16 %v619, %v619
        %v652 = vpack.c.bf16 %v620, %v620
        %v653 = vpack.c.bf16 %v621, %v621
        %v654 = vpack.c.bf16 %v622, %v622
        %v655 = vpack.c.bf16 %v623, %v623
        %v656 = vpack.c.bf16 %v624, %v624
        %v657 = vpack.c.bf16 %v625, %v625
        %v658 = vpack.c.bf16 %v626, %v626
        %v659 = vpack.c.bf16 %v627, %v627
        %v660 = vpack.c.bf16 %v628, %v628
        %v661 = vpack.c.bf16 %v629, %v629
        %v662 = vpack.c.bf16 %v630, %v630
        %v663 = vpack.c.bf16 %v631, %v631
        %v664 = vpack.c.bf16 %v632, %v632
        %v665 = vpack.c.bf16 %v633, %v633
        %v666 = vpack.c.bf16 %v634, %v634
        %v667 = vpack.c.bf16 %v635, %v635
        %v668 = vpack.c.bf16 %v636, %v636
        %v669 = vpack.c.bf16 %v637, %v637
        %v670 = vpack.c.bf16 %v638, %v638
        %v671 = vpack.c.bf16 %v639, %v639
        %v672 = vpack.c.bf16 %v640, %v640
        %v673 = vpack.c.bf16 %v641, %v641
        %674 = vst [vmem:[#allocation2] sm:$0xf] 0
        %675 = vst [vmem:[#allocation2 + $0x4] sm:$0xf] 0
        %676 = vst [vmem:[#allocation2 + $0x8] sm:$0xf] 0
        %s677 = scalar_lea.vmem [#allocation2], 204
        %678 = vst [vmem:[%s677] sm:$0xf] 0
        %679 = vst [vmem:[%s677 + $0x4] sm:$0xf] 0
        %680 = vst [vmem:[%s677 + $0x8] sm:$0xf] 0
        %s681 = scalar_lea.vmem [#allocation2], 12
        %vm682 = vcmask 1040384
        %vm683 = vsmask.f32 256
        %vm684 = vmand %vm682, %vm683
        %v685 = vld [vmem:[%s681] sm:$0x1]
        %v686 = vsel %vm684, 0, %v685
        %687 = vst [vmem:[%s681] sm:$0x1] %v686
        %v688 = vld [vmem:[%s681 + $0xc] sm:$0x1]
        %v689 = vsel %vm684, 0, %v688
        %690 = vst [vmem:[%s681 + $0xc] sm:$0x1] %v689
        %v691 = vld [vmem:[%s681 + $0x18] sm:$0x1]
        %v692 = vsel %vm684, 0, %v691
        %693 = vst [vmem:[%s681 + $0x18] sm:$0x1] %v692
        %v694 = vld [vmem:[%s681 + $0x24] sm:$0x1]
        %v695 = vsel %vm684, 0, %v694
        %696 = vst [vmem:[%s681 + $0x24] sm:$0x1] %v695
        %v697 = vld [vmem:[%s681 + $0x30] sm:$0x1]
        %v698 = vsel %vm684, 0, %v697
        %699 = vst [vmem:[%s681 + $0x30] sm:$0x1] %v698
        %v700 = vld [vmem:[%s681 + $0x3c] sm:$0x1]
        %v701 = vsel %vm684, 0, %v700
        %702 = vst [vmem:[%s681 + $0x3c] sm:$0x1] %v701
        %v703 = vld [vmem:[%s681 + $0x48] sm:$0x1]
        %v704 = vsel %vm684, 0, %v703
        %705 = vst [vmem:[%s681 + $0x48] sm:$0x1] %v704
        %v706 = vld [vmem:[%s681 + $0x54] sm:$0x1]
        %v707 = vsel %vm684, 0, %v706
        %708 = vst [vmem:[%s681 + $0x54] sm:$0x1] %v707
        %v709 = vld [vmem:[%s681 + $0x60] sm:$0x1]
        %v710 = vsel %vm684, 0, %v709
        %711 = vst [vmem:[%s681 + $0x60] sm:$0x1] %v710
        %v712 = vld [vmem:[%s681 + $0x6c] sm:$0x1]
        %v713 = vsel %vm684, 0, %v712
        %714 = vst [vmem:[%s681 + $0x6c] sm:$0x1] %v713
        %v715 = vld [vmem:[%s681 + $0x78] sm:$0x1]
        %v716 = vsel %vm684, 0, %v715
        %717 = vst [vmem:[%s681 + $0x78] sm:$0x1] %v716
        %v718 = vld [vmem:[%s681 + $0x84] sm:$0x1]
        %v719 = vsel %vm684, 0, %v718
        %720 = vst [vmem:[%s681 + $0x84] sm:$0x1] %v719
        %v721 = vld [vmem:[%s681 + $0x90] sm:$0x1]
        %v722 = vsel %vm684, 0, %v721
        %723 = vst [vmem:[%s681 + $0x90] sm:$0x1] %v722
        %v724 = vld [vmem:[%s681 + $0x9c] sm:$0x1]
        %v725 = vsel %vm684, 0, %v724
        %726 = vst [vmem:[%s681 + $0x9c] sm:$0x1] %v725
        %v727 = vld [vmem:[%s681 + $0xa8] sm:$0x1]
        %v728 = vsel %vm684, 0, %v727
        %729 = vst [vmem:[%s681 + $0xa8] sm:$0x1] %v728
        %v730 = vld [vmem:[%s681 + $0xb4] sm:$0x1]
        %v731 = vsel %vm684, 0, %v730
        %732 = vst [vmem:[%s681 + $0xb4] sm:$0x1] %v731
        %vm733 = vsmask.f32 7938
        %vm734 = vmand %vm682, %vm733
        %v735 = vld [vmem:[%s681 + $0x8] sm:$0x1]
        %v736 = vsel %vm734, 0, %v735
        %737 = vst [vmem:[%s681 + $0x8] sm:$0x1] %v736
        %v738 = vld [vmem:[%s681 + $0x14] sm:$0x1]
        %v739 = vsel %vm734, 0, %v738
        %740 = vst [vmem:[%s681 + $0x14] sm:$0x1] %v739
        %v741 = vld [vmem:[%s681 + $0x20] sm:$0x1]
        %v742 = vsel %vm734, 0, %v741
        %743 = vst [vmem:[%s681 + $0x20] sm:$0x1] %v742
        %v744 = vld [vmem:[%s681 + $0x2c] sm:$0x1]
        %v745 = vsel %vm734, 0, %v744
        %746 = vst [vmem:[%s681 + $0x2c] sm:$0x1] %v745
        %v747 = vld [vmem:[%s681 + $0x38] sm:$0x1]
        %v748 = vsel %vm734, 0, %v747
        %749 = vst [vmem:[%s681 + $0x38] sm:$0x1] %v748
        %v750 = vld [vmem:[%s681 + $0x44] sm:$0x1]
        %v751 = vsel %vm734, 0, %v750
        %752 = vst [vmem:[%s681 + $0x44] sm:$0x1] %v751
        %v753 = vld [vmem:[%s681 + $0x50] sm:$0x1]
        %v754 = vsel %vm734, 0, %v753
        %755 = vst [vmem:[%s681 + $0x50] sm:$0x1] %v754
        %v756 = vld [vmem:[%s681 + $0x5c] sm:$0x1]
        %v757 = vsel %vm734, 0, %v756
        %758 = vst [vmem:[%s681 + $0x5c] sm:$0x1] %v757
        %v759 = vld [vmem:[%s681 + $0x68] sm:$0x1]
        %v760 = vsel %vm734, 0, %v759
        %761 = vst [vmem:[%s681 + $0x68] sm:$0x1] %v760
        %v762 = vld [vmem:[%s681 + $0x74] sm:$0x1]
        %v763 = vsel %vm734, 0, %v762
        %764 = vst [vmem:[%s681 + $0x74] sm:$0x1] %v763
        %v765 = vld [vmem:[%s681 + $0x80] sm:$0x1]
        %v766 = vsel %vm734, 0, %v765
        %767 = vst [vmem:[%s681 + $0x80] sm:$0x1] %v766
        %v768 = vld [vmem:[%s681 + $0x8c] sm:$0x1]
        %v769 = vsel %vm734, 0, %v768
        %770 = vst [vmem:[%s681 + $0x8c] sm:$0x1] %v769
        %v771 = vld [vmem:[%s681 + $0x98] sm:$0x1]
        %v772 = vsel %vm734, 0, %v771
        %773 = vst [vmem:[%s681 + $0x98] sm:$0x1] %v772
        %v774 = vld [vmem:[%s681 + $0xa4] sm:$0x1]
        %v775 = vsel %vm734, 0, %v774
        %776 = vst [vmem:[%s681 + $0xa4] sm:$0x1] %v775
        %v777 = vld [vmem:[%s681 + $0xb0] sm:$0x1]
        %v778 = vsel %vm734, 0, %v777
        %779 = vst [vmem:[%s681 + $0xb0] sm:$0x1] %v778
        %v780 = vld [vmem:[%s681 + $0xbc] sm:$0x1]
        %v781 = vsel %vm734, 0, %v780
        %782 = vst [vmem:[%s681 + $0xbc] sm:$0x1] %v781
        %vm783 = vsmask.f32 4368
        %vm784 = vmor %vm683, %vm783
        %v786 = vshrl.u32 %v642, 16
        %v788 = vrot.slane %v786, 7
        %v789 = vshll.u32 %v642, 16
        %v791 = vor.u32 %v788, %v789
        %v792 = vrot.slane %v788, 4
        %v794 = vshrl.u32 %v643, 16
        %v796 = vrot.slane %v794, 7
        %v797 = vshll.u32 %v643, 16
        %v799 = vor.u32 %v796, %v797
        %v800 = vsel %vm784, %v792, %v799
        %v801 = vrot.slane %v796, 4
        %v803 = vshrl.u32 %v644, 16
        %v805 = vrot.slane %v803, 7
        %v806 = vshll.u32 %v644, 16
        %v808 = vor.u32 %v805, %v806
        %v809 = vrot.slane %v805, 4
        %v811 = vshrl.u32 %v645, 16
        %v813 = vrot.slane %v811, 7
        %v814 = vshll.u32 %v645, 16
        %v816 = vor.u32 %v813, %v814
        %v817 = vsel %vm784, %v809, %v816
        %v818 = vrot.slane %v813, 4
        %v820 = vshrl.u32 %v646, 16
        %v822 = vrot.slane %v820, 7
        %v823 = vshll.u32 %v646, 16
        %v825 = vor.u32 %v822, %v823
        %v826 = vrot.slane %v822, 4
        %v828 = vshrl.u32 %v647, 16
        %v830 = vrot.slane %v828, 7
        %v831 = vshll.u32 %v647, 16
        %v833 = vor.u32 %v830, %v831
        %v834 = vsel %vm784, %v826, %v833
        %v835 = vrot.slane %v830, 4
        %v837 = vshrl.u32 %v648, 16
        %v839 = vrot.slane %v837, 7
        %v840 = vshll.u32 %v648, 16
        %v842 = vor.u32 %v839, %v840
        %v843 = vrot.slane %v839, 4
        %v845 = vshrl.u32 %v649, 16
        %v847 = vrot.slane %v845, 7
        %v848 = vshll.u32 %v649, 16
        %v850 = vor.u32 %v847, %v848
        %v851 = vsel %vm784, %v843, %v850
        %v852 = vrot.slane %v847, 4
        %v854 = vshrl.u32 %v650, 16
        %v856 = vrot.slane %v854, 7
        %v857 = vshll.u32 %v650, 16
        %v859 = vor.u32 %v856, %v857
        %v860 = vrot.slane %v856, 4
        %v862 = vshrl.u32 %v651, 16
        %v864 = vrot.slane %v862, 7
        %v865 = vshll.u32 %v651, 16
        %v867 = vor.u32 %v864, %v865
        %v868 = vsel %vm784, %v860, %v867
        %v869 = vrot.slane %v864, 4
        %v871 = vshrl.u32 %v652, 16
        %v873 = vrot.slane %v871, 7
        %v874 = vshll.u32 %v652, 16
        %v876 = vor.u32 %v873, %v874
        %v877 = vrot.slane %v873, 4
        %v879 = vshrl.u32 %v653, 16
        %v881 = vrot.slane %v879, 7
        %v882 = vshll.u32 %v653, 16
        %v884 = vor.u32 %v881, %v882
        %v885 = vsel %vm784, %v877, %v884
        %v886 = vrot.slane %v881, 4
        %v888 = vshrl.u32 %v654, 16
        %v890 = vrot.slane %v888, 7
        %v891 = vshll.u32 %v654, 16
        %v893 = vor.u32 %v890, %v891
        %v894 = vrot.slane %v890, 4
        %v896 = vshrl.u32 %v655, 16
        %v898 = vrot.slane %v896, 7
        %v899 = vshll.u32 %v655, 16
        %v901 = vor.u32 %v898, %v899
        %v902 = vsel %vm784, %v894, %v901
        %v903 = vrot.slane %v898, 4
        %v905 = vshrl.u32 %v656, 16
        %v907 = vrot.slane %v905, 7
        %v908 = vshll.u32 %v656, 16
        %v910 = vor.u32 %v907, %v908
        %v911 = vrot.slane %v907, 4
        %v913 = vshrl.u32 %v657, 16
        %v915 = vrot.slane %v913, 7
        %v916 = vshll.u32 %v657, 16
        %v918 = vor.u32 %v915, %v916
        %v919 = vsel %vm784, %v911, %v918
        %v920 = vrot.slane %v915, 4
        %v922 = vshrl.u32 %v658, 16
        %v924 = vrot.slane %v922, 7
        %v925 = vshll.u32 %v658, 16
        %v927 = vor.u32 %v924, %v925
        %v928 = vrot.slane %v924, 4
        %v930 = vshrl.u32 %v659, 16
        %v932 = vrot.slane %v930, 7
        %v933 = vshll.u32 %v659, 16
        %v935 = vor.u32 %v932, %v933
        %v936 = vsel %vm784, %v928, %v935
        %v937 = vrot.slane %v932, 4
        %v939 = vshrl.u32 %v660, 16
        %v941 = vrot.slane %v939, 7
        %v942 = vshll.u32 %v660, 16
        %v944 = vor.u32 %v941, %v942
        %v945 = vrot.slane %v941, 4
        %v947 = vshrl.u32 %v661, 16
        %v949 = vrot.slane %v947, 7
        %v950 = vshll.u32 %v661, 16
        %v952 = vor.u32 %v949, %v950
        %v953 = vsel %vm784, %v945, %v952
        %v954 = vrot.slane %v949, 4
        %v956 = vshrl.u32 %v662, 16
        %v958 = vrot.slane %v956, 7
        %v959 = vshll.u32 %v662, 16
        %v961 = vor.u32 %v958, %v959
        %v962 = vrot.slane %v958, 4
        %v964 = vshrl.u32 %v663, 16
        %v966 = vrot.slane %v964, 7
        %v967 = vshll.u32 %v663, 16
        %v969 = vor.u32 %v966, %v967
        %v970 = vsel %vm784, %v962, %v969
        %v971 = vrot.slane %v966, 4
        %v973 = vshrl.u32 %v664, 16
        %v975 = vrot.slane %v973, 7
        %v976 = vshll.u32 %v664, 16
        %v978 = vor.u32 %v975, %v976
        %v979 = vrot.slane %v975, 4
        %v981 = vshrl.u32 %v665, 16
        %v983 = vrot.slane %v981, 7
        %v984 = vshll.u32 %v665, 16
        %v986 = vor.u32 %v983, %v984
        %v987 = vsel %vm784, %v979, %v986
        %v988 = vrot.slane %v983, 4
        %v990 = vshrl.u32 %v666, 16
        %v992 = vrot.slane %v990, 7
        %v993 = vshll.u32 %v666, 16
        %v995 = vor.u32 %v992, %v993
        %v996 = vrot.slane %v992, 4
        %v998 = vshrl.u32 %v667, 16
        %v1000 = vrot.slane %v998, 7
        %v1001 = vshll.u32 %v667, 16
        %v1003 = vor.u32 %v1000, %v1001
        %v1004 = vsel %vm784, %v996, %v1003
        %v1005 = vrot.slane %v1000, 4
        %v1007 = vshrl.u32 %v668, 16
        %v1009 = vrot.slane %v1007, 7
        %v1010 = vshll.u32 %v668, 16
        %v1012 = vor.u32 %v1009, %v1010
        %v1013 = vrot.slane %v1009, 4
        %v1015 = vshrl.u32 %v669, 16
        %v1017 = vrot.slane %v1015, 7
        %v1018 = vshll.u32 %v669, 16
        %v1020 = vor.u32 %v1017, %v1018
        %v1021 = vsel %vm784, %v1013, %v1020
        %v1022 = vrot.slane %v1017, 4
        %v1024 = vshrl.u32 %v670, 16
        %v1026 = vrot.slane %v1024, 7
        %v1027 = vshll.u32 %v670, 16
        %v1029 = vor.u32 %v1026, %v1027
        %v1030 = vrot.slane %v1026, 4
        %v1032 = vshrl.u32 %v671, 16
        %v1034 = vrot.slane %v1032, 7
        %v1035 = vshll.u32 %v671, 16
        %v1037 = vor.u32 %v1034, %v1035
        %v1038 = vsel %vm784, %v1030, %v1037
        %v1039 = vrot.slane %v1034, 4
        %v1041 = vshrl.u32 %v672, 16
        %v1043 = vrot.slane %v1041, 7
        %v1044 = vshll.u32 %v672, 16
        %v1046 = vor.u32 %v1043, %v1044
        %v1047 = vrot.slane %v1043, 4
        %v1049 = vshrl.u32 %v673, 16
        %v1051 = vrot.slane %v1049, 7
        %v1052 = vshll.u32 %v673, 16
        %v1054 = vor.u32 %v1051, %v1052
        %v1055 = vsel %vm784, %v1047, %v1054
        %v1056 = vrot.slane %v1051, 4
        %vm1105 = vcmask 1043456
        %vm1106 = vmand %vm1105, %vm733
        %v1107 = vld [vmem:[%s681] sm:$0xf]
        %v1108 = vsel %vm1106, %v791, %v1107
        %1109 = vst [vmem:[%s681] sm:$0xf] %v1108
        %1110 = vst [vmem:[%s681 + $0x4] sm:$0xf] %v800
        %v1111 = vld [vmem:[%s681 + $0x8] sm:$0x1]
        %v1112 = vsel %vm684, %v801, %v1111
        %1113 = vst [vmem:[%s681 + $0x8] sm:$0x1] %v1112
        %v1114 = vld [vmem:[%s681 + $0xc] sm:$0xf]
        %v1115 = vsel %vm1106, %v808, %v1114
        %1116 = vst [vmem:[%s681 + $0xc] sm:$0xf] %v1115
        %1117 = vst [vmem:[%s681 + $0x10] sm:$0xf] %v817
        %v1118 = vld [vmem:[%s681 + $0x14] sm:$0x1]
        %v1119 = vsel %vm684, %v818, %v1118
        %1120 = vst [vmem:[%s681 + $0x14] sm:$0x1] %v1119
        %v1121 = vld [vmem:[%s681 + $0x18] sm:$0xf]
        %v1122 = vsel %vm1106, %v825, %v1121
        %1123 = vst [vmem:[%s681 + $0x18] sm:$0xf] %v1122
        %1124 = vst [vmem:[%s681 + $0x1c] sm:$0xf] %v834
        %v1125 = vld [vmem:[%s681 + $0x20] sm:$0x1]
        %v1126 = vsel %vm684, %v835, %v1125
        %1127 = vst [vmem:[%s681 + $0x20] sm:$0x1] %v1126
        %v1128 = vld [vmem:[%s681 + $0x24] sm:$0xf]
        %v1129 = vsel %vm1106, %v842, %v1128
        %1130 = vst [vmem:[%s681 + $0x24] sm:$0xf] %v1129
        %1131 = vst [vmem:[%s681 + $0x28] sm:$0xf] %v851
        %v1132 = vld [vmem:[%s681 + $0x2c] sm:$0x1]
        %v1133 = vsel %vm684, %v852, %v1132
        %1134 = vst [vmem:[%s681 + $0x2c] sm:$0x1] %v1133
        %v1135 = vld [vmem:[%s681 + $0x30] sm:$0xf]
        %v1136 = vsel %vm1106, %v859, %v1135
        %1137 = vst [vmem:[%s681 + $0x30] sm:$0xf] %v1136
        %1138 = vst [vmem:[%s681 + $0x34] sm:$0xf] %v868
        %v1139 = vld [vmem:[%s681 + $0x38] sm:$0x1]
        %v1140 = vsel %vm684, %v869, %v1139
        %1141 = vst [vmem:[%s681 + $0x38] sm:$0x1] %v1140
        %v1142 = vld [vmem:[%s681 + $0x3c] sm:$0xf]
        %v1143 = vsel %vm1106, %v876, %v1142
        %1144 = vst [vmem:[%s681 + $0x3c] sm:$0xf] %v1143
        %1145 = vst [vmem:[%s681 + $0x40] sm:$0xf] %v885
        %v1146 = vld [vmem:[%s681 + $0x44] sm:$0x1]
        %v1147 = vsel %vm684, %v886, %v1146
        %1148 = vst [vmem:[%s681 + $0x44] sm:$0x1] %v1147
        %v1149 = vld [vmem:[%s681 + $0x48] sm:$0xf]
        %v1150 = vsel %vm1106, %v893, %v1149
        %1151 = vst [vmem:[%s681 + $0x48] sm:$0xf] %v1150
        %1152 = vst [vmem:[%s681 + $0x4c] sm:$0xf] %v902
        %v1153 = vld [vmem:[%s681 + $0x50] sm:$0x1]
        %v1154 = vsel %vm684, %v903, %v1153
        %1155 = vst [vmem:[%s681 + $0x50] sm:$0x1] %v1154
        %v1156 = vld [vmem:[%s681 + $0x54] sm:$0xf]
        %v1157 = vsel %vm1106, %v910, %v1156
        %1158 = vst [vmem:[%s681 + $0x54] sm:$0xf] %v1157
        %1159 = vst [vmem:[%s681 + $0x58] sm:$0xf] %v919
        %v1160 = vld [vmem:[%s681 + $0x5c] sm:$0x1]
        %v1161 = vsel %vm684, %v920, %v1160
        %1162 = vst [vmem:[%s681 + $0x5c] sm:$0x1] %v1161
        %v1163 = vld [vmem:[%s681 + $0x60] sm:$0xf]
        %v1164 = vsel %vm1106, %v927, %v1163
        %1165 = vst [vmem:[%s681 + $0x60] sm:$0xf] %v1164
        %1166 = vst [vmem:[%s681 + $0x64] sm:$0xf] %v936
        %v1167 = vld [vmem:[%s681 + $0x68] sm:$0x1]
        %v1168 = vsel %vm684, %v937, %v1167
        %1169 = vst [vmem:[%s681 + $0x68] sm:$0x1] %v1168
        %v1170 = vld [vmem:[%s681 + $0x6c] sm:$0xf]
        %v1171 = vsel %vm1106, %v944, %v1170
        %1172 = vst [vmem:[%s681 + $0x6c] sm:$0xf] %v1171
        %1173 = vst [vmem:[%s681 + $0x70] sm:$0xf] %v953
        %v1174 = vld [vmem:[%s681 + $0x74] sm:$0x1]
        %v1175 = vsel %vm684, %v954, %v1174
        %1176 = vst [vmem:[%s681 + $0x74] sm:$0x1] %v1175
        %v1177 = vld [vmem:[%s681 + $0x78] sm:$0xf]
        %v1178 = vsel %vm1106, %v961, %v1177
        %1179 = vst [vmem:[%s681 + $0x78] sm:$0xf] %v1178
        %1180 = vst [vmem:[%s681 + $0x7c] sm:$0xf] %v970
        %v1181 = vld [vmem:[%s681 + $0x80] sm:$0x1]
        %v1182 = vsel %vm684, %v971, %v1181
        %1183 = vst [vmem:[%s681 + $0x80] sm:$0x1] %v1182
        %v1184 = vld [vmem:[%s681 + $0x84] sm:$0xf]
        %v1185 = vsel %vm1106, %v978, %v1184
        %1186 = vst [vmem:[%s681 + $0x84] sm:$0xf] %v1185
        %1187 = vst [vmem:[%s681 + $0x88] sm:$0xf] %v987
        %v1188 = vld [vmem:[%s681 + $0x8c] sm:$0x1]
        %v1189 = vsel %vm684, %v988, %v1188
        %1190 = vst [vmem:[%s681 + $0x8c] sm:$0x1] %v1189
        %v1191 = vld [vmem:[%s681 + $0x90] sm:$0xf]
        %v1192 = vsel %vm1106, %v995, %v1191
        %1193 = vst [vmem:[%s681 + $0x90] sm:$0xf] %v1192
        %1194 = vst [vmem:[%s681 + $0x94] sm:$0xf] %v1004
        %v1195 = vld [vmem:[%s681 + $0x98] sm:$0x1]
        %v1196 = vsel %vm684, %v1005, %v1195
        %1197 = vst [vmem:[%s681 + $0x98] sm:$0x1] %v1196
        %v1198 = vld [vmem:[%s681 + $0x9c] sm:$0xf]
        %v1199 = vsel %vm1106, %v1012, %v1198
        %1200 = vst [vmem:[%s681 + $0x9c] sm:$0xf] %v1199
        %1201 = vst [vmem:[%s681 + $0xa0] sm:$0xf] %v1021
        %v1202 = vld [vmem:[%s681 + $0xa4] sm:$0x1]
        %v1203 = vsel %vm684, %v1022, %v1202
        %1204 = vst [vmem:[%s681 + $0xa4] sm:$0x1] %v1203
        %v1205 = vld [vmem:[%s681 + $0xa8] sm:$0xf]
        %v1206 = vsel %vm1106, %v1029, %v1205
        %1207 = vst [vmem:[%s681 + $0xa8] sm:$0xf] %v1206
        %1208 = vst [vmem:[%s681 + $0xac] sm:$0xf] %v1038
        %v1209 = vld [vmem:[%s681 + $0xb0] sm:$0x1]
        %v1210 = vsel %vm684, %v1039, %v1209
        %1211 = vst [vmem:[%s681 + $0xb0] sm:$0x1] %v1210
        %v1212 = vld [vmem:[%s681 + $0xb4] sm:$0xf]
        %v1213 = vsel %vm1106, %v1046, %v1212
        %1214 = vst [vmem:[%s681 + $0xb4] sm:$0xf] %v1213
        %1215 = vst [vmem:[%s681 + $0xb8] sm:$0xf] %v1055
        %v1216 = vld [vmem:[%s681 + $0xbc] sm:$0x1]
        %v1217 = vsel %vm684, %v1056, %v1216
        %1218 = vst [vmem:[%s681 + $0xbc] sm:$0x1] %v1217
        %v1219 = vld [vmem:[#allocation2] sm:$0xf]
        %v1220 = vld [vmem:[#allocation2 + $0x4] sm:$0xf]
        %v1221 = vld [vmem:[#allocation2 + $0x8] sm:$0xf]
        %v1222 = vld [vmem:[#allocation2 + $0xc] sm:$0xf]
        %v1223 = vld [vmem:[#allocation2 + $0x10] sm:$0xf]
        %v1224 = vld [vmem:[#allocation2 + $0x14] sm:$0xf]
        %v1225 = vld [vmem:[#allocation2 + $0x18] sm:$0xf]
        %v1226 = vld [vmem:[#allocation2 + $0x1c] sm:$0xf]
        %v1227 = vld [vmem:[#allocation2 + $0x20] sm:$0xf]
        %v1228 = vld [vmem:[#allocation2 + $0x24] sm:$0xf]
        %v1229 = vld [vmem:[#allocation2 + $0x28] sm:$0xf]
        %v1230 = vld [vmem:[#allocation2 + $0x2c] sm:$0xf]
        %v1231 = vld [vmem:[#allocation2 + $0x30] sm:$0xf]
        %v1232 = vld [vmem:[#allocation2 + $0x34] sm:$0xf]
        %v1233 = vld [vmem:[#allocation2 + $0x38] sm:$0xf]
        %v1234 = vld [vmem:[#allocation2 + $0x3c] sm:$0xf]
        %v1235 = vld [vmem:[#allocation2 + $0x40] sm:$0xf]
        %v1236 = vld [vmem:[#allocation2 + $0x44] sm:$0xf]
        %v1237 = vld [vmem:[#allocation2 + $0x48] sm:$0xf]
        %v1238 = vld [vmem:[#allocation2 + $0x4c] sm:$0xf]
        %v1239 = vld [vmem:[#allocation2 + $0x50] sm:$0xf]
        %v1240 = vld [vmem:[#allocation2 + $0x54] sm:$0xf]
        %v1241 = vld [vmem:[#allocation2 + $0x58] sm:$0xf]
        %v1242 = vld [vmem:[#allocation2 + $0x5c] sm:$0xf]
        %v1243 = vld [vmem:[#allocation2 + $0x60] sm:$0xf]
        %v1244 = vld [vmem:[#allocation2 + $0x64] sm:$0xf]
        %v1245 = vld [vmem:[#allocation2 + $0x68] sm:$0xf]
        %v1246 = vld [vmem:[#allocation2 + $0x6c] sm:$0xf]
        %v1247 = vld [vmem:[#allocation2 + $0x70] sm:$0xf]
        %v1248 = vld [vmem:[#allocation2 + $0x74] sm:$0xf]
        %v1249 = vld [vmem:[#allocation2 + $0x78] sm:$0xf]
        %v1250 = vld [vmem:[#allocation2 + $0x7c] sm:$0xf]
        %v1251 = vld [vmem:[#allocation2 + $0x80] sm:$0xf]
        %v1252 = vld [vmem:[#allocation2 + $0x84] sm:$0xf]
        %v1253 = vld [vmem:[#allocation2 + $0x88] sm:$0xf]
        %v1254 = vld [vmem:[#allocation2 + $0x8c] sm:$0xf]
        %v1255 = vld [vmem:[#allocation2 + $0x90] sm:$0xf]
        %v1256 = vld [vmem:[#allocation2 + $0x94] sm:$0xf]
        %v1257 = vld [vmem:[#allocation2 + $0x98] sm:$0xf]
        %v1258 = vld [vmem:[#allocation2 + $0x9c] sm:$0xf]
        %v1259 = vld [vmem:[#allocation2 + $0xa0] sm:$0xf]
        %v1260 = vld [vmem:[#allocation2 + $0xa4] sm:$0xf]
        %v1261 = vld [vmem:[#allocation2 + $0xa8] sm:$0xf]
        %v1262 = vld [vmem:[#allocation2 + $0xac] sm:$0xf]
        %v1263 = vld [vmem:[#allocation2 + $0xb0] sm:$0xf]
        %v1264 = vld [vmem:[#allocation2 + $0xb4] sm:$0xf]
        %v1265 = vld [vmem:[#allocation2 + $0xb8] sm:$0xf]
        %v1266 = vld [vmem:[#allocation2 + $0xbc] sm:$0xf]
        %v1267 = vld [vmem:[#allocation2 + $0xc0] sm:$0xf]
        %v1268 = vld [vmem:[#allocation2 + $0xc4] sm:$0xf]
        %v1269 = vld [vmem:[#allocation2 + $0xc8] sm:$0xf]
        %v1270 = vld [vmem:[#allocation2 + $0xcc] sm:$0xf]
        %v1271 = vld [vmem:[#allocation2 + $0xd0] sm:$0xf]
        %v1272 = vld [vmem:[#allocation2 + $0xd4] sm:$0xf]
        %v1305 = vunpack.c.l.b16 %v1219
        %v1306 = vunpack.c.l.b16 %v1220
        %v1307 = vunpack.c.l.b16 %v1222
        %v1308 = vunpack.c.l.b16 %v1223
        %v1309 = vunpack.c.l.b16 %v1225
        %v1310 = vunpack.c.l.b16 %v1226
        %v1311 = vunpack.c.l.b16 %v1228
        %v1312 = vunpack.c.l.b16 %v1229
        %v1313 = vunpack.c.l.b16 %v1231
        %v1314 = vunpack.c.l.b16 %v1232
        %v1315 = vunpack.c.l.b16 %v1234
        %v1316 = vunpack.c.l.b16 %v1235
        %v1317 = vunpack.c.l.b16 %v1237
        %v1318 = vunpack.c.l.b16 %v1238
        %v1319 = vunpack.c.l.b16 %v1240
        %v1320 = vunpack.c.l.b16 %v1241
        %v1321 = vunpack.c.l.b16 %v1243
        %v1322 = vunpack.c.l.b16 %v1244
        %v1323 = vunpack.c.l.b16 %v1246
        %v1324 = vunpack.c.l.b16 %v1247
        %v1325 = vunpack.c.l.b16 %v1249
        %v1326 = vunpack.c.l.b16 %v1250
        %v1327 = vunpack.c.l.b16 %v1252
        %v1328 = vunpack.c.l.b16 %v1253
        %v1329 = vunpack.c.l.b16 %v1255
        %v1330 = vunpack.c.l.b16 %v1256
        %v1331 = vunpack.c.l.b16 %v1258
        %v1332 = vunpack.c.l.b16 %v1259
        %v1333 = vunpack.c.l.b16 %v1261
        %v1334 = vunpack.c.l.b16 %v1262
        %v1335 = vunpack.c.l.b16 %v1264
        %v1336 = vunpack.c.l.b16 %v1265
        %v1337 = vpack.c.b16 %v1306, %v1305
        %v1338 = vpack.c.b16 %v1308, %v1307
        %v1339 = vpack.c.b16 %v1310, %v1309
        %v1340 = vpack.c.b16 %v1312, %v1311
        %v1341 = vpack.c.b16 %v1314, %v1313
        %v1342 = vpack.c.b16 %v1316, %v1315
        %v1343 = vpack.c.b16 %v1318, %v1317
        %v1344 = vpack.c.b16 %v1320, %v1319
        %v1345 = vpack.c.b16 %v1322, %v1321
        %v1346 = vpack.c.b16 %v1324, %v1323
        %v1347 = vpack.c.b16 %v1326, %v1325
        %v1348 = vpack.c.b16 %v1328, %v1327
        %v1349 = vpack.c.b16 %v1330, %v1329
        %v1350 = vpack.c.b16 %v1332, %v1331
        %v1351 = vpack.c.b16 %v1334, %v1333
        %v1352 = vpack.c.b16 %v1336, %v1335
        %v1385 = vunpack.c.l.b16 %v1221
        %v1386 = vunpack.c.l.b16 %v1224
        %v1387 = vunpack.c.l.b16 %v1227
        %v1388 = vunpack.c.l.b16 %v1230
        %v1389 = vunpack.c.l.b16 %v1233
        %v1390 = vunpack.c.l.b16 %v1236
        %v1391 = vunpack.c.l.b16 %v1239
        %v1392 = vunpack.c.l.b16 %v1242
        %v1393 = vunpack.c.l.b16 %v1245
        %v1394 = vunpack.c.l.b16 %v1248
        %v1395 = vunpack.c.l.b16 %v1251
        %v1396 = vunpack.c.l.b16 %v1254
        %v1397 = vunpack.c.l.b16 %v1257
        %v1398 = vunpack.c.l.b16 %v1260
        %v1399 = vunpack.c.l.b16 %v1263
        %v1400 = vunpack.c.l.b16 %v1266
        %v1401 = vpack.c.b16 %v1385, %v1385
        %v1402 = vpack.c.b16 %v1386, %v1386
        %v1403 = vpack.c.b16 %v1387, %v1387
        %v1404 = vpack.c.b16 %v1388, %v1388
        %v1405 = vpack.c.b16 %v1389, %v1389
        %v1406 = vpack.c.b16 %v1390, %v1390
        %v1407 = vpack.c.b16 %v1391, %v1391
        %v1408 = vpack.c.b16 %v1392, %v1392
        %v1409 = vpack.c.b16 %v1393, %v1393
        %v1410 = vpack.c.b16 %v1394, %v1394
        %v1411 = vpack.c.b16 %v1395, %v1395
        %v1412 = vpack.c.b16 %v1396, %v1396
        %v1413 = vpack.c.b16 %v1397, %v1397
        %v1414 = vpack.c.b16 %v1398, %v1398
        %v1415 = vpack.c.b16 %v1399, %v1399
        %v1416 = vpack.c.b16 %v1400, %v1400
        %vm1417 = vsmask.f32 7424
        %v1419 = vshrl.u32 %v1337, 16
        %v1421 = vshll.u32 %v1337, 16
        %v1423 = vrot.slane %v1421, 1
        %v1424 = vor.u32 %v1419, %v1423
        %v1426 = vshll.u32 %v1401, 16
        %v1428 = vrot.slane %v1426, 1
        %v1429 = vsel %vm1417, %v1424, %v1428
        %v1431 = vshrl.u32 %v1338, 16
        %v1433 = vshll.u32 %v1338, 16
        %v1435 = vrot.slane %v1433, 1
        %v1436 = vor.u32 %v1431, %v1435
        %v1438 = vshll.u32 %v1402, 16
        %v1440 = vrot.slane %v1438, 1
        %v1441 = vsel %vm1417, %v1436, %v1440
        %v1443 = vshrl.u32 %v1339, 16
        %v1445 = vshll.u32 %v1339, 16
        %v1447 = vrot.slane %v1445, 1
        %v1448 = vor.u32 %v1443, %v1447
        %v1450 = vshll.u32 %v1403, 16
        %v1452 = vrot.slane %v1450, 1
        %v1453 = vsel %vm1417, %v1448, %v1452
        %v1455 = vshrl.u32 %v1340, 16
        %v1457 = vshll.u32 %v1340, 16
        %v1459 = vrot.slane %v1457, 1
        %v1460 = vor.u32 %v1455, %v1459
        %v1462 = vshll.u32 %v1404, 16
        %v1464 = vrot.slane %v1462, 1
        %v1465 = vsel %vm1417, %v1460, %v1464
        %v1467 = vshrl.u32 %v1341, 16
        %v1469 = vshll.u32 %v1341, 16
        %v1471 = vrot.slane %v1469, 1
        %v1472 = vor.u32 %v1467, %v1471
        %v1474 = vshll.u32 %v1405, 16
        %v1476 = vrot.slane %v1474, 1
        %v1477 = vsel %vm1417, %v1472, %v1476
        %v1479 = vshrl.u32 %v1342, 16
        %v1481 = vshll.u32 %v1342, 16
        %v1483 = vrot.slane %v1481, 1
        %v1484 = vor.u32 %v1479, %v1483
        %v1486 = vshll.u32 %v1406, 16
        %v1488 = vrot.slane %v1486, 1
        %v1489 = vsel %vm1417, %v1484, %v1488
        %v1491 = vshrl.u32 %v1343, 16
        %v1493 = vshll.u32 %v1343, 16
        %v1495 = vrot.slane %v1493, 1
        %v1496 = vor.u32 %v1491, %v1495
        %v1498 = vshll.u32 %v1407, 16
        %v1500 = vrot.slane %v1498, 1
        %v1501 = vsel %vm1417, %v1496, %v1500
        %v1503 = vshrl.u32 %v1344, 16
        %v1505 = vshll.u32 %v1344, 16
        %v1507 = vrot.slane %v1505, 1
        %v1508 = vor.u32 %v1503, %v1507
        %v1510 = vshll.u32 %v1408, 16
        %v1512 = vrot.slane %v1510, 1
        %v1513 = vsel %vm1417, %v1508, %v1512
        %v1515 = vshrl.u32 %v1345, 16
        %v1517 = vshll.u32 %v1345, 16
        %v1519 = vrot.slane %v1517, 1
        %v1520 = vor.u32 %v1515, %v1519
        %v1522 = vshll.u32 %v1409, 16
        %v1524 = vrot.slane %v1522, 1
        %v1525 = vsel %vm1417, %v1520, %v1524
        %v1527 = vshrl.u32 %v1346, 16
        %v1529 = vshll.u32 %v1346, 16
        %v1531 = vrot.slane %v1529, 1
        %v1532 = vor.u32 %v1527, %v1531
        %v1534 = vshll.u32 %v1410, 16
        %v1536 = vrot.slane %v1534, 1
        %v1537 = vsel %vm1417, %v1532, %v1536
        %v1539 = vshrl.u32 %v1347, 16
        %v1541 = vshll.u32 %v1347, 16
        %v1543 = vrot.slane %v1541, 1
        %v1544 = vor.u32 %v1539, %v1543
        %v1546 = vshll.u32 %v1411, 16
        %v1548 = vrot.slane %v1546, 1
        %v1549 = vsel %vm1417, %v1544, %v1548
        %v1551 = vshrl.u32 %v1348, 16
        %v1553 = vshll.u32 %v1348, 16
        %v1555 = vrot.slane %v1553, 1
        %v1556 = vor.u32 %v1551, %v1555
        %v1558 = vshll.u32 %v1412, 16
        %v1560 = vrot.slane %v1558, 1
        %v1561 = vsel %vm1417, %v1556, %v1560
        %v1563 = vshrl.u32 %v1349, 16
        %v1565 = vshll.u32 %v1349, 16
        %v1567 = vrot.slane %v1565, 1
        %v1568 = vor.u32 %v1563, %v1567
        %v1570 = vshll.u32 %v1413, 16
        %v1572 = vrot.slane %v1570, 1
        %v1573 = vsel %vm1417, %v1568, %v1572
        %v1575 = vshrl.u32 %v1350, 16
        %v1577 = vshll.u32 %v1350, 16
        %v1579 = vrot.slane %v1577, 1
        %v1580 = vor.u32 %v1575, %v1579
        %v1582 = vshll.u32 %v1414, 16
        %v1584 = vrot.slane %v1582, 1
        %v1585 = vsel %vm1417, %v1580, %v1584
        %v1587 = vshrl.u32 %v1351, 16
        %v1589 = vshll.u32 %v1351, 16
        %v1591 = vrot.slane %v1589, 1
        %v1592 = vor.u32 %v1587, %v1591
        %v1594 = vshll.u32 %v1415, 16
        %v1596 = vrot.slane %v1594, 1
        %v1597 = vsel %vm1417, %v1592, %v1596
        %v1599 = vshrl.u32 %v1352, 16
        %v1601 = vshll.u32 %v1352, 16
        %v1603 = vrot.slane %v1601, 1
        %v1604 = vor.u32 %v1599, %v1603
        %v1606 = vshll.u32 %v1416, 16
        %v1608 = vrot.slane %v1606, 1
        %v1609 = vsel %vm1417, %v1604, %v1608
        %vm1626 = vcmask 1046528
        %v1627 = vrot.slane %v1337, 1
        %v1628 = vrot.slane %v1401, 1
        %v1629 = vsel %vm1626, %v1627, %v1628
        %v1630 = vrot.slane %v1338, 1
        %v1631 = vrot.slane %v1402, 1
        %v1632 = vsel %vm1626, %v1630, %v1631
        %v1633 = vrot.slane %v1339, 1
        %v1634 = vrot.slane %v1403, 1
        %v1635 = vsel %vm1626, %v1633, %v1634
        %v1636 = vrot.slane %v1340, 1
        %v1637 = vrot.slane %v1404, 1
        %v1638 = vsel %vm1626, %v1636, %v1637
        %v1639 = vrot.slane %v1341, 1
        %v1640 = vrot.slane %v1405, 1
        %v1641 = vsel %vm1626, %v1639, %v1640
        %v1642 = vrot.slane %v1342, 1
        %v1643 = vrot.slane %v1406, 1
        %v1644 = vsel %vm1626, %v1642, %v1643
        %v1645 = vrot.slane %v1343, 1
        %v1646 = vrot.slane %v1407, 1
        %v1647 = vsel %vm1626, %v1645, %v1646
        %v1648 = vrot.slane %v1344, 1
        %v1649 = vrot.slane %v1408, 1
        %v1650 = vsel %vm1626, %v1648, %v1649
        %v1651 = vrot.slane %v1345, 1
        %v1652 = vrot.slane %v1409, 1
        %v1653 = vsel %vm1626, %v1651, %v1652
        %v1654 = vrot.slane %v1346, 1
        %v1655 = vrot.slane %v1410, 1
        %v1656 = vsel %vm1626, %v1654, %v1655
        %v1657 = vrot.slane %v1347, 1
        %v1658 = vrot.slane %v1411, 1
        %v1659 = vsel %vm1626, %v1657, %v1658
        %v1660 = vrot.slane %v1348, 1
        %v1661 = vrot.slane %v1412, 1
        %v1662 = vsel %vm1626, %v1660, %v1661
        %v1663 = vrot.slane %v1349, 1
        %v1664 = vrot.slane %v1413, 1
        %v1665 = vsel %vm1626, %v1663, %v1664
        %v1666 = vrot.slane %v1350, 1
        %v1667 = vrot.slane %v1414, 1
        %v1668 = vsel %vm1626, %v1666, %v1667
        %v1669 = vrot.slane %v1351, 1
        %v1670 = vrot.slane %v1415, 1
        %v1671 = vsel %vm1626, %v1669, %v1670
        %v1672 = vrot.slane %v1352, 1
        %v1673 = vrot.slane %v1416, 1
        %v1674 = vsel %vm1626, %v1672, %v1673
        %v1693 = vunpack.c.l.b16 %v1267
        %v1694 = vunpack.c.l.b16 %v1268
        %v1695 = vpack.c.b16 %v1694, %v1693
        %v1698 = vunpack.c.l.b16 %v1269
        %v1699 = vpack.c.b16 %v1698, %v1698
        %v1701 = vshrl.u32 %v1695, 16
        %v1703 = vshll.u32 %v1695, 16
        %v1705 = vrot.slane %v1703, 1
        %v1706 = vor.u32 %v1701, %v1705
        %v1708 = vshll.u32 %v1699, 16
        %v1710 = vrot.slane %v1708, 1
        %v1711 = vsel %vm1417, %v1706, %v1710
        %v1713 = vrot.slane %v1695, 1
        %v1714 = vrot.slane %v1699, 1
        %v1715 = vsel %vm1626, %v1713, %v1714
        %v1719 = vunpack.c.l.b16 %v1270
        %v1720 = vunpack.c.l.b16 %v1271
        %v1721 = vpack.c.b16 %v1720, %v1719
        %v1724 = vunpack.c.l.b16 %v1272
        %v1725 = vpack.c.b16 %v1724, %v1724
        %v1727 = vshrl.u32 %v1721, 16
        %v1729 = vshll.u32 %v1721, 16
        %v1731 = vrot.slane %v1729, 1
        %v1732 = vor.u32 %v1727, %v1731
        %v1734 = vshll.u32 %v1725, 16
        %v1736 = vrot.slane %v1734, 1
        %v1737 = vsel %vm1417, %v1732, %v1736
        %v1739 = vrot.slane %v1721, 1
        %v1740 = vrot.slane %v1725, 1
        %v1741 = vsel %vm1626, %v1739, %v1740
        %v1743 = vld [vmem:[#allocation3] sm:$0xf]
        %v1744 = vld [vmem:[#allocation3 + $0x4] sm:$0xf]
        %v1745 = vld [vmem:[#allocation3 + $0x8] sm:$0xf]
        %v1746 = vld [vmem:[#allocation3 + $0xc] sm:$0xf]
        %v1747 = vld [vmem:[#allocation3 + $0x10] sm:$0xf]
        %v1748 = vld [vmem:[#allocation3 + $0x14] sm:$0xf]
        %v1749 = vld [vmem:[#allocation3 + $0x18] sm:$0xf]
        %v1750 = vld [vmem:[#allocation3 + $0x1c] sm:$0xf]
        %v1751 = vld [vmem:[#allocation3 + $0x20] sm:$0xf]
        %v1752 = vld [vmem:[#allocation3 + $0x24] sm:$0xf]
        %v1753 = vld [vmem:[#allocation3 + $0x28] sm:$0xf]
        %v1754 = vld [vmem:[#allocation3 + $0x2c] sm:$0xf]
        %v1755 = vld [vmem:[#allocation3 + $0x30] sm:$0xf]
        %v1756 = vld [vmem:[#allocation3 + $0x34] sm:$0xf]
        %v1757 = vld [vmem:[#allocation3 + $0x38] sm:$0xf]
        %v1758 = vld [vmem:[#allocation3 + $0x3c] sm:$0xf]
        %v1759 = vld [vmem:[#allocation3 + $0x40] sm:$0xf]
        %v1760 = vld [vmem:[#allocation3 + $0x44] sm:$0xf]
        %v1761 = vld [vmem:[#allocation3 + $0x48] sm:$0xf]
        %v1762 = vld [vmem:[#allocation3 + $0x4c] sm:$0xf]
        %v1763 = vld [vmem:[#allocation3 + $0x50] sm:$0xf]
        %v1764 = vld [vmem:[#allocation3 + $0x54] sm:$0xf]
        %v1765 = vld [vmem:[#allocation3 + $0x58] sm:$0xf]
        %v1766 = vld [vmem:[#allocation3 + $0x5c] sm:$0xf]
        %v1767 = vld [vmem:[#allocation3 + $0x60] sm:$0xf]
        %v1768 = vld [vmem:[#allocation3 + $0x64] sm:$0xf]
        %v1769 = vld [vmem:[#allocation3 + $0x68] sm:$0xf]
        %v1770 = vld [vmem:[#allocation3 + $0x6c] sm:$0xf]
        %v1771 = vld [vmem:[#allocation3 + $0x70] sm:$0xf]
        %v1772 = vld [vmem:[#allocation3 + $0x74] sm:$0xf]
        %v1773 = vld [vmem:[#allocation3 + $0x78] sm:$0xf]
        %v1774 = vld [vmem:[#allocation3 + $0x7c] sm:$0xf]
        %v1775 = vld [vmem:[#allocation3 + $0x80] sm:$0xf]
        %v1776 = vld [vmem:[#allocation3 + $0x84] sm:$0xf]
        %v1777 = vld [vmem:[#allocation3 + $0x88] sm:$0xf]
        %v1778 = vld [vmem:[#allocation3 + $0x8c] sm:$0xf]
        %v1779 = vld [vmem:[#allocation3 + $0x90] sm:$0xf]
        %v1780 = vld [vmem:[#allocation3 + $0x94] sm:$0xf]
        %v1781 = vld [vmem:[#allocation3 + $0x98] sm:$0xf]
        %v1782 = vld [vmem:[#allocation3 + $0x9c] sm:$0xf]
        %v1783 = vld [vmem:[#allocation3 + $0xa0] sm:$0xf]
        %v1784 = vld [vmem:[#allocation3 + $0xa4] sm:$0xf]
        %v1785 = vld [vmem:[#allocation3 + $0xa8] sm:$0xf]
        %v1786 = vld [vmem:[#allocation3 + $0xac] sm:$0xf]
        %v1787 = vld [vmem:[#allocation3 + $0xb0] sm:$0xf]
        %v1788 = vld [vmem:[#allocation3 + $0xb4] sm:$0xf]
        %v1789 = vld [vmem:[#allocation3 + $0xb8] sm:$0xf]
        %v1790 = vld [vmem:[#allocation3 + $0xbc] sm:$0xf]
        %v1791 = vld [vmem:[#allocation3 + $0xc0] sm:$0xf]
        %v1792 = vld [vmem:[#allocation3 + $0xc4] sm:$0xf]
        %v1793 = vld [vmem:[#allocation3 + $0xc8] sm:$0xf]
        %v1794 = vld [vmem:[#allocation3 + $0xcc] sm:$0xf]
        %v1795 = vld [vmem:[#allocation3 + $0xd0] sm:$0xf]
        %v1796 = vld [vmem:[#allocation3 + $0xd4] sm:$0xf]
        %v1797 = vld [vmem:[#allocation3 + $0xd8] sm:$0xf]
        %v1798 = vld [vmem:[#allocation3 + $0xdc] sm:$0xf]
        %v1799 = vld [vmem:[#allocation3 + $0xe0] sm:$0xf]
        %v1800 = vld [vmem:[#allocation3 + $0xe4] sm:$0xf]
        %v1801 = vld [vmem:[#allocation3 + $0xe8] sm:$0xf]
        %v1802 = vld [vmem:[#allocation3 + $0xec] sm:$0xf]
        %v1803 = vld [vmem:[#allocation3 + $0xf0] sm:$0xf]
        %v1804 = vld [vmem:[#allocation3 + $0xf4] sm:$0xf]
        %v1805 = vld [vmem:[#allocation3 + $0xf8] sm:$0xf]
        %v1806 = vld [vmem:[#allocation3 + $0xfc] sm:$0xf]
        %v1807 = vld [vmem:[#allocation3 + $0x100] sm:$0xf]
        %v1808 = vld [vmem:[#allocation3 + $0x104] sm:$0xf]
        %v1809 = vld [vmem:[#allocation3 + $0x108] sm:$0xf]
        %v1810 = vld [vmem:[#allocation3 + $0x10c] sm:$0xf]
        %v1811 = vld [vmem:[#allocation3 + $0x110] sm:$0xf]
        %v1812 = vld [vmem:[#allocation3 + $0x114] sm:$0xf]
        %v1813 = vld [vmem:[#allocation3 + $0x118] sm:$0xf]
        %v1814 = vld [vmem:[#allocation3 + $0x11c] sm:$0xf]
        %v1815 = vld [vmem:[#allocation3 + $0x120] sm:$0xf]
        %v1816 = vld [vmem:[#allocation3 + $0x124] sm:$0xf]
        %v1817 = vld [vmem:[#allocation3 + $0x128] sm:$0xf]
        %v1818 = vld [vmem:[#allocation3 + $0x12c] sm:$0xf]
        %v1819 = vld [vmem:[#allocation3 + $0x130] sm:$0xf]
        %v1820 = vld [vmem:[#allocation3 + $0x134] sm:$0xf]
        %v1821 = vld [vmem:[#allocation3 + $0x138] sm:$0xf]
        %v1822 = vld [vmem:[#allocation3 + $0x13c] sm:$0xf]
        %v1823 = vld [vmem:[#allocation3 + $0x140] sm:$0xf]
        %v1824 = vld [vmem:[#allocation3 + $0x144] sm:$0xf]
        %v1825 = vld [vmem:[#allocation3 + $0x148] sm:$0xf]
        %v1826 = vld [vmem:[#allocation3 + $0x14c] sm:$0xf]
        %v1827 = vld [vmem:[#allocation3 + $0x150] sm:$0xf]
        %v1828 = vld [vmem:[#allocation3 + $0x154] sm:$0xf]
        %v1829 = vld [vmem:[#allocation3 + $0x158] sm:$0xf]
        %v1830 = vld [vmem:[#allocation3 + $0x15c] sm:$0xf]
        %v1831 = vld [vmem:[#allocation3 + $0x160] sm:$0xf]
        %v1832 = vld [vmem:[#allocation3 + $0x164] sm:$0xf]
        %v1833 = vld [vmem:[#allocation3 + $0x168] sm:$0xf]
        %v1834 = vld [vmem:[#allocation3 + $0x16c] sm:$0xf]
        %v1835 = vld [vmem:[#allocation3 + $0x170] sm:$0xf]
        %v1836 = vld [vmem:[#allocation3 + $0x174] sm:$0xf]
        %v1837 = vld [vmem:[#allocation3 + $0x178] sm:$0xf]
        %v1838 = vld [vmem:[#allocation3 + $0x17c] sm:$0xf]
        %v1839 = vld [vmem:[#allocation3 + $0x180] sm:$0xf]
        %v1840 = vld [vmem:[#allocation3 + $0x184] sm:$0xf]
        %v1841 = vld [vmem:[#allocation3 + $0x188] sm:$0xf]
        %v1842 = vld [vmem:[#allocation3 + $0x18c] sm:$0xf]
        %v1843 = vld [vmem:[#allocation3 + $0x190] sm:$0xf]
        %v1844 = vld [vmem:[#allocation3 + $0x194] sm:$0xf]
        %v1845 = vld [vmem:[#allocation3 + $0x198] sm:$0xf]
        %v1846 = vld [vmem:[#allocation3 + $0x19c] sm:$0xf]
        %v1847 = vld [vmem:[#allocation3 + $0x1a0] sm:$0xf]
        %v1848 = vld [vmem:[#allocation3 + $0x1a4] sm:$0xf]
        %v1849 = vld [vmem:[#allocation3 + $0x1a8] sm:$0xf]
        %v1850 = vld [vmem:[#allocation3 + $0x1ac] sm:$0xf]
        %v1851 = vld [vmem:[#allocation3 + $0x1b0] sm:$0xf]
        %v1852 = vld [vmem:[#allocation3 + $0x1b4] sm:$0xf]
        %v1853 = vld [vmem:[#allocation3 + $0x1b8] sm:$0xf]
        %v1854 = vld [vmem:[#allocation3 + $0x1bc] sm:$0xf]
        %v1855 = vld [vmem:[#allocation3 + $0x1c0] sm:$0xf]
        %v1856 = vld [vmem:[#allocation3 + $0x1c4] sm:$0xf]
        %v1857 = vld [vmem:[#allocation3 + $0x1c8] sm:$0xf]
        %v1858 = vld [vmem:[#allocation3 + $0x1cc] sm:$0xf]
        %v1859 = vld [vmem:[#allocation3 + $0x1d0] sm:$0xf]
        %v1860 = vld [vmem:[#allocation3 + $0x1d4] sm:$0xf]
        %v1861 = vld [vmem:[#allocation3 + $0x1d8] sm:$0xf]
        %v1862 = vld [vmem:[#allocation3 + $0x1dc] sm:$0xf]
        %v1863 = vld [vmem:[#allocation3 + $0x1e0] sm:$0xf]
        %v1864 = vld [vmem:[#allocation3 + $0x1e4] sm:$0xf]
        %v1865 = vld [vmem:[#allocation3 + $0x1e8] sm:$0xf]
        %v1866 = vld [vmem:[#allocation3 + $0x1ec] sm:$0xf]
        %v1867 = vld [vmem:[#allocation3 + $0x1f0] sm:$0xf]
        %v1868 = vld [vmem:[#allocation3 + $0x1f4] sm:$0xf]
        %v1869 = vld [vmem:[#allocation3 + $0x1f8] sm:$0xf]
        %v1870 = vld [vmem:[#allocation3 + $0x1fc] sm:$0xf]
        %v1871 = vld [vmem:[#allocation3 + $0x200] sm:$0xf]
        %v1872 = vld [vmem:[#allocation3 + $0x204] sm:$0xf]
        %v1873 = vld [vmem:[#allocation3 + $0x208] sm:$0xf]
        %v1874 = vld [vmem:[#allocation3 + $0x20c] sm:$0xf]
        %v1875 = vld [vmem:[#allocation3 + $0x210] sm:$0xf]
        %v1876 = vld [vmem:[#allocation3 + $0x214] sm:$0xf]
        %v1877 = vld [vmem:[#allocation3 + $0x218] sm:$0xf]
        %v1878 = vld [vmem:[#allocation3 + $0x21c] sm:$0xf]
        %v1879 = vld [vmem:[#allocation3 + $0x220] sm:$0xf]
        %v1880 = vld [vmem:[#allocation3 + $0x224] sm:$0xf]
        %v1881 = vld [vmem:[#allocation3 + $0x228] sm:$0xf]
        %v1882 = vld [vmem:[#allocation3 + $0x22c] sm:$0xf]
        %v1883 = vld [vmem:[#allocation3 + $0x230] sm:$0xf]
        %v1884 = vld [vmem:[#allocation3 + $0x234] sm:$0xf]
        %v1885 = vld [vmem:[#allocation3 + $0x238] sm:$0xf]
        %v1886 = vld [vmem:[#allocation3 + $0x23c] sm:$0xf]
        %v1887 = vld [vmem:[%s6] sm:$0x1]
        %v1889 = vperm.slane %v1887, 0
        %v2035 = vunpack.c.l.b16 %v1743
        %v2036 = vunpack.c.l.b16 %v1744
        %v2037 = vunpack.c.l.b16 %v1745
        %v2038 = vunpack.c.l.b16 %v1746
        %v2039 = vunpack.c.l.b16 %v1747
        %v2040 = vunpack.c.l.b16 %v1748
        %v2041 = vunpack.c.l.b16 %v1749
        %v2042 = vunpack.c.l.b16 %v1750
        %v2043 = vunpack.c.l.b16 %v1751
        %v2044 = vunpack.c.l.b16 %v1752
        %v2045 = vunpack.c.l.b16 %v1753
        %v2046 = vunpack.c.l.b16 %v1754
        %v2047 = vunpack.c.l.b16 %v1755
        %v2048 = vunpack.c.l.b16 %v1756
        %v2049 = vunpack.c.l.b16 %v1757
        %v2050 = vunpack.c.l.b16 %v1758
        %v2051 = vunpack.c.l.b16 %v1759
        %v2052 = vunpack.c.l.b16 %v1760
        %v2053 = vunpack.c.l.b16 %v1761
        %v2054 = vunpack.c.l.b16 %v1762
        %v2055 = vunpack.c.l.b16 %v1763
        %v2056 = vunpack.c.l.b16 %v1764
        %v2057 = vunpack.c.l.b16 %v1765
        %v2058 = vunpack.c.l.b16 %v1766
        %v2059 = vunpack.c.l.b16 %v1767
        %v2060 = vunpack.c.l.b16 %v1768
        %v2061 = vunpack.c.l.b16 %v1769
        %v2062 = vunpack.c.l.b16 %v1770
        %v2063 = vunpack.c.l.b16 %v1771
        %v2064 = vunpack.c.l.b16 %v1772
        %v2065 = vunpack.c.l.b16 %v1773
        %v2066 = vunpack.c.l.b16 %v1774
        %v2067 = vunpack.c.l.b16 %v1775
        %v2068 = vunpack.c.l.b16 %v1776
        %v2069 = vunpack.c.l.b16 %v1777
        %v2070 = vunpack.c.l.b16 %v1778
        %v2071 = vunpack.c.l.b16 %v1779
        %v2072 = vunpack.c.l.b16 %v1780
        %v2073 = vunpack.c.l.b16 %v1781
        %v2074 = vunpack.c.l.b16 %v1782
        %v2075 = vunpack.c.l.b16 %v1783
        %v2076 = vunpack.c.l.b16 %v1784
        %v2077 = vunpack.c.l.b16 %v1785
        %v2078 = vunpack.c.l.b16 %v1786
        %v2079 = vunpack.c.l.b16 %v1787
        %v2080 = vunpack.c.l.b16 %v1788
        %v2081 = vunpack.c.l.b16 %v1789
        %v2082 = vunpack.c.l.b16 %v1790
        %v2083 = vunpack.c.l.b16 %v1791
        %v2084 = vunpack.c.l.b16 %v1792
        %v2085 = vunpack.c.l.b16 %v1793
        %v2086 = vunpack.c.l.b16 %v1794
        %v2087 = vunpack.c.l.b16 %v1795
        %v2088 = vunpack.c.l.b16 %v1796
        %v2089 = vunpack.c.l.b16 %v1797
        %v2090 = vunpack.c.l.b16 %v1798
        %v2091 = vunpack.c.l.b16 %v1799
        %v2092 = vunpack.c.l.b16 %v1800
        %v2093 = vunpack.c.l.b16 %v1801
        %v2094 = vunpack.c.l.b16 %v1802
        %v2095 = vunpack.c.l.b16 %v1803
        %v2096 = vunpack.c.l.b16 %v1804
        %v2097 = vunpack.c.l.b16 %v1805
        %v2098 = vunpack.c.l.b16 %v1806
        %v2099 = vunpack.c.l.b16 %v1807
        %v2100 = vunpack.c.l.b16 %v1808
        %v2101 = vunpack.c.l.b16 %v1809
        %v2102 = vunpack.c.l.b16 %v1810
        %v2103 = vunpack.c.l.b16 %v1811
        %v2104 = vunpack.c.l.b16 %v1812
        %v2105 = vunpack.c.l.b16 %v1813
        %v2106 = vunpack.c.l.b16 %v1814
        %v2107 = vunpack.c.l.b16 %v1815
        %v2108 = vunpack.c.l.b16 %v1816
        %v2109 = vunpack.c.l.b16 %v1817
        %v2110 = vunpack.c.l.b16 %v1818
        %v2111 = vunpack.c.l.b16 %v1819
        %v2112 = vunpack.c.l.b16 %v1820
        %v2113 = vunpack.c.l.b16 %v1821
        %v2114 = vunpack.c.l.b16 %v1822
        %v2115 = vunpack.c.l.b16 %v1823
        %v2116 = vunpack.c.l.b16 %v1824
        %v2117 = vunpack.c.l.b16 %v1825
        %v2118 = vunpack.c.l.b16 %v1826
        %v2119 = vunpack.c.l.b16 %v1827
        %v2120 = vunpack.c.l.b16 %v1828
        %v2121 = vunpack.c.l.b16 %v1829
        %v2122 = vunpack.c.l.b16 %v1830
        %v2123 = vunpack.c.l.b16 %v1831
        %v2124 = vunpack.c.l.b16 %v1832
        %v2125 = vunpack.c.l.b16 %v1833
        %v2126 = vunpack.c.l.b16 %v1834
        %v2127 = vunpack.c.l.b16 %v1835
        %v2128 = vunpack.c.l.b16 %v1836
        %v2129 = vunpack.c.l.b16 %v1837
        %v2130 = vunpack.c.l.b16 %v1838
        %v2131 = vunpack.c.l.b16 %v1839
        %v2132 = vunpack.c.l.b16 %v1840
        %v2133 = vunpack.c.l.b16 %v1841
        %v2134 = vunpack.c.l.b16 %v1842
        %v2135 = vunpack.c.l.b16 %v1843
        %v2136 = vunpack.c.l.b16 %v1844
        %v2137 = vunpack.c.l.b16 %v1845
        %v2138 = vunpack.c.l.b16 %v1846
        %v2139 = vunpack.c.l.b16 %v1847
        %v2140 = vunpack.c.l.b16 %v1848
        %v2141 = vunpack.c.l.b16 %v1849
        %v2142 = vunpack.c.l.b16 %v1850
        %v2143 = vunpack.c.l.b16 %v1851
        %v2144 = vunpack.c.l.b16 %v1852
        %v2145 = vunpack.c.l.b16 %v1853
        %v2146 = vunpack.c.l.b16 %v1854
        %v2147 = vunpack.c.l.b16 %v1855
        %v2148 = vunpack.c.l.b16 %v1856
        %v2149 = vunpack.c.l.b16 %v1857
        %v2150 = vunpack.c.l.b16 %v1858
        %v2151 = vunpack.c.l.b16 %v1859
        %v2152 = vunpack.c.l.b16 %v1860
        %v2153 = vunpack.c.l.b16 %v1861
        %v2154 = vunpack.c.l.b16 %v1862
        %v2155 = vunpack.c.l.b16 %v1863
        %v2156 = vunpack.c.l.b16 %v1864
        %v2157 = vunpack.c.l.b16 %v1865
        %v2158 = vunpack.c.l.b16 %v1866
        %v2159 = vunpack.c.l.b16 %v1867
        %v2160 = vunpack.c.l.b16 %v1868
        %v2161 = vunpack.c.l.b16 %v1869
        %v2162 = vunpack.c.l.b16 %v1870
        %v2163 = vunpack.c.l.b16 %v1871
        %v2164 = vunpack.c.l.b16 %v1872
        %v2165 = vunpack.c.l.b16 %v1873
        %v2166 = vunpack.c.l.b16 %v1874
        %v2167 = vunpack.c.l.b16 %v1875
        %v2168 = vunpack.c.l.b16 %v1876
        %v2169 = vunpack.c.l.b16 %v1877
        %v2170 = vunpack.c.l.b16 %v1878
        %v2171 = vunpack.c.l.b16 %v1879
        %v2172 = vunpack.c.l.b16 %v1880
        %v2173 = vunpack.c.l.b16 %v1881
        %v2174 = vunpack.c.l.b16 %v1882
        %v2175 = vunpack.c.l.b16 %v1883
        %v2176 = vunpack.c.l.b16 %v1884
        %v2177 = vunpack.c.l.b16 %v1885
        %v2178 = vunpack.c.l.b16 %v1886
        %v2179 = vpack.c.b16 %v2036, %v2035
        %v2180 = vpack.c.b16 %v2038, %v2037
        %v2181 = vpack.c.b16 %v2040, %v2039
        %v2182 = vpack.c.b16 %v2042, %v2041
        %v2183 = vpack.c.b16 %v2044, %v2043
        %v2184 = vpack.c.b16 %v2046, %v2045
        %v2185 = vpack.c.b16 %v2048, %v2047
        %v2186 = vpack.c.b16 %v2050, %v2049
        %v2187 = vpack.c.b16 %v2052, %v2051
        %v2188 = vpack.c.b16 %v2054, %v2053
        %v2189 = vpack.c.b16 %v2056, %v2055
        %v2190 = vpack.c.b16 %v2058, %v2057
        %v2191 = vpack.c.b16 %v2060, %v2059
        %v2192 = vpack.c.b16 %v2062, %v2061
        %v2193 = vpack.c.b16 %v2064, %v2063
        %v2194 = vpack.c.b16 %v2066, %v2065
        %v2195 = vpack.c.b16 %v2068, %v2067
        %v2196 = vpack.c.b16 %v2070, %v2069
        %v2197 = vpack.c.b16 %v2072, %v2071
        %v2198 = vpack.c.b16 %v2074, %v2073
        %v2199 = vpack.c.b16 %v2076, %v2075
        %v2200 = vpack.c.b16 %v2078, %v2077
        %v2201 = vpack.c.b16 %v2080, %v2079
        %v2202 = vpack.c.b16 %v2082, %v2081
        %v2203 = vpack.c.b16 %v2084, %v2083
        %v2204 = vpack.c.b16 %v2086, %v2085
        %v2205 = vpack.c.b16 %v2088, %v2087
        %v2206 = vpack.c.b16 %v2090, %v2089
        %v2207 = vpack.c.b16 %v2092, %v2091
        %v2208 = vpack.c.b16 %v2094, %v2093
        %v2209 = vpack.c.b16 %v2096, %v2095
        %v2210 = vpack.c.b16 %v2098, %v2097
        %v2211 = vpack.c.b16 %v2100, %v2099
        %v2212 = vpack.c.b16 %v2102, %v2101
        %v2213 = vpack.c.b16 %v2104, %v2103
        %v2214 = vpack.c.b16 %v2106, %v2105
        %v2215 = vpack.c.b16 %v2108, %v2107
        %v2216 = vpack.c.b16 %v2110, %v2109
        %v2217 = vpack.c.b16 %v2112, %v2111
        %v2218 = vpack.c.b16 %v2114, %v2113
        %v2219 = vpack.c.b16 %v2116, %v2115
        %v2220 = vpack.c.b16 %v2118, %v2117
        %v2221 = vpack.c.b16 %v2120, %v2119
        %v2222 = vpack.c.b16 %v2122, %v2121
        %v2223 = vpack.c.b16 %v2124, %v2123
        %v2224 = vpack.c.b16 %v2126, %v2125
        %v2225 = vpack.c.b16 %v2128, %v2127
        %v2226 = vpack.c.b16 %v2130, %v2129
        %v2227 = vpack.c.b16 %v2132, %v2131
        %v2228 = vpack.c.b16 %v2134, %v2133
        %v2229 = vpack.c.b16 %v2136, %v2135
        %v2230 = vpack.c.b16 %v2138, %v2137
        %v2231 = vpack.c.b16 %v2140, %v2139
        %v2232 = vpack.c.b16 %v2142, %v2141
        %v2233 = vpack.c.b16 %v2144, %v2143
        %v2234 = vpack.c.b16 %v2146, %v2145
        %v2235 = vpack.c.b16 %v2148, %v2147
        %v2236 = vpack.c.b16 %v2150, %v2149
        %v2237 = vpack.c.b16 %v2152, %v2151
        %v2238 = vpack.c.b16 %v2154, %v2153
        %v2239 = vpack.c.b16 %v2156, %v2155
        %v2240 = vpack.c.b16 %v2158, %v2157
        %v2241 = vpack.c.b16 %v2160, %v2159
        %v2242 = vpack.c.b16 %v2162, %v2161
        %v2243 = vpack.c.b16 %v2164, %v2163
        %v2244 = vpack.c.b16 %v2166, %v2165
        %v2245 = vpack.c.b16 %v2168, %v2167
        %v2246 = vpack.c.b16 %v2170, %v2169
        %v2247 = vpack.c.b16 %v2172, %v2171
        %v2248 = vpack.c.b16 %v2174, %v2173
        %v2249 = vpack.c.b16 %v2176, %v2175
        %v2250 = vpack.c.b16 %v2178, %v2177
        %2323 = vmatpush.bf16.msra.mxu0 %v2186
        %2324 = vmatpush.bf16.msra.mxu0 %v2185
        %2325 = vmatpush.bf16.msra.mxu0 %v2184
        %2326 = vmatpush.bf16.msra.mxu0 %v2183
        %2327 = vmatpush.bf16.msra.mxu0 %v2182
        %2328 = vmatpush.bf16.msra.mxu0 %v2181
        %2329 = vmatpush.bf16.msra.mxu0 %v2180
        %2330 = vmatpush.bf16.msra.mxu0 %v2179
        %2331 = vmatmul.bf16.gmra.mxu0 %v1337
        %v2332 = vpop.f32.mrf.mxu0
        %v2333 = vadd.f32 %v1889, %v2332
        %v2334 = vpop.f32.mrf.mxu0
        %v2335 = vadd.f32 %v1889, %v2334
        %2336 = vmatmul.bf16.gmra.mxu0 %v1338
        %v2337 = vpop.f32.mrf.mxu0
        %v2338 = vadd.f32 %v1889, %v2337
        %v2339 = vpop.f32.mrf.mxu0
        %v2340 = vadd.f32 %v1889, %v2339
        %2341 = vmatmul.bf16.gmra.mxu0 %v1339
        %v2342 = vpop.f32.mrf.mxu0
        %v2343 = vadd.f32 %v1889, %v2342
        %v2344 = vpop.f32.mrf.mxu0
        %v2345 = vadd.f32 %v1889, %v2344
        %2346 = vmatmul.bf16.gmra.mxu0 %v1340
        %v2347 = vpop.f32.mrf.mxu0
        %v2348 = vadd.f32 %v1889, %v2347
        %v2349 = vpop.f32.mrf.mxu0
        %v2350 = vadd.f32 %v1889, %v2349
        %2351 = vmatmul.bf16.gmra.mxu0 %v1341
        %v2352 = vpop.f32.mrf.mxu0
        %v2353 = vadd.f32 %v1889, %v2352
        %v2354 = vpop.f32.mrf.mxu0
        %v2355 = vadd.f32 %v1889, %v2354
        %2356 = vmatmul.bf16.gmra.mxu0 %v1342
        %v2357 = vpop.f32.mrf.mxu0
        %v2358 = vadd.f32 %v1889, %v2357
        %v2359 = vpop.f32.mrf.mxu0
        %v2360 = vadd.f32 %v1889, %v2359
        %2361 = vmatmul.bf16.gmra.mxu0 %v1343
        %v2362 = vpop.f32.mrf.mxu0
        %v2363 = vadd.f32 %v1889, %v2362
        %v2364 = vpop.f32.mrf.mxu0
        %v2365 = vadd.f32 %v1889, %v2364
        %2366 = vmatmul.bf16.gmra.mxu0 %v1344
        %v2367 = vpop.f32.mrf.mxu0
        %v2368 = vadd.f32 %v1889, %v2367
        %v2369 = vpop.f32.mrf.mxu0
        %v2370 = vadd.f32 %v1889, %v2369
        %2371 = vmatmul.bf16.gmra.mxu0 %v1345
        %v2372 = vpop.f32.mrf.mxu0
        %v2373 = vadd.f32 %v1889, %v2372
        %v2374 = vpop.f32.mrf.mxu0
        %v2375 = vadd.f32 %v1889, %v2374
        %2376 = vmatmul.bf16.gmra.mxu0 %v1346
        %v2377 = vpop.f32.mrf.mxu0
        %v2378 = vadd.f32 %v1889, %v2377
        %v2379 = vpop.f32.mrf.mxu0
        %v2380 = vadd.f32 %v1889, %v2379
        %2381 = vmatmul.bf16.gmra.mxu0 %v1347
        %v2382 = vpop.f32.mrf.mxu0
        %v2383 = vadd.f32 %v1889, %v2382
        %v2384 = vpop.f32.mrf.mxu0
        %v2385 = vadd.f32 %v1889, %v2384
        %2386 = vmatmul.bf16.gmra.mxu0 %v1348
        %v2387 = vpop.f32.mrf.mxu0
        %v2388 = vadd.f32 %v1889, %v2387
        %v2389 = vpop.f32.mrf.mxu0
        %v2390 = vadd.f32 %v1889, %v2389
        %2391 = vmatmul.bf16.gmra.mxu0 %v1349
        %v2392 = vpop.f32.mrf.mxu0
        %v2393 = vadd.f32 %v1889, %v2392
        %v2394 = vpop.f32.mrf.mxu0
        %v2395 = vadd.f32 %v1889, %v2394
        %2396 = vmatmul.bf16.gmra.mxu0 %v1350
        %v2397 = vpop.f32.mrf.mxu0
        %v2398 = vadd.f32 %v1889, %v2397
        %v2399 = vpop.f32.mrf.mxu0
        %v2400 = vadd.f32 %v1889, %v2399
        %2401 = vmatmul.bf16.gmra.mxu0 %v1351
        %v2402 = vpop.f32.mrf.mxu0
        %v2403 = vadd.f32 %v1889, %v2402
        %v2404 = vpop.f32.mrf.mxu0
        %v2405 = vadd.f32 %v1889, %v2404
        %2406 = vmatmul.bf16.gmra.mxu0 %v1352
        %v2407 = vpop.f32.mrf.mxu0
        %v2408 = vadd.f32 %v1889, %v2407
        %v2409 = vpop.f32.mrf.mxu0
        %v2410 = vadd.f32 %v1889, %v2409
        %2411 = vdwg.mxu0
        %2412 = vmatpush.bf16.msra.mxu0 %v2194
        %2413 = vmatpush.bf16.msra.mxu0 %v2193
        %2414 = vmatpush.bf16.msra.mxu0 %v2192
        %2415 = vmatpush.bf16.msra.mxu0 %v2191
        %2416 = vmatpush.bf16.msra.mxu0 %v2190
        %2417 = vmatpush.bf16.msra.mxu0 %v2189
        %2418 = vmatpush.bf16.msra.mxu0 %v2188
        %2419 = vmatpush.bf16.msra.mxu0 %v2187
        %2420 = vmatmul.bf16.gmra.mxu0 %v1429
        %v2421 = vpop.f32.mrf.mxu0
        %v2422 = vadd.f32 %v2333, %v2421
        %v2423 = vpop.f32.mrf.mxu0
        %v2424 = vadd.f32 %v2335, %v2423
        %2425 = vmatmul.bf16.gmra.mxu0 %v1441
        %v2426 = vpop.f32.mrf.mxu0
        %v2427 = vadd.f32 %v2338, %v2426
        %v2428 = vpop.f32.mrf.mxu0
        %v2429 = vadd.f32 %v2340, %v2428
        %2430 = vmatmul.bf16.gmra.mxu0 %v1453
        %v2431 = vpop.f32.mrf.mxu0
        %v2432 = vadd.f32 %v2343, %v2431
        %v2433 = vpop.f32.mrf.mxu0
        %v2434 = vadd.f32 %v2345, %v2433
        %2435 = vmatmul.bf16.gmra.mxu0 %v1465
        %v2436 = vpop.f32.mrf.mxu0
        %v2437 = vadd.f32 %v2348, %v2436
        %v2438 = vpop.f32.mrf.mxu0
        %v2439 = vadd.f32 %v2350, %v2438
        %2440 = vmatmul.bf16.gmra.mxu0 %v1477
        %v2441 = vpop.f32.mrf.mxu0
        %v2442 = vadd.f32 %v2353, %v2441
        %v2443 = vpop.f32.mrf.mxu0
        %v2444 = vadd.f32 %v2355, %v2443
        %2445 = vmatmul.bf16.gmra.mxu0 %v1489
        %v2446 = vpop.f32.mrf.mxu0
        %v2447 = vadd.f32 %v2358, %v2446
        %v2448 = vpop.f32.mrf.mxu0
        %v2449 = vadd.f32 %v2360, %v2448
        %2450 = vmatmul.bf16.gmra.mxu0 %v1501
        %v2451 = vpop.f32.mrf.mxu0
        %v2452 = vadd.f32 %v2363, %v2451
        %v2453 = vpop.f32.mrf.mxu0
        %v2454 = vadd.f32 %v2365, %v2453
        %2455 = vmatmul.bf16.gmra.mxu0 %v1513
        %v2456 = vpop.f32.mrf.mxu0
        %v2457 = vadd.f32 %v2368, %v2456
        %v2458 = vpop.f32.mrf.mxu0
        %v2459 = vadd.f32 %v2370, %v2458
        %2460 = vmatmul.bf16.gmra.mxu0 %v1525
        %v2461 = vpop.f32.mrf.mxu0
        %v2462 = vadd.f32 %v2373, %v2461
        %v2463 = vpop.f32.mrf.mxu0
        %v2464 = vadd.f32 %v2375, %v2463
        %2465 = vmatmul.bf16.gmra.mxu0 %v1537
        %v2466 = vpop.f32.mrf.mxu0
        %v2467 = vadd.f32 %v2378, %v2466
        %v2468 = vpop.f32.mrf.mxu0
        %v2469 = vadd.f32 %v2380, %v2468
        %2470 = vmatmul.bf16.gmra.mxu0 %v1549
        %v2471 = vpop.f32.mrf.mxu0
        %v2472 = vadd.f32 %v2383, %v2471
        %v2473 = vpop.f32.mrf.mxu0
        %v2474 = vadd.f32 %v2385, %v2473
        %2475 = vmatmul.bf16.gmra.mxu0 %v1561
        %v2476 = vpop.f32.mrf.mxu0
        %v2477 = vadd.f32 %v2388, %v2476
        %v2478 = vpop.f32.mrf.mxu0
        %v2479 = vadd.f32 %v2390, %v2478
        %2480 = vmatmul.bf16.gmra.mxu0 %v1573
        %v2481 = vpop.f32.mrf.mxu0
        %v2482 = vadd.f32 %v2393, %v2481
        %v2483 = vpop.f32.mrf.mxu0
        %v2484 = vadd.f32 %v2395, %v2483
        %2485 = vmatmul.bf16.gmra.mxu0 %v1585
        %v2486 = vpop.f32.mrf.mxu0
        %v2487 = vadd.f32 %v2398, %v2486
        %v2488 = vpop.f32.mrf.mxu0
        %v2489 = vadd.f32 %v2400, %v2488
        %2490 = vmatmul.bf16.gmra.mxu0 %v1597
        %v2491 = vpop.f32.mrf.mxu0
        %v2492 = vadd.f32 %v2403, %v2491
        %v2493 = vpop.f32.mrf.mxu0
        %v2494 = vadd.f32 %v2405, %v2493
        %2495 = vmatmul.bf16.gmra.mxu0 %v1609
        %v2496 = vpop.f32.mrf.mxu0
        %v2497 = vadd.f32 %v2408, %v2496
        %v2498 = vpop.f32.mrf.mxu0
        %v2499 = vadd.f32 %v2410, %v2498
        %2500 = vdwg.mxu0
        %2501 = vmatpush.bf16.msra.mxu0 %v2202
        %2502 = vmatpush.bf16.msra.mxu0 %v2201
        %2503 = vmatpush.bf16.msra.mxu0 %v2200
        %2504 = vmatpush.bf16.msra.mxu0 %v2199
        %2505 = vmatpush.bf16.msra.mxu0 %v2198
        %2506 = vmatpush.bf16.msra.mxu0 %v2197
        %2507 = vmatpush.bf16.msra.mxu0 %v2196
        %2508 = vmatpush.bf16.msra.mxu0 %v2195
        %2509 = vmatmul.bf16.gmra.mxu0 %v1629
        %v2510 = vpop.f32.mrf.mxu0
        %v2511 = vadd.f32 %v2422, %v2510
        %v2512 = vpop.f32.mrf.mxu0
        %v2513 = vadd.f32 %v2424, %v2512
        %2514 = vmatmul.bf16.gmra.mxu0 %v1632
        %v2515 = vpop.f32.mrf.mxu0
        %v2516 = vadd.f32 %v2427, %v2515
        %v2517 = vpop.f32.mrf.mxu0
        %v2518 = vadd.f32 %v2429, %v2517
        %2519 = vmatmul.bf16.gmra.mxu0 %v1635
        %v2520 = vpop.f32.mrf.mxu0
        %v2521 = vadd.f32 %v2432, %v2520
        %v2522 = vpop.f32.mrf.mxu0
        %v2523 = vadd.f32 %v2434, %v2522
        %2524 = vmatmul.bf16.gmra.mxu0 %v1638
        %v2525 = vpop.f32.mrf.mxu0
        %v2526 = vadd.f32 %v2437, %v2525
        %v2527 = vpop.f32.mrf.mxu0
        %v2528 = vadd.f32 %v2439, %v2527
        %2529 = vmatmul.bf16.gmra.mxu0 %v1641
        %v2530 = vpop.f32.mrf.mxu0
        %v2531 = vadd.f32 %v2442, %v2530
        %v2532 = vpop.f32.mrf.mxu0
        %v2533 = vadd.f32 %v2444, %v2532
        %2534 = vmatmul.bf16.gmra.mxu0 %v1644
        %v2535 = vpop.f32.mrf.mxu0
        %v2536 = vadd.f32 %v2447, %v2535
        %v2537 = vpop.f32.mrf.mxu0
        %v2538 = vadd.f32 %v2449, %v2537
        %2539 = vmatmul.bf16.gmra.mxu0 %v1647
        %v2540 = vpop.f32.mrf.mxu0
        %v2541 = vadd.f32 %v2452, %v2540
        %v2542 = vpop.f32.mrf.mxu0
        %v2543 = vadd.f32 %v2454, %v2542
        %2544 = vmatmul.bf16.gmra.mxu0 %v1650
        %v2545 = vpop.f32.mrf.mxu0
        %v2546 = vadd.f32 %v2457, %v2545
        %v2547 = vpop.f32.mrf.mxu0
        %v2548 = vadd.f32 %v2459, %v2547
        %2549 = vmatmul.bf16.gmra.mxu0 %v1653
        %v2550 = vpop.f32.mrf.mxu0
        %v2551 = vadd.f32 %v2462, %v2550
        %v2552 = vpop.f32.mrf.mxu0
        %v2553 = vadd.f32 %v2464, %v2552
        %2554 = vmatmul.bf16.gmra.mxu0 %v1656
        %v2555 = vpop.f32.mrf.mxu0
        %v2556 = vadd.f32 %v2467, %v2555
        %v2557 = vpop.f32.mrf.mxu0
        %v2558 = vadd.f32 %v2469, %v2557
        %2559 = vmatmul.bf16.gmra.mxu0 %v1659
        %v2560 = vpop.f32.mrf.mxu0
        %v2561 = vadd.f32 %v2472, %v2560
        %v2562 = vpop.f32.mrf.mxu0
        %v2563 = vadd.f32 %v2474, %v2562
        %2564 = vmatmul.bf16.gmra.mxu0 %v1662
        %v2565 = vpop.f32.mrf.mxu0
        %v2566 = vadd.f32 %v2477, %v2565
        %v2567 = vpop.f32.mrf.mxu0
        %v2568 = vadd.f32 %v2479, %v2567
        %2569 = vmatmul.bf16.gmra.mxu0 %v1665
        %v2570 = vpop.f32.mrf.mxu0
        %v2571 = vadd.f32 %v2482, %v2570
        %v2572 = vpop.f32.mrf.mxu0
        %v2573 = vadd.f32 %v2484, %v2572
        %2574 = vmatmul.bf16.gmra.mxu0 %v1668
        %v2575 = vpop.f32.mrf.mxu0
        %v2576 = vadd.f32 %v2487, %v2575
        %v2577 = vpop.f32.mrf.mxu0
        %v2578 = vadd.f32 %v2489, %v2577
        %2579 = vmatmul.bf16.gmra.mxu0 %v1671
        %v2580 = vpop.f32.mrf.mxu0
        %v2581 = vadd.f32 %v2492, %v2580
        %v2582 = vpop.f32.mrf.mxu0
        %v2583 = vadd.f32 %v2494, %v2582
        %2584 = vmatmul.bf16.gmra.mxu0 %v1674
        %v2585 = vpop.f32.mrf.mxu0
        %v2586 = vadd.f32 %v2497, %v2585
        %v2587 = vpop.f32.mrf.mxu0
        %v2588 = vadd.f32 %v2499, %v2587
        %2589 = vdwg.mxu0
        %2590 = vmatpush.bf16.msra.mxu0 %v2210
        %2591 = vmatpush.bf16.msra.mxu0 %v2209
        %2592 = vmatpush.bf16.msra.mxu0 %v2208
        %2593 = vmatpush.bf16.msra.mxu0 %v2207
        %2594 = vmatpush.bf16.msra.mxu0 %v2206
        %2595 = vmatpush.bf16.msra.mxu0 %v2205
        %2596 = vmatpush.bf16.msra.mxu0 %v2204
        %2597 = vmatpush.bf16.msra.mxu0 %v2203
        %2598 = vmatmul.bf16.gmra.mxu0 %v1338
        %v2599 = vpop.f32.mrf.mxu0
        %v2600 = vadd.f32 %v2511, %v2599
        %v2601 = vpop.f32.mrf.mxu0
        %v2602 = vadd.f32 %v2513, %v2601
        %2603 = vmatmul.bf16.gmra.mxu0 %v1339
        %v2604 = vpop.f32.mrf.mxu0
        %v2605 = vadd.f32 %v2516, %v2604
        %v2606 = vpop.f32.mrf.mxu0
        %v2607 = vadd.f32 %v2518, %v2606
        %2608 = vmatmul.bf16.gmra.mxu0 %v1340
        %v2609 = vpop.f32.mrf.mxu0
        %v2610 = vadd.f32 %v2521, %v2609
        %v2611 = vpop.f32.mrf.mxu0
        %v2612 = vadd.f32 %v2523, %v2611
        %2613 = vmatmul.bf16.gmra.mxu0 %v1341
        %v2614 = vpop.f32.mrf.mxu0
        %v2615 = vadd.f32 %v2526, %v2614
        %v2616 = vpop.f32.mrf.mxu0
        %v2617 = vadd.f32 %v2528, %v2616
        %2618 = vmatmul.bf16.gmra.mxu0 %v1342
        %v2619 = vpop.f32.mrf.mxu0
        %v2620 = vadd.f32 %v2531, %v2619
        %v2621 = vpop.f32.mrf.mxu0
        %v2622 = vadd.f32 %v2533, %v2621
        %2623 = vmatmul.bf16.gmra.mxu0 %v1343
        %v2624 = vpop.f32.mrf.mxu0
        %v2625 = vadd.f32 %v2536, %v2624
        %v2626 = vpop.f32.mrf.mxu0
        %v2627 = vadd.f32 %v2538, %v2626
        %2628 = vmatmul.bf16.gmra.mxu0 %v1344
        %v2629 = vpop.f32.mrf.mxu0
        %v2630 = vadd.f32 %v2541, %v2629
        %v2631 = vpop.f32.mrf.mxu0
        %v2632 = vadd.f32 %v2543, %v2631
        %2633 = vmatmul.bf16.gmra.mxu0 %v1345
        %v2634 = vpop.f32.mrf.mxu0
        %v2635 = vadd.f32 %v2546, %v2634
        %v2636 = vpop.f32.mrf.mxu0
        %v2637 = vadd.f32 %v2548, %v2636
        %2638 = vmatmul.bf16.gmra.mxu0 %v1346
        %v2639 = vpop.f32.mrf.mxu0
        %v2640 = vadd.f32 %v2551, %v2639
        %v2641 = vpop.f32.mrf.mxu0
        %v2642 = vadd.f32 %v2553, %v2641
        %2643 = vmatmul.bf16.gmra.mxu0 %v1347
        %v2644 = vpop.f32.mrf.mxu0
        %v2645 = vadd.f32 %v2556, %v2644
        %v2646 = vpop.f32.mrf.mxu0
        %v2647 = vadd.f32 %v2558, %v2646
        %2648 = vmatmul.bf16.gmra.mxu0 %v1348
        %v2649 = vpop.f32.mrf.mxu0
        %v2650 = vadd.f32 %v2561, %v2649
        %v2651 = vpop.f32.mrf.mxu0
        %v2652 = vadd.f32 %v2563, %v2651
        %2653 = vmatmul.bf16.gmra.mxu0 %v1349
        %v2654 = vpop.f32.mrf.mxu0
        %v2655 = vadd.f32 %v2566, %v2654
        %v2656 = vpop.f32.mrf.mxu0
        %v2657 = vadd.f32 %v2568, %v2656
        %2658 = vmatmul.bf16.gmra.mxu0 %v1350
        %v2659 = vpop.f32.mrf.mxu0
        %v2660 = vadd.f32 %v2571, %v2659
        %v2661 = vpop.f32.mrf.mxu0
        %v2662 = vadd.f32 %v2573, %v2661
        %2663 = vmatmul.bf16.gmra.mxu0 %v1351
        %v2664 = vpop.f32.mrf.mxu0
        %v2665 = vadd.f32 %v2576, %v2664
        %v2666 = vpop.f32.mrf.mxu0
        %v2667 = vadd.f32 %v2578, %v2666
        %2668 = vmatmul.bf16.gmra.mxu0 %v1352
        %v2669 = vpop.f32.mrf.mxu0
        %v2670 = vadd.f32 %v2581, %v2669
        %v2671 = vpop.f32.mrf.mxu0
        %v2672 = vadd.f32 %v2583, %v2671
        %2673 = vmatmul.bf16.gmra.mxu0 %v1695
        %v2674 = vpop.f32.mrf.mxu0
        %v2675 = vadd.f32 %v2586, %v2674
        %v2676 = vpop.f32.mrf.mxu0
        %v2677 = vadd.f32 %v2588, %v2676
        %2678 = vdwg.mxu0
        %2679 = vmatpush.bf16.msra.mxu0 %v2218
        %2680 = vmatpush.bf16.msra.mxu0 %v2217
        %2681 = vmatpush.bf16.msra.mxu0 %v2216
        %2682 = vmatpush.bf16.msra.mxu0 %v2215
        %2683 = vmatpush.bf16.msra.mxu0 %v2214
        %2684 = vmatpush.bf16.msra.mxu0 %v2213
        %2685 = vmatpush.bf16.msra.mxu0 %v2212
        %2686 = vmatpush.bf16.msra.mxu0 %v2211
        %2687 = vmatmul.bf16.gmra.mxu0 %v1441
        %v2688 = vpop.f32.mrf.mxu0
        %v2689 = vadd.f32 %v2600, %v2688
        %v2690 = vpop.f32.mrf.mxu0
        %v2691 = vadd.f32 %v2602, %v2690
        %2692 = vmatmul.bf16.gmra.mxu0 %v1453
        %v2693 = vpop.f32.mrf.mxu0
        %v2694 = vadd.f32 %v2605, %v2693
        %v2695 = vpop.f32.mrf.mxu0
        %v2696 = vadd.f32 %v2607, %v2695
        %2697 = vmatmul.bf16.gmra.mxu0 %v1465
        %v2698 = vpop.f32.mrf.mxu0
        %v2699 = vadd.f32 %v2610, %v2698
        %v2700 = vpop.f32.mrf.mxu0
        %v2701 = vadd.f32 %v2612, %v2700
        %2702 = vmatmul.bf16.gmra.mxu0 %v1477
        %v2703 = vpop.f32.mrf.mxu0
        %v2704 = vadd.f32 %v2615, %v2703
        %v2705 = vpop.f32.mrf.mxu0
        %v2706 = vadd.f32 %v2617, %v2705
        %2707 = vmatmul.bf16.gmra.mxu0 %v1489
        %v2708 = vpop.f32.mrf.mxu0
        %v2709 = vadd.f32 %v2620, %v2708
        %v2710 = vpop.f32.mrf.mxu0
        %v2711 = vadd.f32 %v2622, %v2710
        %2712 = vmatmul.bf16.gmra.mxu0 %v1501
        %v2713 = vpop.f32.mrf.mxu0
        %v2714 = vadd.f32 %v2625, %v2713
        %v2715 = vpop.f32.mrf.mxu0
        %v2716 = vadd.f32 %v2627, %v2715
        %2717 = vmatmul.bf16.gmra.mxu0 %v1513
        %v2718 = vpop.f32.mrf.mxu0
        %v2719 = vadd.f32 %v2630, %v2718
        %v2720 = vpop.f32.mrf.mxu0
        %v2721 = vadd.f32 %v2632, %v2720
        %2722 = vmatmul.bf16.gmra.mxu0 %v1525
        %v2723 = vpop.f32.mrf.mxu0
        %v2724 = vadd.f32 %v2635, %v2723
        %v2725 = vpop.f32.mrf.mxu0
        %v2726 = vadd.f32 %v2637, %v2725
        %2727 = vmatmul.bf16.gmra.mxu0 %v1537
        %v2728 = vpop.f32.mrf.mxu0
        %v2729 = vadd.f32 %v2640, %v2728
        %v2730 = vpop.f32.mrf.mxu0
        %v2731 = vadd.f32 %v2642, %v2730
        %2732 = vmatmul.bf16.gmra.mxu0 %v1549
        %v2733 = vpop.f32.mrf.mxu0
        %v2734 = vadd.f32 %v2645, %v2733
        %v2735 = vpop.f32.mrf.mxu0
        %v2736 = vadd.f32 %v2647, %v2735
        %2737 = vmatmul.bf16.gmra.mxu0 %v1561
        %v2738 = vpop.f32.mrf.mxu0
        %v2739 = vadd.f32 %v2650, %v2738
        %v2740 = vpop.f32.mrf.mxu0
        %v2741 = vadd.f32 %v2652, %v2740
        %2742 = vmatmul.bf16.gmra.mxu0 %v1573
        %v2743 = vpop.f32.mrf.mxu0
        %v2744 = vadd.f32 %v2655, %v2743
        %v2745 = vpop.f32.mrf.mxu0
        %v2746 = vadd.f32 %v2657, %v2745
        %2747 = vmatmul.bf16.gmra.mxu0 %v1585
        %v2748 = vpop.f32.mrf.mxu0
        %v2749 = vadd.f32 %v2660, %v2748
        %v2750 = vpop.f32.mrf.mxu0
        %v2751 = vadd.f32 %v2662, %v2750
        %2752 = vmatmul.bf16.gmra.mxu0 %v1597
        %v2753 = vpop.f32.mrf.mxu0
        %v2754 = vadd.f32 %v2665, %v2753
        %v2755 = vpop.f32.mrf.mxu0
        %v2756 = vadd.f32 %v2667, %v2755
        %2757 = vmatmul.bf16.gmra.mxu0 %v1609
        %v2758 = vpop.f32.mrf.mxu0
        %v2759 = vadd.f32 %v2670, %v2758
        %v2760 = vpop.f32.mrf.mxu0
        %v2761 = vadd.f32 %v2672, %v2760
        %2762 = vmatmul.bf16.gmra.mxu0 %v1711
        %v2763 = vpop.f32.mrf.mxu0
        %v2764 = vadd.f32 %v2675, %v2763
        %v2765 = vpop.f32.mrf.mxu0
        %v2766 = vadd.f32 %v2677, %v2765
        %2767 = vdwg.mxu0
        %2768 = vmatpush.bf16.msra.mxu0 %v2226
        %2769 = vmatpush.bf16.msra.mxu0 %v2225
        %2770 = vmatpush.bf16.msra.mxu0 %v2224
        %2771 = vmatpush.bf16.msra.mxu0 %v2223
        %2772 = vmatpush.bf16.msra.mxu0 %v2222
        %2773 = vmatpush.bf16.msra.mxu0 %v2221
        %2774 = vmatpush.bf16.msra.mxu0 %v2220
        %2775 = vmatpush.bf16.msra.mxu0 %v2219
        %2776 = vmatmul.bf16.gmra.mxu0 %v1632
        %v2777 = vpop.f32.mrf.mxu0
        %v2778 = vadd.f32 %v2689, %v2777
        %v2779 = vpop.f32.mrf.mxu0
        %v2780 = vadd.f32 %v2691, %v2779
        %2781 = vmatmul.bf16.gmra.mxu0 %v1635
        %v2782 = vpop.f32.mrf.mxu0
        %v2783 = vadd.f32 %v2694, %v2782
        %v2784 = vpop.f32.mrf.mxu0
        %v2785 = vadd.f32 %v2696, %v2784
        %2786 = vmatmul.bf16.gmra.mxu0 %v1638
        %v2787 = vpop.f32.mrf.mxu0
        %v2788 = vadd.f32 %v2699, %v2787
        %v2789 = vpop.f32.mrf.mxu0
        %v2790 = vadd.f32 %v2701, %v2789
        %2791 = vmatmul.bf16.gmra.mxu0 %v1641
        %v2792 = vpop.f32.mrf.mxu0
        %v2793 = vadd.f32 %v2704, %v2792
        %v2794 = vpop.f32.mrf.mxu0
        %v2795 = vadd.f32 %v2706, %v2794
        %2796 = vmatmul.bf16.gmra.mxu0 %v1644
        %v2797 = vpop.f32.mrf.mxu0
        %v2798 = vadd.f32 %v2709, %v2797
        %v2799 = vpop.f32.mrf.mxu0
        %v2800 = vadd.f32 %v2711, %v2799
        %2801 = vmatmul.bf16.gmra.mxu0 %v1647
        %v2802 = vpop.f32.mrf.mxu0
        %v2803 = vadd.f32 %v2714, %v2802
        %v2804 = vpop.f32.mrf.mxu0
        %v2805 = vadd.f32 %v2716, %v2804
        %2806 = vmatmul.bf16.gmra.mxu0 %v1650
        %v2807 = vpop.f32.mrf.mxu0
        %v2808 = vadd.f32 %v2719, %v2807
        %v2809 = vpop.f32.mrf.mxu0
        %v2810 = vadd.f32 %v2721, %v2809
        %2811 = vmatmul.bf16.gmra.mxu0 %v1653
        %v2812 = vpop.f32.mrf.mxu0
        %v2813 = vadd.f32 %v2724, %v2812
        %v2814 = vpop.f32.mrf.mxu0
        %v2815 = vadd.f32 %v2726, %v2814
        %2816 = vmatmul.bf16.gmra.mxu0 %v1656
        %v2817 = vpop.f32.mrf.mxu0
        %v2818 = vadd.f32 %v2729, %v2817
        %v2819 = vpop.f32.mrf.mxu0
        %v2820 = vadd.f32 %v2731, %v2819
        %2821 = vmatmul.bf16.gmra.mxu0 %v1659
        %v2822 = vpop.f32.mrf.mxu0
        %v2823 = vadd.f32 %v2734, %v2822
        %v2824 = vpop.f32.mrf.mxu0
        %v2825 = vadd.f32 %v2736, %v2824
        %2826 = vmatmul.bf16.gmra.mxu0 %v1662
        %v2827 = vpop.f32.mrf.mxu0
        %v2828 = vadd.f32 %v2739, %v2827
        %v2829 = vpop.f32.mrf.mxu0
        %v2830 = vadd.f32 %v2741, %v2829
        %2831 = vmatmul.bf16.gmra.mxu0 %v1665
        %v2832 = vpop.f32.mrf.mxu0
        %v2833 = vadd.f32 %v2744, %v2832
        %v2834 = vpop.f32.mrf.mxu0
        %v2835 = vadd.f32 %v2746, %v2834
        %2836 = vmatmul.bf16.gmra.mxu0 %v1668
        %v2837 = vpop.f32.mrf.mxu0
        %v2838 = vadd.f32 %v2749, %v2837
        %v2839 = vpop.f32.mrf.mxu0
        %v2840 = vadd.f32 %v2751, %v2839
        %2841 = vmatmul.bf16.gmra.mxu0 %v1671
        %v2842 = vpop.f32.mrf.mxu0
        %v2843 = vadd.f32 %v2754, %v2842
        %v2844 = vpop.f32.mrf.mxu0
        %v2845 = vadd.f32 %v2756, %v2844
        %2846 = vmatmul.bf16.gmra.mxu0 %v1674
        %v2847 = vpop.f32.mrf.mxu0
        %v2848 = vadd.f32 %v2759, %v2847
        %v2849 = vpop.f32.mrf.mxu0
        %v2850 = vadd.f32 %v2761, %v2849
        %2851 = vmatmul.bf16.gmra.mxu0 %v1715
        %v2852 = vpop.f32.mrf.mxu0
        %v2853 = vadd.f32 %v2764, %v2852
        %v2854 = vpop.f32.mrf.mxu0
        %v2855 = vadd.f32 %v2766, %v2854
        %2856 = vdwg.mxu0
        %2857 = vmatpush.bf16.msra.mxu0 %v2234
        %2858 = vmatpush.bf16.msra.mxu0 %v2233
        %2859 = vmatpush.bf16.msra.mxu0 %v2232
        %2860 = vmatpush.bf16.msra.mxu0 %v2231
        %2861 = vmatpush.bf16.msra.mxu0 %v2230
        %2862 = vmatpush.bf16.msra.mxu0 %v2229
        %2863 = vmatpush.bf16.msra.mxu0 %v2228
        %2864 = vmatpush.bf16.msra.mxu0 %v2227
        %2865 = vmatmul.bf16.gmra.mxu0 %v1339
        %v2866 = vpop.f32.mrf.mxu0
        %v2867 = vadd.f32 %v2778, %v2866
        %v2868 = vpop.f32.mrf.mxu0
        %v2869 = vadd.f32 %v2780, %v2868
        %2870 = vmatmul.bf16.gmra.mxu0 %v1340
        %v2871 = vpop.f32.mrf.mxu0
        %v2872 = vadd.f32 %v2783, %v2871
        %v2873 = vpop.f32.mrf.mxu0
        %v2874 = vadd.f32 %v2785, %v2873
        %2875 = vmatmul.bf16.gmra.mxu0 %v1341
        %v2876 = vpop.f32.mrf.mxu0
        %v2877 = vadd.f32 %v2788, %v2876
        %v2878 = vpop.f32.mrf.mxu0
        %v2879 = vadd.f32 %v2790, %v2878
        %2880 = vmatmul.bf16.gmra.mxu0 %v1342
        %v2881 = vpop.f32.mrf.mxu0
        %v2882 = vadd.f32 %v2793, %v2881
        %v2883 = vpop.f32.mrf.mxu0
        %v2884 = vadd.f32 %v2795, %v2883
        %2885 = vmatmul.bf16.gmra.mxu0 %v1343
        %v2886 = vpop.f32.mrf.mxu0
        %v2887 = vadd.f32 %v2798, %v2886
        %v2888 = vpop.f32.mrf.mxu0
        %v2889 = vadd.f32 %v2800, %v2888
        %2890 = vmatmul.bf16.gmra.mxu0 %v1344
        %v2891 = vpop.f32.mrf.mxu0
        %v2892 = vadd.f32 %v2803, %v2891
        %v2893 = vpop.f32.mrf.mxu0
        %v2894 = vadd.f32 %v2805, %v2893
        %2895 = vmatmul.bf16.gmra.mxu0 %v1345
        %v2896 = vpop.f32.mrf.mxu0
        %v2897 = vadd.f32 %v2808, %v2896
        %v2898 = vpop.f32.mrf.mxu0
        %v2899 = vadd.f32 %v2810, %v2898
        %2900 = vmatmul.bf16.gmra.mxu0 %v1346
        %v2901 = vpop.f32.mrf.mxu0
        %v2902 = vadd.f32 %v2813, %v2901
        %v2903 = vpop.f32.mrf.mxu0
        %v2904 = vadd.f32 %v2815, %v2903
        %2905 = vmatmul.bf16.gmra.mxu0 %v1347
        %v2906 = vpop.f32.mrf.mxu0
        %v2907 = vadd.f32 %v2818, %v2906
        %v2908 = vpop.f32.mrf.mxu0
        %v2909 = vadd.f32 %v2820, %v2908
        %2910 = vmatmul.bf16.gmra.mxu0 %v1348
        %v2911 = vpop.f32.mrf.mxu0
        %v2912 = vadd.f32 %v2823, %v2911
        %v2913 = vpop.f32.mrf.mxu0
        %v2914 = vadd.f32 %v2825, %v2913
        %2915 = vmatmul.bf16.gmra.mxu0 %v1349
        %v2916 = vpop.f32.mrf.mxu0
        %v2917 = vadd.f32 %v2828, %v2916
        %v2918 = vpop.f32.mrf.mxu0
        %v2919 = vadd.f32 %v2830, %v2918
        %2920 = vmatmul.bf16.gmra.mxu0 %v1350
        %v2921 = vpop.f32.mrf.mxu0
        %v2922 = vadd.f32 %v2833, %v2921
        %v2923 = vpop.f32.mrf.mxu0
        %v2924 = vadd.f32 %v2835, %v2923
        %2925 = vmatmul.bf16.gmra.mxu0 %v1351
        %v2926 = vpop.f32.mrf.mxu0
        %v2927 = vadd.f32 %v2838, %v2926
        %v2928 = vpop.f32.mrf.mxu0
        %v2929 = vadd.f32 %v2840, %v2928
        %2930 = vmatmul.bf16.gmra.mxu0 %v1352
        %v2931 = vpop.f32.mrf.mxu0
        %v2932 = vadd.f32 %v2843, %v2931
        %v2933 = vpop.f32.mrf.mxu0
        %v2934 = vadd.f32 %v2845, %v2933
        %2935 = vmatmul.bf16.gmra.mxu0 %v1695
        %v2936 = vpop.f32.mrf.mxu0
        %v2937 = vadd.f32 %v2848, %v2936
        %v2938 = vpop.f32.mrf.mxu0
        %v2939 = vadd.f32 %v2850, %v2938
        %2940 = vmatmul.bf16.gmra.mxu0 %v1721
        %v2941 = vpop.f32.mrf.mxu0
        %v2942 = vadd.f32 %v2853, %v2941
        %v2943 = vpop.f32.mrf.mxu0
        %v2944 = vadd.f32 %v2855, %v2943
        %2945 = vdwg.mxu0
        %2946 = vmatpush.bf16.msra.mxu0 %v2242
        %2947 = vmatpush.bf16.msra.mxu0 %v2241
        %2948 = vmatpush.bf16.msra.mxu0 %v2240
        %2949 = vmatpush.bf16.msra.mxu0 %v2239
        %2950 = vmatpush.bf16.msra.mxu0 %v2238
        %2951 = vmatpush.bf16.msra.mxu0 %v2237
        %2952 = vmatpush.bf16.msra.mxu0 %v2236
        %2953 = vmatpush.bf16.msra.mxu0 %v2235
        %2954 = vmatmul.bf16.gmra.mxu0 %v1453
        %v2955 = vpop.f32.mrf.mxu0
        %v2956 = vadd.f32 %v2867, %v2955
        %v2957 = vpop.f32.mrf.mxu0
        %v2958 = vadd.f32 %v2869, %v2957
        %2959 = vmatmul.bf16.gmra.mxu0 %v1465
        %v2960 = vpop.f32.mrf.mxu0
        %v2961 = vadd.f32 %v2872, %v2960
        %v2962 = vpop.f32.mrf.mxu0
        %v2963 = vadd.f32 %v2874, %v2962
        %2964 = vmatmul.bf16.gmra.mxu0 %v1477
        %v2965 = vpop.f32.mrf.mxu0
        %v2966 = vadd.f32 %v2877, %v2965
        %v2967 = vpop.f32.mrf.mxu0
        %v2968 = vadd.f32 %v2879, %v2967
        %2969 = vmatmul.bf16.gmra.mxu0 %v1489
        %v2970 = vpop.f32.mrf.mxu0
        %v2971 = vadd.f32 %v2882, %v2970
        %v2972 = vpop.f32.mrf.mxu0
        %v2973 = vadd.f32 %v2884, %v2972
        %2974 = vmatmul.bf16.gmra.mxu0 %v1501
        %v2975 = vpop.f32.mrf.mxu0
        %v2976 = vadd.f32 %v2887, %v2975
        %v2977 = vpop.f32.mrf.mxu0
        %v2978 = vadd.f32 %v2889, %v2977
        %2979 = vmatmul.bf16.gmra.mxu0 %v1513
        %v2980 = vpop.f32.mrf.mxu0
        %v2981 = vadd.f32 %v2892, %v2980
        %v2982 = vpop.f32.mrf.mxu0
        %v2983 = vadd.f32 %v2894, %v2982
        %2984 = vmatmul.bf16.gmra.mxu0 %v1525
        %v2985 = vpop.f32.mrf.mxu0
        %v2986 = vadd.f32 %v2897, %v2985
        %v2987 = vpop.f32.mrf.mxu0
        %v2988 = vadd.f32 %v2899, %v2987
        %2989 = vmatmul.bf16.gmra.mxu0 %v1537
        %v2990 = vpop.f32.mrf.mxu0
        %v2991 = vadd.f32 %v2902, %v2990
        %v2992 = vpop.f32.mrf.mxu0
        %v2993 = vadd.f32 %v2904, %v2992
        %2994 = vmatmul.bf16.gmra.mxu0 %v1549
        %v2995 = vpop.f32.mrf.mxu0
        %v2996 = vadd.f32 %v2907, %v2995
        %v2997 = vpop.f32.mrf.mxu0
        %v2998 = vadd.f32 %v2909, %v2997
        %2999 = vmatmul.bf16.gmra.mxu0 %v1561
        %v3000 = vpop.f32.mrf.mxu0
        %v3001 = vadd.f32 %v2912, %v3000
        %v3002 = vpop.f32.mrf.mxu0
        %v3003 = vadd.f32 %v2914, %v3002
        %3004 = vmatmul.bf16.gmra.mxu0 %v1573
        %v3005 = vpop.f32.mrf.mxu0
        %v3006 = vadd.f32 %v2917, %v3005
        %v3007 = vpop.f32.mrf.mxu0
        %v3008 = vadd.f32 %v2919, %v3007
        %3009 = vmatmul.bf16.gmra.mxu0 %v1585
        %v3010 = vpop.f32.mrf.mxu0
        %v3011 = vadd.f32 %v2922, %v3010
        %v3012 = vpop.f32.mrf.mxu0
        %v3013 = vadd.f32 %v2924, %v3012
        %3014 = vmatmul.bf16.gmra.mxu0 %v1597
        %v3015 = vpop.f32.mrf.mxu0
        %v3016 = vadd.f32 %v2927, %v3015
        %v3017 = vpop.f32.mrf.mxu0
        %v3018 = vadd.f32 %v2929, %v3017
        %3019 = vmatmul.bf16.gmra.mxu0 %v1609
        %v3020 = vpop.f32.mrf.mxu0
        %v3021 = vadd.f32 %v2932, %v3020
        %v3022 = vpop.f32.mrf.mxu0
        %v3023 = vadd.f32 %v2934, %v3022
        %3024 = vmatmul.bf16.gmra.mxu0 %v1711
        %v3025 = vpop.f32.mrf.mxu0
        %v3026 = vadd.f32 %v2937, %v3025
        %v3027 = vpop.f32.mrf.mxu0
        %v3028 = vadd.f32 %v2939, %v3027
        %3029 = vmatmul.bf16.gmra.mxu0 %v1737
        %v3030 = vpop.f32.mrf.mxu0
        %v3031 = vadd.f32 %v2942, %v3030
        %v3032 = vpop.f32.mrf.mxu0
        %v3033 = vadd.f32 %v2944, %v3032
        %3034 = vdwg.mxu0
        %3035 = vmatpush.bf16.msra.mxu0 %v2250
        %3036 = vmatpush.bf16.msra.mxu0 %v2249
        %3037 = vmatpush.bf16.msra.mxu0 %v2248
        %3038 = vmatpush.bf16.msra.mxu0 %v2247
        %3039 = vmatpush.bf16.msra.mxu0 %v2246
        %3040 = vmatpush.bf16.msra.mxu0 %v2245
        %3041 = vmatpush.bf16.msra.mxu0 %v2244
        %3042 = vmatpush.bf16.msra.mxu0 %v2243
        %3043 = vmatmul.bf16.gmra.mxu0 %v1635
        %v3044 = vpop.f32.mrf.mxu0
        %v3045 = vadd.f32 %v2956, %v3044
        %v3046 = vpop.f32.mrf.mxu0
        %v3047 = vadd.f32 %v2958, %v3046
        %3048 = vmatmul.bf16.gmra.mxu0 %v1638
        %v3049 = vpop.f32.mrf.mxu0
        %v3050 = vadd.f32 %v2961, %v3049
        %v3051 = vpop.f32.mrf.mxu0
        %v3052 = vadd.f32 %v2963, %v3051
        %3053 = vmatmul.bf16.gmra.mxu0 %v1641
        %v3054 = vpop.f32.mrf.mxu0
        %v3055 = vadd.f32 %v2966, %v3054
        %v3056 = vpop.f32.mrf.mxu0
        %v3057 = vadd.f32 %v2968, %v3056
        %3058 = vmatmul.bf16.gmra.mxu0 %v1644
        %v3059 = vpop.f32.mrf.mxu0
        %v3060 = vadd.f32 %v2971, %v3059
        %v3061 = vpop.f32.mrf.mxu0
        %v3062 = vadd.f32 %v2973, %v3061
        %3063 = vmatmul.bf16.gmra.mxu0 %v1647
        %v3064 = vpop.f32.mrf.mxu0
        %v3065 = vadd.f32 %v2976, %v3064
        %v3066 = vpop.f32.mrf.mxu0
        %v3067 = vadd.f32 %v2978, %v3066
        %3068 = vmatmul.bf16.gmra.mxu0 %v1650
        %v3069 = vpop.f32.mrf.mxu0
        %v3070 = vadd.f32 %v2981, %v3069
        %v3071 = vpop.f32.mrf.mxu0
        %v3072 = vadd.f32 %v2983, %v3071
        %3073 = vmatmul.bf16.gmra.mxu0 %v1653
        %v3074 = vpop.f32.mrf.mxu0
        %v3075 = vadd.f32 %v2986, %v3074
        %v3076 = vpop.f32.mrf.mxu0
        %v3077 = vadd.f32 %v2988, %v3076
        %3078 = vmatmul.bf16.gmra.mxu0 %v1656
        %v3079 = vpop.f32.mrf.mxu0
        %v3080 = vadd.f32 %v2991, %v3079
        %v3081 = vpop.f32.mrf.mxu0
        %v3082 = vadd.f32 %v2993, %v3081
        %3083 = vmatmul.bf16.gmra.mxu0 %v1659
        %v3084 = vpop.f32.mrf.mxu0
        %v3085 = vadd.f32 %v2996, %v3084
        %v3086 = vpop.f32.mrf.mxu0
        %v3087 = vadd.f32 %v2998, %v3086
        %3088 = vmatmul.bf16.gmra.mxu0 %v1662
        %v3089 = vpop.f32.mrf.mxu0
        %v3090 = vadd.f32 %v3001, %v3089
        %v3091 = vpop.f32.mrf.mxu0
        %v3092 = vadd.f32 %v3003, %v3091
        %3093 = vmatmul.bf16.gmra.mxu0 %v1665
        %v3094 = vpop.f32.mrf.mxu0
        %v3095 = vadd.f32 %v3006, %v3094
        %v3096 = vpop.f32.mrf.mxu0
        %v3097 = vadd.f32 %v3008, %v3096
        %3098 = vmatmul.bf16.gmra.mxu0 %v1668
        %v3099 = vpop.f32.mrf.mxu0
        %v3100 = vadd.f32 %v3011, %v3099
        %v3101 = vpop.f32.mrf.mxu0
        %v3102 = vadd.f32 %v3013, %v3101
        %3103 = vmatmul.bf16.gmra.mxu0 %v1671
        %v3104 = vpop.f32.mrf.mxu0
        %v3105 = vadd.f32 %v3016, %v3104
        %v3106 = vpop.f32.mrf.mxu0
        %v3107 = vadd.f32 %v3018, %v3106
        %3108 = vmatmul.bf16.gmra.mxu0 %v1674
        %v3109 = vpop.f32.mrf.mxu0
        %v3110 = vadd.f32 %v3021, %v3109
        %v3111 = vpop.f32.mrf.mxu0
        %v3112 = vadd.f32 %v3023, %v3111
        %3113 = vmatmul.bf16.gmra.mxu0 %v1715
        %v3114 = vpop.f32.mrf.mxu0
        %v3115 = vadd.f32 %v3026, %v3114
        %v3116 = vpop.f32.mrf.mxu0
        %v3117 = vadd.f32 %v3028, %v3116
        %3118 = vmatmul.bf16.gmra.mxu0 %v1741
        %v3119 = vpop.f32.mrf.mxu0
        %v3120 = vadd.f32 %v3031, %v3119
        %v3121 = vpop.f32.mrf.mxu0
        %v3122 = vadd.f32 %v3033, %v3121
        %3123 = vdwg.mxu0
        %v3124 = vmax.f32 %v3045, 0.0
        %v3125 = vmax.f32 %v3047, 0.0
        %v3126 = vmax.f32 %v3050, 0.0
        %v3127 = vmax.f32 %v3052, 0.0
        %v3128 = vmax.f32 %v3055, 0.0
        %v3129 = vmax.f32 %v3057, 0.0
        %v3130 = vmax.f32 %v3060, 0.0
        %v3131 = vmax.f32 %v3062, 0.0
        %v3132 = vmax.f32 %v3065, 0.0
        %v3133 = vmax.f32 %v3067, 0.0
        %v3134 = vmax.f32 %v3070, 0.0
        %v3135 = vmax.f32 %v3072, 0.0
        %v3136 = vmax.f32 %v3075, 0.0
        %v3137 = vmax.f32 %v3077, 0.0
        %v3138 = vmax.f32 %v3080, 0.0
        %v3139 = vmax.f32 %v3082, 0.0
        %v3140 = vmax.f32 %v3085, 0.0
        %v3141 = vmax.f32 %v3087, 0.0
        %v3142 = vmax.f32 %v3090, 0.0
        %v3143 = vmax.f32 %v3092, 0.0
        %v3144 = vmax.f32 %v3095, 0.0
        %v3145 = vmax.f32 %v3097, 0.0
        %v3146 = vmax.f32 %v3100, 0.0
        %v3147 = vmax.f32 %v3102, 0.0
        %v3148 = vmax.f32 %v3105, 0.0
        %v3149 = vmax.f32 %v3107, 0.0
        %v3150 = vmax.f32 %v3110, 0.0
        %v3151 = vmax.f32 %v3112, 0.0
        %v3152 = vmax.f32 %v3115, 0.0
        %v3153 = vmax.f32 %v3117, 0.0
        %v3154 = vmax.f32 %v3120, 0.0
        %v3155 = vmax.f32 %v3122, 0.0
        %v3156 = vpack.c.bf16 %v3125, %v3124
        %v3157 = vpack.c.bf16 %v3127, %v3126
        %v3158 = vpack.c.bf16 %v3129, %v3128
        %v3159 = vpack.c.bf16 %v3131, %v3130
        %v3160 = vpack.c.bf16 %v3133, %v3132
        %v3161 = vpack.c.bf16 %v3135, %v3134
        %v3162 = vpack.c.bf16 %v3137, %v3136
        %v3163 = vpack.c.bf16 %v3139, %v3138
        %v3164 = vpack.c.bf16 %v3141, %v3140
        %v3165 = vpack.c.bf16 %v3143, %v3142
        %v3166 = vpack.c.bf16 %v3145, %v3144
        %v3167 = vpack.c.bf16 %v3147, %v3146
        %v3168 = vpack.c.bf16 %v3149, %v3148
        %v3169 = vpack.c.bf16 %v3151, %v3150
        %v3170 = vpack.c.bf16 %v3153, %v3152
        %v3171 = vpack.c.bf16 %v3155, %v3154
        %v3172 = vld [vmem:[%s3] sm:$0xf]
        %v3173 = vld [vmem:[%s3 + $0x4] sm:$0xf]
        %v3174 = vld [vmem:[%s3 + $0x8] sm:$0xf]
        %v3175 = vld [vmem:[%s3 + $0xc] sm:$0xf]
        %v3176 = vld [vmem:[%s3 + $0x10] sm:$0xf]
        %v3177 = vld [vmem:[%s3 + $0x14] sm:$0xf]
        %v3178 = vld [vmem:[%s3 + $0x18] sm:$0xf]
        %v3179 = vld [vmem:[%s3 + $0x1c] sm:$0xf]
        %v3180 = vld [vmem:[%s3 + $0x20] sm:$0xf]
        %v3181 = vld [vmem:[%s3 + $0x24] sm:$0xf]
        %v3182 = vld [vmem:[%s3 + $0x28] sm:$0xf]
        %v3183 = vld [vmem:[%s3 + $0x2c] sm:$0xf]
        %v3184 = vld [vmem:[%s3 + $0x30] sm:$0xf]
        %v3185 = vld [vmem:[%s3 + $0x34] sm:$0xf]
        %v3186 = vld [vmem:[%s3 + $0x38] sm:$0xf]
        %v3187 = vld [vmem:[%s3 + $0x3c] sm:$0xf]
        %v3188 = vld [vmem:[%s7] sm:$0x1]
        %v3190 = vperm.slane %v3188, 0
        %v3208 = vunpack.c.l.b16 %v3172
        %v3209 = vunpack.c.l.b16 %v3173
        %v3210 = vunpack.c.l.b16 %v3174
        %v3211 = vunpack.c.l.b16 %v3175
        %v3212 = vunpack.c.l.b16 %v3176
        %v3213 = vunpack.c.l.b16 %v3177
        %v3214 = vunpack.c.l.b16 %v3178
        %v3215 = vunpack.c.l.b16 %v3179
        %v3216 = vunpack.c.l.b16 %v3180
        %v3217 = vunpack.c.l.b16 %v3181
        %v3218 = vunpack.c.l.b16 %v3182
        %v3219 = vunpack.c.l.b16 %v3183
        %v3220 = vunpack.c.l.b16 %v3184
        %v3221 = vunpack.c.l.b16 %v3185
        %v3222 = vunpack.c.l.b16 %v3186
        %v3223 = vunpack.c.l.b16 %v3187
        %v3224 = vpack.c.b16 %v3209, %v3208
        %v3225 = vpack.c.b16 %v3211, %v3210
        %v3226 = vpack.c.b16 %v3213, %v3212
        %v3227 = vpack.c.b16 %v3215, %v3214
        %v3228 = vpack.c.b16 %v3217, %v3216
        %v3229 = vpack.c.b16 %v3219, %v3218
        %v3230 = vpack.c.b16 %v3221, %v3220
        %v3231 = vpack.c.b16 %v3223, %v3222
        %3240 = vmatpush.bf16.msra.mxu0 %v3231
        %3241 = vmatpush.bf16.msra.mxu0 %v3230
        %3242 = vmatpush.bf16.msra.mxu0 %v3229
        %3243 = vmatpush.bf16.msra.mxu0 %v3228
        %3244 = vmatpush.bf16.msra.mxu0 %v3227
        %3245 = vmatpush.bf16.msra.mxu0 %v3226
        %3246 = vmatpush.bf16.msra.mxu0 %v3225
        %3247 = vmatpush.bf16.msra.mxu0 %v3224
        %3248 = vmatmul.bf16.gmra.mxu0 %v3156
        %v3249 = vpop.f32.mrf.mxu0
        %v3250 = vadd.f32 %v3190, %v3249
        %v3251 = vpop.f32.mrf.mxu0
        %v3252 = vadd.f32 %v3190, %v3251
        %3253 = vmatmul.bf16.gmra.mxu0 %v3157
        %v3254 = vpop.f32.mrf.mxu0
        %v3255 = vadd.f32 %v3190, %v3254
        %v3256 = vpop.f32.mrf.mxu0
        %v3257 = vadd.f32 %v3190, %v3256
        %3258 = vmatmul.bf16.gmra.mxu0 %v3158
        %v3259 = vpop.f32.mrf.mxu0
        %v3260 = vadd.f32 %v3190, %v3259
        %v3261 = vpop.f32.mrf.mxu0
        %v3262 = vadd.f32 %v3190, %v3261
        %3263 = vmatmul.bf16.gmra.mxu0 %v3159
        %v3264 = vpop.f32.mrf.mxu0
        %v3265 = vadd.f32 %v3190, %v3264
        %v3266 = vpop.f32.mrf.mxu0
        %v3267 = vadd.f32 %v3190, %v3266
        %3268 = vmatmul.bf16.gmra.mxu0 %v3160
        %v3269 = vpop.f32.mrf.mxu0
        %v3270 = vadd.f32 %v3190, %v3269
        %v3271 = vpop.f32.mrf.mxu0
        %v3272 = vadd.f32 %v3190, %v3271
        %3273 = vmatmul.bf16.gmra.mxu0 %v3161
        %v3274 = vpop.f32.mrf.mxu0
        %v3275 = vadd.f32 %v3190, %v3274
        %v3276 = vpop.f32.mrf.mxu0
        %v3277 = vadd.f32 %v3190, %v3276
        %3278 = vmatmul.bf16.gmra.mxu0 %v3162
        %v3279 = vpop.f32.mrf.mxu0
        %v3280 = vadd.f32 %v3190, %v3279
        %v3281 = vpop.f32.mrf.mxu0
        %v3282 = vadd.f32 %v3190, %v3281
        %3283 = vmatmul.bf16.gmra.mxu0 %v3163
        %v3284 = vpop.f32.mrf.mxu0
        %v3285 = vadd.f32 %v3190, %v3284
        %v3286 = vpop.f32.mrf.mxu0
        %v3287 = vadd.f32 %v3190, %v3286
        %3288 = vmatmul.bf16.gmra.mxu0 %v3164
        %v3289 = vpop.f32.mrf.mxu0
        %v3290 = vadd.f32 %v3190, %v3289
        %v3291 = vpop.f32.mrf.mxu0
        %v3292 = vadd.f32 %v3190, %v3291
        %3293 = vmatmul.bf16.gmra.mxu0 %v3165
        %v3294 = vpop.f32.mrf.mxu0
        %v3295 = vadd.f32 %v3190, %v3294
        %v3296 = vpop.f32.mrf.mxu0
        %v3297 = vadd.f32 %v3190, %v3296
        %3298 = vmatmul.bf16.gmra.mxu0 %v3166
        %v3299 = vpop.f32.mrf.mxu0
        %v3300 = vadd.f32 %v3190, %v3299
        %v3301 = vpop.f32.mrf.mxu0
        %v3302 = vadd.f32 %v3190, %v3301
        %3303 = vmatmul.bf16.gmra.mxu0 %v3167
        %v3304 = vpop.f32.mrf.mxu0
        %v3305 = vadd.f32 %v3190, %v3304
        %v3306 = vpop.f32.mrf.mxu0
        %v3307 = vadd.f32 %v3190, %v3306
        %3308 = vmatmul.bf16.gmra.mxu0 %v3168
        %v3309 = vpop.f32.mrf.mxu0
        %v3310 = vadd.f32 %v3190, %v3309
        %v3311 = vpop.f32.mrf.mxu0
        %v3312 = vadd.f32 %v3190, %v3311
        %3313 = vmatmul.bf16.gmra.mxu0 %v3169
        %v3314 = vpop.f32.mrf.mxu0
        %v3315 = vadd.f32 %v3190, %v3314
        %v3316 = vpop.f32.mrf.mxu0
        %v3317 = vadd.f32 %v3190, %v3316
        %3318 = vmatmul.bf16.gmra.mxu0 %v3170
        %v3319 = vpop.f32.mrf.mxu0
        %v3320 = vadd.f32 %v3190, %v3319
        %v3321 = vpop.f32.mrf.mxu0
        %v3322 = vadd.f32 %v3190, %v3321
        %3323 = vmatmul.bf16.gmra.mxu0 %v3171
        %v3324 = vpop.f32.mrf.mxu0
        %v3325 = vadd.f32 %v3190, %v3324
        %v3326 = vpop.f32.mrf.mxu0
        %v3327 = vadd.f32 %v3190, %v3326
        %3328 = vdwg.mxu0
        %v3329 = vld [vmem:[%s4] sm:$0x3]
        %v3330 = vld [vmem:[%s8] sm:$0x1]
        %v3332 = vperm.slane %v3330, 0
        %v3335 = vsel %vm517, %v3329, 0
        %3337 = vmatpush.bf16.msra.mxu0 0
        %3338 = vmatpush.bf16.msra.mxu0 0
        %3339 = vmatpush.bf16.msra.mxu0 0
        %3340 = vmatpush.bf16.msra.mxu0 0
        %3341 = vmatpush.bf16.msra.mxu0 0
        %3342 = vmatpush.bf16.msra.mxu0 0
        %3343 = vmatpush.bf16.msra.mxu0 0
        %3344 = vmatpush.bf16.msra.mxu0 %v3335
        %3345 = vmatmul.bf16.gmra.mxu0 %v470
        %v3346 = vpop.f32.mrf.mxu0
        %v3347 = vadd.f32 %v3332, %v3346
        %v3348 = vpop.f32.mrf.mxu0
        %v3349 = vadd.f32 %v3332, %v3348
        %3350 = vmatmul.bf16.gmra.mxu0 %v473
        %v3351 = vpop.f32.mrf.mxu0
        %v3352 = vadd.f32 %v3332, %v3351
        %v3353 = vpop.f32.mrf.mxu0
        %v3354 = vadd.f32 %v3332, %v3353
        %3355 = vmatmul.bf16.gmra.mxu0 %v476
        %v3356 = vpop.f32.mrf.mxu0
        %v3357 = vadd.f32 %v3332, %v3356
        %v3358 = vpop.f32.mrf.mxu0
        %v3359 = vadd.f32 %v3332, %v3358
        %3360 = vmatmul.bf16.gmra.mxu0 %v479
        %v3361 = vpop.f32.mrf.mxu0
        %v3362 = vadd.f32 %v3332, %v3361
        %v3363 = vpop.f32.mrf.mxu0
        %v3364 = vadd.f32 %v3332, %v3363
        %3365 = vmatmul.bf16.gmra.mxu0 %v482
        %v3366 = vpop.f32.mrf.mxu0
        %v3367 = vadd.f32 %v3332, %v3366
        %v3368 = vpop.f32.mrf.mxu0
        %v3369 = vadd.f32 %v3332, %v3368
        %3370 = vmatmul.bf16.gmra.mxu0 %v485
        %v3371 = vpop.f32.mrf.mxu0
        %v3372 = vadd.f32 %v3332, %v3371
        %v3373 = vpop.f32.mrf.mxu0
        %v3374 = vadd.f32 %v3332, %v3373
        %3375 = vmatmul.bf16.gmra.mxu0 %v488
        %v3376 = vpop.f32.mrf.mxu0
        %v3377 = vadd.f32 %v3332, %v3376
        %v3378 = vpop.f32.mrf.mxu0
        %v3379 = vadd.f32 %v3332, %v3378
        %3380 = vmatmul.bf16.gmra.mxu0 %v491
        %v3381 = vpop.f32.mrf.mxu0
        %v3382 = vadd.f32 %v3332, %v3381
        %v3383 = vpop.f32.mrf.mxu0
        %v3384 = vadd.f32 %v3332, %v3383
        %3385 = vmatmul.bf16.gmra.mxu0 %v494
        %v3386 = vpop.f32.mrf.mxu0
        %v3387 = vadd.f32 %v3332, %v3386
        %v3388 = vpop.f32.mrf.mxu0
        %v3389 = vadd.f32 %v3332, %v3388
        %3390 = vmatmul.bf16.gmra.mxu0 %v497
        %v3391 = vpop.f32.mrf.mxu0
        %v3392 = vadd.f32 %v3332, %v3391
        %v3393 = vpop.f32.mrf.mxu0
        %v3394 = vadd.f32 %v3332, %v3393
        %3395 = vmatmul.bf16.gmra.mxu0 %v500
        %v3396 = vpop.f32.mrf.mxu0
        %v3397 = vadd.f32 %v3332, %v3396
        %v3398 = vpop.f32.mrf.mxu0
        %v3399 = vadd.f32 %v3332, %v3398
        %3400 = vmatmul.bf16.gmra.mxu0 %v503
        %v3401 = vpop.f32.mrf.mxu0
        %v3402 = vadd.f32 %v3332, %v3401
        %v3403 = vpop.f32.mrf.mxu0
        %v3404 = vadd.f32 %v3332, %v3403
        %3405 = vmatmul.bf16.gmra.mxu0 %v506
        %v3406 = vpop.f32.mrf.mxu0
        %v3407 = vadd.f32 %v3332, %v3406
        %v3408 = vpop.f32.mrf.mxu0
        %v3409 = vadd.f32 %v3332, %v3408
        %3410 = vmatmul.bf16.gmra.mxu0 %v509
        %v3411 = vpop.f32.mrf.mxu0
        %v3412 = vadd.f32 %v3332, %v3411
        %v3413 = vpop.f32.mrf.mxu0
        %v3414 = vadd.f32 %v3332, %v3413
        %3415 = vmatmul.bf16.gmra.mxu0 %v512
        %v3416 = vpop.f32.mrf.mxu0
        %v3417 = vadd.f32 %v3332, %v3416
        %v3418 = vpop.f32.mrf.mxu0
        %v3419 = vadd.f32 %v3332, %v3418
        %3420 = vmatmul.bf16.gmra.mxu0 %v515
        %v3421 = vpop.f32.mrf.mxu0
        %v3422 = vadd.f32 %v3332, %v3421
        %v3423 = vpop.f32.mrf.mxu0
        %v3424 = vadd.f32 %v3332, %v3423
        %3425 = vdwg.mxu0
        %v3426 = vadd.f32 %v3250, %v3347
        %v3427 = vadd.f32 %v3252, %v3349
        %v3428 = vadd.f32 %v3255, %v3352
        %v3429 = vadd.f32 %v3257, %v3354
        %v3430 = vadd.f32 %v3260, %v3357
        %v3431 = vadd.f32 %v3262, %v3359
        %v3432 = vadd.f32 %v3265, %v3362
        %v3433 = vadd.f32 %v3267, %v3364
        %v3434 = vadd.f32 %v3270, %v3367
        %v3435 = vadd.f32 %v3272, %v3369
        %v3436 = vadd.f32 %v3275, %v3372
        %v3437 = vadd.f32 %v3277, %v3374
        %v3438 = vadd.f32 %v3280, %v3377
        %v3439 = vadd.f32 %v3282, %v3379
        %v3440 = vadd.f32 %v3285, %v3382
        %v3441 = vadd.f32 %v3287, %v3384
        %v3442 = vadd.f32 %v3290, %v3387
        %v3443 = vadd.f32 %v3292, %v3389
        %v3444 = vadd.f32 %v3295, %v3392
        %v3445 = vadd.f32 %v3297, %v3394
        %v3446 = vadd.f32 %v3300, %v3397
        %v3447 = vadd.f32 %v3302, %v3399
        %v3448 = vadd.f32 %v3305, %v3402
        %v3449 = vadd.f32 %v3307, %v3404
        %v3450 = vadd.f32 %v3310, %v3407
        %v3451 = vadd.f32 %v3312, %v3409
        %v3452 = vadd.f32 %v3315, %v3412
        %v3453 = vadd.f32 %v3317, %v3414
        %v3454 = vadd.f32 %v3320, %v3417
        %v3455 = vadd.f32 %v3322, %v3419
        %v3456 = vadd.f32 %v3325, %v3422
        %v3457 = vadd.f32 %v3327, %v3424
        %v3458 = vmax.f32 %v3426, 0.0
        %v3459 = vmax.f32 %v3427, 0.0
        %v3460 = vmax.f32 %v3428, 0.0
        %v3461 = vmax.f32 %v3429, 0.0
        %v3462 = vmax.f32 %v3430, 0.0
        %v3463 = vmax.f32 %v3431, 0.0
        %v3464 = vmax.f32 %v3432, 0.0
        %v3465 = vmax.f32 %v3433, 0.0
        %v3466 = vmax.f32 %v3434, 0.0
        %v3467 = vmax.f32 %v3435, 0.0
        %v3468 = vmax.f32 %v3436, 0.0
        %v3469 = vmax.f32 %v3437, 0.0
        %v3470 = vmax.f32 %v3438, 0.0
        %v3471 = vmax.f32 %v3439, 0.0
        %v3472 = vmax.f32 %v3440, 0.0
        %v3473 = vmax.f32 %v3441, 0.0
        %v3474 = vmax.f32 %v3442, 0.0
        %v3475 = vmax.f32 %v3443, 0.0
        %v3476 = vmax.f32 %v3444, 0.0
        %v3477 = vmax.f32 %v3445, 0.0
        %v3478 = vmax.f32 %v3446, 0.0
        %v3479 = vmax.f32 %v3447, 0.0
        %v3480 = vmax.f32 %v3448, 0.0
        %v3481 = vmax.f32 %v3449, 0.0
        %v3482 = vmax.f32 %v3450, 0.0
        %v3483 = vmax.f32 %v3451, 0.0
        %v3484 = vmax.f32 %v3452, 0.0
        %v3485 = vmax.f32 %v3453, 0.0
        %v3486 = vmax.f32 %v3454, 0.0
        %v3487 = vmax.f32 %v3455, 0.0
        %v3488 = vmax.f32 %v3456, 0.0
        %v3489 = vmax.f32 %v3457, 0.0
        %v3490 = vpack.c.bf16 %v3458, %v3458
        %v3491 = vpack.c.bf16 %v3459, %v3459
        %v3492 = vpack.c.bf16 %v3460, %v3460
        %v3493 = vpack.c.bf16 %v3461, %v3461
        %v3494 = vpack.c.bf16 %v3462, %v3462
        %v3495 = vpack.c.bf16 %v3463, %v3463
        %v3496 = vpack.c.bf16 %v3464, %v3464
        %v3497 = vpack.c.bf16 %v3465, %v3465
        %v3498 = vpack.c.bf16 %v3466, %v3466
        %v3499 = vpack.c.bf16 %v3467, %v3467
        %v3500 = vpack.c.bf16 %v3468, %v3468
        %v3501 = vpack.c.bf16 %v3469, %v3469
        %v3502 = vpack.c.bf16 %v3470, %v3470
        %v3503 = vpack.c.bf16 %v3471, %v3471
        %v3504 = vpack.c.bf16 %v3472, %v3472
        %v3505 = vpack.c.bf16 %v3473, %v3473
        %v3506 = vpack.c.bf16 %v3474, %v3474
        %v3507 = vpack.c.bf16 %v3475, %v3475
        %v3508 = vpack.c.bf16 %v3476, %v3476
        %v3509 = vpack.c.bf16 %v3477, %v3477
        %v3510 = vpack.c.bf16 %v3478, %v3478
        %v3511 = vpack.c.bf16 %v3479, %v3479
        %v3512 = vpack.c.bf16 %v3480, %v3480
        %v3513 = vpack.c.bf16 %v3481, %v3481
        %v3514 = vpack.c.bf16 %v3482, %v3482
        %v3515 = vpack.c.bf16 %v3483, %v3483
        %v3516 = vpack.c.bf16 %v3484, %v3484
        %v3517 = vpack.c.bf16 %v3485, %v3485
        %v3518 = vpack.c.bf16 %v3486, %v3486
        %v3519 = vpack.c.bf16 %v3487, %v3487
        %v3520 = vpack.c.bf16 %v3488, %v3488
        %v3521 = vpack.c.bf16 %v3489, %v3489
        %vm3522 = vcmask 125952
        %3523 = vst.msk [vmem:[%s349] sm:$0xf] %vm3522, %v3490
        %3524 = vst.msk [vmem:[%s349 + $0x4] sm:$0xf] %vm3522, %v3491
        %3525 = vst.msk [vmem:[%s349 + $0x8] sm:$0xf] %vm3522, %v3492
        %3526 = vst.msk [vmem:[%s349 + $0xc] sm:$0xf] %vm3522, %v3493
        %3527 = vst.msk [vmem:[%s349 + $0x10] sm:$0xf] %vm3522, %v3494
        %3528 = vst.msk [vmem:[%s349 + $0x14] sm:$0xf] %vm3522, %v3495
        %3529 = vst.msk [vmem:[%s349 + $0x18] sm:$0xf] %vm3522, %v3496
        %3530 = vst.msk [vmem:[%s349 + $0x1c] sm:$0xf] %vm3522, %v3497
        %3531 = vst.msk [vmem:[%s349 + $0x20] sm:$0xf] %vm3522, %v3498
        %3532 = vst.msk [vmem:[%s349 + $0x24] sm:$0xf] %vm3522, %v3499
        %3533 = vst.msk [vmem:[%s349 + $0x28] sm:$0xf] %vm3522, %v3500
        %3534 = vst.msk [vmem:[%s349 + $0x2c] sm:$0xf] %vm3522, %v3501
        %3535 = vst.msk [vmem:[%s349 + $0x30] sm:$0xf] %vm3522, %v3502
        %3536 = vst.msk [vmem:[%s349 + $0x34] sm:$0xf] %vm3522, %v3503
        %3537 = vst.msk [vmem:[%s349 + $0x38] sm:$0xf] %vm3522, %v3504
        %3538 = vst.msk [vmem:[%s349 + $0x3c] sm:$0xf] %vm3522, %v3505
        %3539 = vst.msk [vmem:[%s349 + $0x40] sm:$0xf] %vm3522, %v3506
        %3540 = vst.msk [vmem:[%s349 + $0x44] sm:$0xf] %vm3522, %v3507
        %3541 = vst.msk [vmem:[%s349 + $0x48] sm:$0xf] %vm3522, %v3508
        %3542 = vst.msk [vmem:[%s349 + $0x4c] sm:$0xf] %vm3522, %v3509
        %3543 = vst.msk [vmem:[%s349 + $0x50] sm:$0xf] %vm3522, %v3510
        %3544 = vst.msk [vmem:[%s349 + $0x54] sm:$0xf] %vm3522, %v3511
        %3545 = vst.msk [vmem:[%s349 + $0x58] sm:$0xf] %vm3522, %v3512
        %3546 = vst.msk [vmem:[%s349 + $0x5c] sm:$0xf] %vm3522, %v3513
        %3547 = vst.msk [vmem:[%s349 + $0x60] sm:$0xf] %vm3522, %v3514
        %3548 = vst.msk [vmem:[%s349 + $0x64] sm:$0xf] %vm3522, %v3515
        %3549 = vst.msk [vmem:[%s349 + $0x68] sm:$0xf] %vm3522, %v3516
        %3550 = vst.msk [vmem:[%s349 + $0x6c] sm:$0xf] %vm3522, %v3517
        %3551 = vst.msk [vmem:[%s349 + $0x70] sm:$0xf] %vm3522, %v3518
        %3552 = vst.msk [vmem:[%s349 + $0x74] sm:$0xf] %vm3522, %v3519
        %3553 = vst.msk [vmem:[%s349 + $0x78] sm:$0xf] %vm3522, %v3520
        %3554 = vst.msk [vmem:[%s349 + $0x7c] sm:$0xf] %vm3522, %v3521
        %p3555 = scmp.lt.s32.totalorder %s21, 1
        %s3556 = scalar_select %p3555, %s21, 1
        %s3557 = smul.addr %s3556, 32
        %s3558 = smul.addr %s3557, 4
        %s3559 = scalar_lea.vmem %s9, %s3558
        // Predicated region
        $region61: #{tpu_custom_call.1} parent=55 // pred_check
          %p3560 = pneg %p233
        $region62: #{tpu_custom_call.1} parent=55 // pred_check_branch
          %3562 = sbr.rel (%p3560) target = $region64
        $region63: #{tpu_custom_call.1} parent=55 // pred_region
          _
        $region64: #{tpu_custom_call.1} parent=55 // pred_fallthru
          _
      $region56: #{tpu_custom_call.1} parent=5 // pred_fallthru
        _
      %p3563 = scmp.le.s32.totalorder 2, %s16
      // Predicated region
      $region65: #{tpu_custom_call.1} parent=5 // pred_check
        %p3564 = pneg %p3563
      $region66: #{tpu_custom_call.1} parent=5 // pred_check_branch
        %3566 = sbr.rel (%p3564) target = $region68
      $region67: #{tpu_custom_call.1} parent=5 // pred_region
        %s3567 = ssub.s32 %s16, 2
        // Predicated region
        $region69: #{tpu_custom_call.1} parent=67 // pred_check
          %p3568 = pneg %p239
        $region70: #{tpu_custom_call.1} parent=67 // pred_check_branch
          %3570 = sbr.rel (%p3568) target = $region72
        $region71: #{tpu_custom_call.1} parent=67 // pred_region
          %p3571 = scmp.lt.s32.totalorder %s22, 1
          %s3572 = scalar_select %p3571, %s22, 1
          %s3573 = smul.addr %s3572, 32
          %s3574 = smul.addr %s3573, 4
          %s3575 = scalar_lea.vmem %s9, %s3574
        $region72: #{tpu_custom_call.1} parent=67 // pred_fallthru
          _
      $region68: #{tpu_custom_call.1} parent=5 // pred_fallthru
        _
    $region6: #{tpu_custom_call.1} parent=1 // loop_footer
      %s20 = sadd.s32 1, %s16
    $region7: #{tpu_custom_call.1} parent=1 // loop_footer_branch
      %15 = sbr.rel target = $region3
    $region8: #{tpu_custom_call.1} parent=1 // loop_exit
      _
    %3576 = vsyncpa [#allocation4], 1
    %s3577 = scalar_lea.sflag [#allocation4], 1
    %3578 = vsyncpa %s3577, 1

</llo_original>
